<compile_context>
chip_gen: v7x
topology: tpu7x:2x2x1
jax: 0.10.0
libtpu: 0.0.40
codegen_flags: <defaults>
</compile_context>

<pallas_src>
import functools
import math

import jax
import jax.numpy as jnp
from jax import lax
from jax.experimental import pallas as pl
from jax.experimental.pallas import tpu as pltpu


def _largest_aligned_tile(dim, preferred, align=128):
    """Largest multiple-of-`align` divisor of `dim` that is <= preferred.
    Returns `dim` itself when dim <= preferred (full dim is always legal)."""
    if dim <= preferred:
        return dim
    t = (min(preferred, dim) // align) * align
    while t >= align:
        if dim % t == 0:
            return t
        t -= align
    # TODO(synk): pad + mask ragged dims instead of a single full-dim block.
    return dim


# ----------------------------------------------------------------------------
# Kernel 1: tiled linear  y = x @ w_t + b   (w_t already transposed: (D_in, D_out))
# ----------------------------------------------------------------------------
def _linear_kernel(x_ref, w_ref, b_ref, o_ref):
    # Single contraction step: no accumulator scratch / init / finalize.
    y = jnp.dot(x_ref[...], w_ref[...], preferred_element_type=jnp.float32)
    o_ref[...] = (y + b_ref[...].astype(jnp.float32)).astype(o_ref.dtype)


def _linear_kernel_ksplit(x_ref, w_ref, b_ref, o_ref, acc_ref):
    k = pl.program_id(2)

    @pl.when(k == 0)
    def _():
        acc_ref[...] = jnp.zeros_like(acc_ref)

    acc_ref[...] += jnp.dot(x_ref[...], w_ref[...],
                            preferred_element_type=jnp.float32)

    @pl.when(k == pl.num_programs(2) - 1)
    def _():
        o_ref[...] = (acc_ref[...] + b_ref[...].astype(jnp.float32)
                      ).astype(o_ref.dtype)


def linear(x, w_t, b, *, out_dtype=None, tm=512, tn=512, tk=1024):
    """y = x @ w_t + b.   x: (..., D_in), w_t: (D_in, D_out), b: (D_out,)."""
    orig_shape = x.shape
    d_in, d_out = w_t.shape
    out_dtype = out_dtype if out_dtype is not None else x.dtype
    m = 1
    for d in orig_shape[:-1]:
        m *= d

    x2 = x.reshape(m, d_in).astype(jnp.bfloat16)      # bf16 MXU operands
    w_t = w_t.astype(jnp.bfloat16)
    b2 = b.reshape(1, d_out).astype(jnp.float32)      # bias added in f32

    tm = _largest_aligned_tile(m, tm)
    tn = _largest_aligned_tile(d_out, tn)
    tk = _largest_aligned_tile(d_in, tk)

    if tk == d_in:
        # No K grid axis: the whole contraction happens in one MXU pass.
        out = pl.pallas_call(
            _linear_kernel,
            out_shape=jax.ShapeDtypeStruct((m, d_out), out_dtype),
            grid_spec=pltpu.PrefetchScalarGridSpec(
                num_scalar_prefetch=0,
                grid=(m // tm, d_out // tn),
                in_specs=[
                    pl.BlockSpec((tm, d_in), lambda i, j: (i, 0)),
                    pl.BlockSpec((d_in, tn), lambda i, j: (0, j)),
                    pl.BlockSpec((1, tn), lambda i, j: (0, j)),
                ],
                out_specs=pl.BlockSpec((tm, tn), lambda i, j: (i, j)),
            ),
            compiler_params=pltpu.CompilerParams(
                dimension_semantics=("parallel", "parallel"),
                vmem_limit_bytes=32 * 1024 * 1024),
        )(x2, w_t, b2)
    else:
        out = pl.pallas_call(
            _linear_kernel_ksplit,
            out_shape=jax.ShapeDtypeStruct((m, d_out), out_dtype),
            grid_spec=pltpu.PrefetchScalarGridSpec(
                num_scalar_prefetch=0,
                grid=(m // tm, d_out // tn, d_in // tk),
                in_specs=[
                    pl.BlockSpec((tm, tk), lambda i, j, k: (i, k)),
                    pl.BlockSpec((tk, tn), lambda i, j, k: (k, j)),
                    pl.BlockSpec((1, tn), lambda i, j, k: (0, j)),
                ],
                out_specs=pl.BlockSpec((tm, tn), lambda i, j, k: (i, j)),
                scratch_shapes=[pltpu.VMEM((tm, tn), jnp.float32)],
            ),
            compiler_params=pltpu.CompilerParams(
                dimension_semantics=("parallel", "parallel", "arbitrary"),
                vmem_limit_bytes=32 * 1024 * 1024),
        )(x2, w_t, b2)
    return out.reshape(*orig_shape[:-1], d_out)


# ----------------------------------------------------------------------------
# Kernel 2: flash-style attention, one head per grid program.
#   grid = (B, H, Sq//tq, Skv//tkv); q/k/v blocks are (tq, dk)/(tkv, dk) with
#   dk as the full (legal) last dim.  Online-softmax stats m/l and the output
#   accumulator persist in VMEM scratch across the kv axis.  Q arrives already
#   scaled by 1/sqrt(dk) (folded into W_q), so scores are a pure MXU push.
# ----------------------------------------------------------------------------
def _flash_kernel(q_ref, k_ref, v_ref, o_ref, m_sc, l_sc, acc_sc):
    kv = pl.program_id(3)

    @pl.when(kv == 0)
    def _():
        m_sc[...] = jnp.full_like(m_sc, -jnp.inf)
        l_sc[...] = jnp.zeros_like(l_sc)
        acc_sc[...] = jnp.zeros_like(acc_sc)

    q = q_ref[...]                       # (tq,  dk) bf16, pre-scaled
    k = k_ref[...]                       # (tkv, dk) bf16
    v = v_ref[...]                       # (tkv, dk) bf16

    # scores = q @ k.T  (contract minor dims; bf16 operands, f32 accumulation)
    s = lax.dot_general(q, k, (((1,), (1,)), ((), ())),
                        preferred_element_type=jnp.float32)      # (tq, tkv) f32

    m_prev = m_sc[...]                                           # (tq, 1)
    m_new = jnp.maximum(m_prev, jnp.max(s, axis=-1, keepdims=True))
    alpha = jnp.exp(m_prev - m_new)                              # f32 softmax math
    p = jnp.exp(s - m_new)                                       # (tq, tkv) f32
    l_sc[...] = alpha * l_sc[...] + jnp.sum(p, axis=-1, keepdims=True)
    acc_sc[...] = alpha * acc_sc[...] + jnp.dot(
        p.astype(v.dtype), v, preferred_element_type=jnp.float32)
    m_sc[...] = m_new

    @pl.when(kv == pl.num_programs(3) - 1)
    def _():
        inv = pl.reciprocal(l_sc[...], approx=True)              # EUP slot
        o_ref[...] = (acc_sc[...] * inv).astype(o_ref.dtype)


def flash_mha(q, k, v, *, tq=512, tkv=512):
    """q/k/v: (B, H, S, dk); the 1/sqrt(dk) scale is already folded into q."""
    B, H, Sq, dk = q.shape
    Skv = k.shape[2]

    tq = _largest_aligned_tile(Sq, tq)
    tkv = _largest_aligned_tile(Skv, tkv)
    grid = (B, H, Sq // tq, Skv // tkv)

    q_spec = pl.BlockSpec((pl.Squeezed(), pl.Squeezed(), tq, dk),
                          lambda b, h, qi, ki: (b, h, qi, 0))
    k_spec = pl.BlockSpec((pl.Squeezed(), pl.Squeezed(), tkv, dk),
                          lambda b, h, qi, ki: (b, h, ki, 0))
    v_spec = pl.BlockSpec((pl.Squeezed(), pl.Squeezed(), tkv, dk),
                          lambda b, h, qi, ki: (b, h, ki, 0))
    o_spec = pl.BlockSpec((pl.Squeezed(), pl.Squeezed(), tq, dk),
                          lambda b, h, qi, ki: (b, h, qi, 0))

    return pl.pallas_call(
        _flash_kernel,
        out_shape=jax.ShapeDtypeStruct((B, H, Sq, dk), jnp.bfloat16),
        grid_spec=pltpu.PrefetchScalarGridSpec(
            num_scalar_prefetch=0,
            grid=grid,
            in_specs=[q_spec, k_spec, v_spec],
            out_specs=o_spec,
            scratch_shapes=[
                pltpu.VMEM((tq, 1), jnp.float32),    # running max m
                pltpu.VMEM((tq, 1), jnp.float32),    # running sum l
                pltpu.VMEM((tq, dk), jnp.float32),   # output accumulator
            ],
        ),
        compiler_params=pltpu.CompilerParams(
            dimension_semantics=("parallel", "parallel", "parallel", "arbitrary"),
            vmem_limit_bytes=32 * 1024 * 1024),
    )(q, k, v)


# ----------------------------------------------------------------------------
# Full MultiHeadAttention forward
# ----------------------------------------------------------------------------
def multi_head_attention(Q, K, V, params, num_heads, mask=None):
    # TODO(synk): optional attention-mask path not implemented (the PyTorch
    # forward default mask=None is what we reproduce).
    assert mask is None
    B, Sq, D = Q.shape
    dk = D // num_heads
    scale = 1.0 / math.sqrt(dk)

    # ---- static weight prep (outside kernels): fold score scale into W_q/b_q,
    # pre-transpose to (D_in, D_out), cast to bf16 for the MXU RHS.
    wq_t = (params["wq"] * scale).T.astype(jnp.bfloat16)
    bq = (params["bq"] * scale).astype(jnp.float32)
    wk_t = params["wk"].T.astype(jnp.bfloat16)
    wv_t = params["wv"].T.astype(jnp.bfloat16)
    wo_t = params["wo"].T.astype(jnp.bfloat16)
    bk = params["bk"].astype(jnp.float32)
    bv = params["bv"].astype(jnp.float32)

    def split_heads(x):                       # (B, S, D) -> (B, H, S, dk)
        b, s, _ = x.shape
        return x.reshape(b, s, num_heads, dk).transpose(0, 2, 1, 3)

    if (Q is K) and (K is V):
        # Fused QKV projection: one matmul, source read from HBM once.
        w_qkv = jnp.concatenate([wq_t, wk_t, wv_t], axis=1)          # (D, 3D)
        b_qkv = jnp.concatenate([bq, bk, bv])
        proj = linear(Q, w_qkv, b_qkv, out_dtype=jnp.bfloat16)       # (B, S, 3D)
        qkv = proj.reshape(B, Sq, 3, num_heads, dk).transpose(2, 0, 3, 1, 4)
        qh, kh, vh = qkv[0], qkv[1], qkv[2]                          # (B, H, S, dk)
    else:
        qh = split_heads(linear(Q, wq_t, bq, out_dtype=jnp.bfloat16))
        if K is V:
            # Fused KV projection when K and V share a source.
            w_kv = jnp.concatenate([wk_t, wv_t], axis=1)             # (D, 2D)
            b_kv = jnp.concatenate([bk, bv])
            kvp = linear(K, w_kv, b_kv, out_dtype=jnp.bfloat16)      # (B, S, 2D)
            kh = split_heads(kvp[..., :D])
            vh = split_heads(kvp[..., D:])
        else:
            kh = split_heads(linear(K, wk_t, bk, out_dtype=jnp.bfloat16))
            vh = split_heads(linear(V, wv_t, bv, out_dtype=jnp.bfloat16))

    attn = flash_mha(qh, kh, vh)                                     # (B, H, Sq, dk)
    attn = attn.transpose(0, 2, 1, 3).reshape(B, Sq, D)              # combine heads
    return linear(attn, wo_t, params["bo"], out_dtype=Q.dtype)


# ----------------------------------------------------------------------------
# Pure-JAX f32 reference (for correctness check)
# ----------------------------------------------------------------------------
def reference_mha(Q, K, V, params, num_heads):
    B, Sq, D = Q.shape
    Skv = K.shape[1]
    dk = D // num_heads

    def lin(x, w, b):
        return x @ w.T + b

    def split(x, s):
        return x.reshape(B, s, num_heads, dk).transpose(0, 2, 1, 3)

    Qh = split(lin(Q, params["wq"], params["bq"]), Sq)
    Kh = split(lin(K, params["wk"], params["bk"]), Skv)
    Vh = split(lin(V, params["wv"], params["bv"]), Skv)
    s = jnp.einsum("bhqd,bhkd->bhqk", Qh, Kh) / math.sqrt(dk)
    p = jax.nn.softmax(s, axis=-1)
    o = jnp.einsum("bhqk,bhkd->bhqd", p, Vh)
    o = o.transpose(0, 2, 1, 3).reshape(B, Sq, D)
    return lin(o, params["wo"], params["bo"])


if __name__ == "__main__":
    # Module implies d_model=512, num_heads=8 (d_k=64); keep seq/batch small.
    B, S, D, H = 2, 256, 512, 8

    key = jax.random.PRNGKey(0)
    ks = jax.random.split(key, 11)
    init = lambda k, shape: jax.random.normal(k, shape, jnp.float32) * 0.05

    params = {
        "wq": init(ks[0], (D, D)), "bq": init(ks[1], (D,)),
        "wk": init(ks[2], (D, D)), "bk": init(ks[3], (D,)),
        "wv": init(ks[4], (D, D)), "bv": init(ks[5], (D,)),
        "wo": init(ks[6], (D, D)), "bo": init(ks[7], (D,)),
    }
    X = jax.random.normal(ks[8], (B, S, D), jnp.float32)
    Kx = jax.random.normal(ks[9], (B, S, D), jnp.float32)
    Vx = jax.random.normal(ks[10], (B, S, D), jnp.float32)

    def check(name, out, ref):
        assert out.shape == ref.shape, f"{name}: shape {out.shape} vs {ref.shape}"
        err = float(jnp.max(jnp.abs(out.astype(jnp.float32) - ref)))
        assert err < 1e-1, f"{name}: max abs err {err}"

    # Self-attention (exercises the fused-QKV path).
    out_self = jax.block_until_ready(multi_head_attention(X, X, X, params, H))
    check("self-attention", out_self, reference_mha(X, X, X, params, H))

    # Cross-attention (exercises the non-fused path).
    out_cross = jax.block_until_ready(multi_head_attention(X, Kx, Vx, params, H))
    check("cross-attention", out_cross, reference_mha(X, Kx, Vx, params, H))

    print("KERNEL_OK")
</pallas_src>

<mosaic_0001>
module attributes {stable_mosaic.version = 11 : i64} {
  func.func @_linear_kernel(%arg0: i32, %arg1: i32, %arg2: memref<512x512xbf16, #tpu.memory_space<vmem>>, %arg3: memref<512x512xbf16, #tpu.memory_space<vmem>>, %arg4: memref<1x512xf32, #tpu.memory_space<vmem>>, %arg5: memref<512x512xbf16, #tpu.memory_space<vmem>>) attributes {dimension_semantics = [#tpu.dimension_semantics<parallel>, #tpu.dimension_semantics<parallel>], iteration_bounds = array<i64: 1, 3>, scalar_prefetch = 0 : i64, scratch_operands = 0 : i64, tpu.core_type = #tpu.core_type<tc>, window_params = [{transform_indices = @transform_0, window_bounds = array<i64: 512, 512>}, {transform_indices = @transform_1, window_bounds = array<i64: 512, 512>}, {transform_indices = @transform_2, window_bounds = array<i64: 1, 512>}, {transform_indices = @transform_3, window_bounds = array<i64: 512, 512>}]} {
    %c0 = arith.constant 0 : index
    %c0_0 = arith.constant 0 : index
    %0 = vector.load %arg2[%c0, %c0_0] : memref<512x512xbf16, #tpu.memory_space<vmem>>, vector<512x512xbf16>
    %c0_1 = arith.constant 0 : index
    %c0_2 = arith.constant 0 : index
    %1 = vector.load %arg3[%c0_1, %c0_2] : memref<512x512xbf16, #tpu.memory_space<vmem>>, vector<512x512xbf16>
    %cst = arith.constant dense<0.000000e+00> : vector<512x512xf32>
    %2 = tpu.matmul %0, %1, %cst {dimension_numbers = #tpu.dot_dimension_numbers<[1], [0], [0], [1], [0, 0, 1, 1], [], []>} : vector<512x512xbf16>, vector<512x512xbf16>, vector<512x512xf32> -> vector<512x512xf32>
    %c0_3 = arith.constant 0 : index
    %c0_4 = arith.constant 0 : index
    %3 = vector.load %arg4[%c0_3, %c0_4] : memref<1x512xf32, #tpu.memory_space<vmem>>, vector<1x512xf32>
    %4 = vector.broadcast %3 : vector<1x512xf32> to vector<512x512xf32>
    %5 = arith.addf %2, %4 : vector<512x512xf32>
    %6 = arith.truncf %5 : vector<512x512xf32> to vector<512x512xbf16>
    %c0_5 = arith.constant 0 : index
    %c0_6 = arith.constant 0 : index
    %7 = vector.load %arg5[%c0_5, %c0_6] : memref<512x512xbf16, #tpu.memory_space<vmem>>, vector<512x512xbf16>
    tpu.vector_store %arg5[%c0_5, %c0_6], %6 {strides = array<i32>} : memref<512x512xbf16, #tpu.memory_space<vmem>>, vector<512x512xbf16>,
    return
  }
  func.func @transform_0(%arg0: i32, %arg1: i32) -> (i32, i32) {
    %c0_i32 = arith.constant 0 : i32
    %c0_i32_0 = arith.constant 0 : i32
    return %arg0, %c0_i32 : i32, i32
  }
  func.func @transform_1(%arg0: i32, %arg1: i32) -> (i32, i32) {
    %c0_i32 = arith.constant 0 : i32
    %c0_i32_0 = arith.constant 0 : i32
    return %c0_i32, %arg1 : i32, i32
  }
  func.func @transform_2(%arg0: i32, %arg1: i32) -> (i32, i32) {
    %c0_i32 = arith.constant 0 : i32
    %c0_i32_0 = arith.constant 0 : i32
    return %c0_i32, %arg1 : i32, i32
  }
  func.func @transform_3(%arg0: i32, %arg1: i32) -> (i32, i32) {
    %c0_i32 = arith.constant 0 : i32
    return %arg0, %arg1 : i32, i32
  }
}

</mosaic_0001>

<llo_original>
// kernel: tpu_custom_call.1
$region0: #{tpu_custom_call.1}
  #allocation0 [shape = 'u32[]', space=smem, size = 0x4, offset = 0x4, fixed_abs, tag = 'smem constant byte address 0x4 - core index']
  #allocation1 [shape = 'u32[144,128]{1,0:T(1,128)}', space=vmem, size = 0x12000, scoped, tag = 'internal scratch']
  %s0 = inlined_call_operand.hbm [shape: bf16[512,512], index: 0, kind: input, shape index: {}]
  %s1 = inlined_call_operand.hbm [shape: bf16[512,1536], index: 1, kind: input, shape index: {}]
  %s2 = inlined_call_operand.hbm [shape: f32[1,1536], index: 2, kind: input, shape index: {}]
  %s3 = inlined_call_operand.hbm [shape: bf16[512,1536], index: 3, kind: output, shape index: {}]
  %s4 = sld [smem:[#allocation0]]
  $region57: #{tpu_custom_call.1} parent=0
    _
  %s6 = ssub.s32 1, %s4
  %s7 = scalar_select 0, %s6, %s4
  $region1: #{tpu_custom_call.1} parent=0
    #allocation2 [shape = 'u8[524288]{0}', space=vmem, size = 0x80000, scoped, tag = 'input window, operand 0, single buffered']
    #allocation3 [shape = 's32[2]{0}', space=sflag, size = 0x8, scoped, tag = 'scoped memory for tpu_custom_call.1']
    #allocation4 [shape = 's32[2]{0}', space=sflag, size = 0x8, scoped, tag = 'scoped memory for tpu_custom_call.1']
    #allocation5 [shape = 'u8[1048576]{0}', space=vmem, size = 0x100000, scoped, tag = 'input window, operand 1']
    #allocation6 [shape = 's32[2]{0}', space=sflag, size = 0x8, scoped, tag = 'scoped memory for tpu_custom_call.1']
    #allocation7 [shape = 'u8[4096]{0}', space=vmem, size = 0x1000, scoped, tag = 'input window, operand 2']
    #allocation8 [shape = 'u8[1048576]{0}', space=vmem, size = 0x100000, scoped, tag = 'output window, operand 0']
    %8 = vsyncpa [#allocation3], 0
    %9 = vsyncpa [#allocation6], 0
    %s10 = scalar_lea.sflag [#allocation6], 1
    %11 = vsyncpa %s10, 0
    %12 = vsyncpa [#allocation4], 0
    %s13 = scalar_lea.sflag [#allocation4], 1
    %14 = vsyncpa %s13, 0
    loop: start=0, step=1, limit=5
    $region2: #{tpu_custom_call.1} parent=1 // loop_pre_header
      _
    $region3: #{tpu_custom_call.1} parent=1 // loop_header
      %s16 = sphi 0, %s20
      %p17 = scmp.ge.s32.totalorder %s16, 5
      %s23 = sphi 0, %s35
      %s24 = sphi 0, %s31
      %s25 = sphi 0, %s23
      %s26 = sphi 0, %s24
      %s27 = sphi 0, %s25
      %s28 = sphi 0, %s26
      %s38 = sphi 0, %s40
      %s41 = sphi 0, %s38
      %s42 = sphi 0, %s41
      %s58 = sphi 0, %s42
      %s64 = sphi 0, %s66
      %s67 = sphi 0, %s64
      %s68 = sphi 0, %s67
      %s84 = sphi 0, %s68
      %s90 = sphi 0, %s92
      %s93 = sphi 0, %s90
      %s94 = sphi 0, %s93
      %s110 = sphi 0, %s94
      %s118 = sphi 0, %s120
      %s121 = sphi 0, %s118
      %s122 = sphi 0, %s121
      %s138 = sphi 0, %s122
    $region4: #{tpu_custom_call.1} parent=1 // loop_header_branch
      %19 = sbr.rel (%p17) target = $region8
    $region5: #{tpu_custom_call.1} parent=1 // loop_body
      %s21 = ssub.s32 %s16, 1
      %s22 = ssub.s32 %s16, 2
      %s29 = sadd.s32 1, %s24
      %p30 = scmp.ge.s32.totalorder %s29, 3
      %s31 = scalar_select %p30, 0, %s29
      %s32 = sadd.s32 1, %s23
      %s33 = scalar_select %p30, %s32, %s23
      %p34 = scmp.ge.s32.totalorder %s33, 1
      %s35 = scalar_select %p34, 0, %s33
      %s36 = ssub.s32 %s23, %s35
      %p37 = scmp.eq.s32.totalorder %s36, 0
      %s39 = sadd.s32 %s38, 1
      %s40 = scalar_select %p37, %s38, %s39
      %p43 = pneg %p37
      %p44 = scmp.eq.s32.totalorder %s16, 2
      %p45 = por %p43, %p44
      %p46 = scmp.ne.s32.totalorder %s38, %s41
      %p47 = scmp.eq.s32.totalorder %s16, 0
      %p48 = por %p46, %p47
      %p49 = scmp.ne.s32.totalorder %s38, %s41
      %p50 = scmp.eq.s32.totalorder %s21, 2
      %p51 = por %p49, %p50
      %p52 = scmp.ne.s32.totalorder %s41, %s42
      %p53 = scmp.eq.s32.totalorder %s21, 0
      %p54 = por %p52, %p53
      %p55 = scmp.ne.s32.totalorder %s41, %s42
      %p56 = scmp.eq.s32.totalorder %s22, 2
      %p57 = por %p55, %p56
      %p59 = scmp.ne.s32.totalorder %s42, %s58
      %p60 = scmp.eq.s32.totalorder %s22, 0
      %p61 = por %p59, %p60
      %s62 = ssub.s32 %s24, %s31
      %p63 = scmp.eq.s32.totalorder %s62, 0
      %s65 = sadd.s32 %s64, 1
      %s66 = scalar_select %p63, %s64, %s65
      %p69 = pneg %p63
      %p70 = scmp.eq.s32.totalorder %s16, 2
      %p71 = por %p69, %p70
      %p72 = scmp.ne.s32.totalorder %s64, %s67
      %p73 = scmp.eq.s32.totalorder %s16, 0
      %p74 = por %p72, %p73
      %p75 = scmp.ne.s32.totalorder %s64, %s67
      %p76 = scmp.eq.s32.totalorder %s21, 2
      %p77 = por %p75, %p76
      %p78 = scmp.ne.s32.totalorder %s67, %s68
      %p79 = scmp.eq.s32.totalorder %s21, 0
      %p80 = por %p78, %p79
      %p81 = scmp.ne.s32.totalorder %s67, %s68
      %p82 = scmp.eq.s32.totalorder %s22, 2
      %p83 = por %p81, %p82
      %p85 = scmp.ne.s32.totalorder %s68, %s84
      %p86 = scmp.eq.s32.totalorder %s22, 0
      %p87 = por %p85, %p86
      %s88 = ssub.s32 %s24, %s31
      %p89 = scmp.eq.s32.totalorder %s88, 0
      %s91 = sadd.s32 %s90, 1
      %s92 = scalar_select %p89, %s90, %s91
      %p95 = pneg %p89
      %p96 = scmp.eq.s32.totalorder %s16, 2
      %p97 = por %p95, %p96
      %p98 = scmp.ne.s32.totalorder %s90, %s93
      %p99 = scmp.eq.s32.totalorder %s16, 0
      %p100 = por %p98, %p99
      %p101 = scmp.ne.s32.totalorder %s90, %s93
      %p102 = scmp.eq.s32.totalorder %s21, 2
      %p103 = por %p101, %p102
      %p104 = scmp.ne.s32.totalorder %s93, %s94
      %p105 = scmp.eq.s32.totalorder %s21, 0
      %p106 = por %p104, %p105
      %p107 = scmp.ne.s32.totalorder %s93, %s94
      %p108 = scmp.eq.s32.totalorder %s22, 2
      %p109 = por %p107, %p108
      %p111 = scmp.ne.s32.totalorder %s94, %s110
      %p112 = scmp.eq.s32.totalorder %s22, 0
      %p113 = por %p111, %p112
      %s114 = ssub.s32 %s23, %s35
      %s115 = ssub.s32 %s24, %s31
      %s116 = sor.u32 %s114, %s115
      %p117 = scmp.eq.s32.totalorder %s116, 0
      %s119 = sadd.s32 %s118, 1
      %s120 = scalar_select %p117, %s118, %s119
      %p123 = pneg %p117
      %p124 = scmp.eq.s32.totalorder %s16, 2
      %p125 = por %p123, %p124
      %p126 = scmp.ne.s32.totalorder %s118, %s121
      %p127 = scmp.eq.s32.totalorder %s16, 0
      %p128 = por %p126, %p127
      %p129 = scmp.ne.s32.totalorder %s118, %s121
      %p130 = scmp.eq.s32.totalorder %s21, 2
      %p131 = por %p129, %p130
      %p132 = scmp.ne.s32.totalorder %s121, %s122
      %p133 = scmp.eq.s32.totalorder %s21, 0
      %p134 = por %p132, %p133
      %p135 = scmp.ne.s32.totalorder %s121, %s122
      %p136 = scmp.eq.s32.totalorder %s22, 2
      %p137 = por %p135, %p136
      %p139 = scmp.ne.s32.totalorder %s122, %s138
      %p140 = scmp.eq.s32.totalorder %s22, 0
      %p141 = por %p139, %p140
      %p142 = scmp.le.s32.totalorder 1, %s16
      %p143 = scmp.lt.s32.totalorder %s16, 4
      %p144 = pnand %p142, %p143
      %p145 = pneg %p144
      // Predicated region
      $region9: #{tpu_custom_call.1} parent=5 // pred_check
        _
      $region10: #{tpu_custom_call.1} parent=5 // pred_check_branch
        %147 = sbr.rel (%p144) target = $region12
      $region11: #{tpu_custom_call.1} parent=5 // pred_region
        %s148 = ssub.s32 %s16, 1
        // Predicated region
        $region13: #{tpu_custom_call.1} parent=11 // pred_check
          %p149 = pneg %p54
        $region14: #{tpu_custom_call.1} parent=11 // pred_check_branch
          %151 = sbr.rel (%p149) target = $region16
        $region15: #{tpu_custom_call.1} parent=11 // pred_region
          %s152 = smul.u32 64, %s25
          %s154 = ssub.s32 16384, 16384
          %155 = vsyncadd [#allocation3], %s154
          %s156 = smul.addr %s152, 4
          %s157 = smul.addr %s156, 64
          %s158 = scalar_lea.hbm %s0, %s157
          %s159 = sshll.u32 [#allocation2], 4
          %s160 = int_to_ptr.vmem [resolvable:$true] %s159
          %165 = dma.hbm_to_vmem [thread:$0]  %s158, 16384, %s160, [#allocation3], 256, 256, 16
        $region16: #{tpu_custom_call.1} parent=11 // pred_fallthru
          _
      $region12: #{tpu_custom_call.1} parent=5 // pred_fallthru
        _
      %p166 = scmp.lt.s32.totalorder %s16, 3
      // Predicated region
      $region17: #{tpu_custom_call.1} parent=5 // pred_check
        %p167 = pneg %p166
      $region18: #{tpu_custom_call.1} parent=5 // pred_check_branch
        %169 = sbr.rel (%p167) target = $region20
      $region19: #{tpu_custom_call.1} parent=5 // pred_region
        // Predicated region
        $region21: #{tpu_custom_call.1} parent=19 // pred_check
          %p170 = pneg %p74
        $region22: #{tpu_custom_call.1} parent=19 // pred_check_branch
          %172 = sbr.rel (%p170) target = $region24
        $region23: #{tpu_custom_call.1} parent=19 // pred_region
          %s173 = sand.u32 %s16, 1
          %s174 = scalar_lea.sflag [#allocation6], %s173
          %s175 = sand.u32 %s64, 1
          %s176 = smul.addr %s175, 1024
          %s177 = scalar_lea.vmem [#allocation5], %s176
          %s178 = smul.u32 4, %s24
          %s180 = ssub.s32 16384, 16384
          %181 = vsyncadd %s174, %s180
          %s182 = smul.addr %s178, 64
          %s183 = scalar_lea.hbm %s1, %s182
          %s184 = sshll.u32 %s177, 4
          %s185 = int_to_ptr.vmem [resolvable:$true] %s184
          %190 = dma.hbm_to_vmem [thread:$0]  %s183, 16384, %s185, %s174, 768, 256, 16
        $region24: #{tpu_custom_call.1} parent=19 // pred_fallthru
          _
        // Predicated region
        $region25: #{tpu_custom_call.1} parent=19 // pred_check
          %p191 = pneg %p100
        $region26: #{tpu_custom_call.1} parent=19 // pred_check_branch
          %193 = sbr.rel (%p191) target = $region28
        $region27: #{tpu_custom_call.1} parent=19 // pred_region
          %s194 = sand.u32 %s16, 1
          %s195 = scalar_lea.sflag [#allocation6], %s194
          %s196 = sand.u32 %s90, 1
          %s197 = smul.addr %s196, 4
          %s198 = scalar_lea.vmem [#allocation7], %s197
          %s199 = smul.u32 4, %s24
          %s201 = ssub.s32 64, 64
          %202 = vsyncadd %s195, %s201
          %s203 = smul.addr %s199, 16
          %s204 = scalar_lea.hbm %s2, %s203
          %s206 = sshll.u32 %s198, 4
          %s207 = int_to_ptr.vmem [resolvable:$true] %s206
          %209 = dma.hbm_to_vmem [thread:$0]  %s204, 64, %s207, %s195
        $region28: #{tpu_custom_call.1} parent=19 // pred_fallthru
          _
      $region20: #{tpu_custom_call.1} parent=5 // pred_fallthru
        _
      %p210 = scmp.le.s32.totalorder 1, %s16
      %p211 = scmp.lt.s32.totalorder %s16, 4
      %p212 = pnand %p210, %p211
      %p213 = pneg %p212
      // Predicated region
      $region29: #{tpu_custom_call.1} parent=5 // pred_check
        _
      $region30: #{tpu_custom_call.1} parent=5 // pred_check_branch
        %215 = sbr.rel (%p212) target = $region32
      $region31: #{tpu_custom_call.1} parent=5 // pred_region
        %s216 = ssub.s32 %s16, 1
        // Predicated region
        $region33: #{tpu_custom_call.1} parent=31 // pred_check
          %p217 = pneg %p54
        $region34: #{tpu_custom_call.1} parent=31 // pred_check_branch
          %219 = sbr.rel (%p217) target = $region36
        $region35: #{tpu_custom_call.1} parent=31 // pred_region
          %220 = dma.done [#allocation3], 16384
        $region36: #{tpu_custom_call.1} parent=31 // pred_fallthru
          _
        %s221 = sand.u32 %s21, 1
        %s222 = scalar_lea.sflag [#allocation6], %s221
        %s223 = sand.u32 %s67, 1
        %s224 = smul.addr %s223, 1024
        %s225 = scalar_lea.vmem [#allocation5], %s224
        // Predicated region
        $region37: #{tpu_custom_call.1} parent=31 // pred_check
          %p226 = pneg %p80
        $region38: #{tpu_custom_call.1} parent=31 // pred_check_branch
          %228 = sbr.rel (%p226) target = $region40
        $region39: #{tpu_custom_call.1} parent=31 // pred_region
          %229 = dma.done %s222, 16384
        $region40: #{tpu_custom_call.1} parent=31 // pred_fallthru
          _
        %s230 = sand.u32 %s21, 1
        %s231 = scalar_lea.sflag [#allocation6], %s230
        %s232 = sand.u32 %s93, 1
        %s233 = smul.addr %s232, 4
        %s234 = scalar_lea.vmem [#allocation7], %s233
        // Predicated region
        $region41: #{tpu_custom_call.1} parent=31 // pred_check
          %p235 = pneg %p106
        $region42: #{tpu_custom_call.1} parent=31 // pred_check_branch
          %237 = sbr.rel (%p235) target = $region44
        $region43: #{tpu_custom_call.1} parent=31 // pred_region
          %238 = dma.done %s231, 64
        $region44: #{tpu_custom_call.1} parent=31 // pred_fallthru
          _
        %p239 = pneg %p54
        %p240 = pneg %p51
        %s241 = sand.u32 %s21, 1
        %s242 = scalar_lea.sflag [#allocation6], %s241
        %s243 = sand.u32 %s67, 1
        %s244 = smul.addr %s243, 1024
        %s245 = scalar_lea.vmem [#allocation5], %s244
        %p246 = pneg %p80
        %p247 = pneg %p77
        %s248 = sand.u32 %s21, 1
        %s249 = scalar_lea.sflag [#allocation6], %s248
        %s250 = sand.u32 %s93, 1
        %s251 = smul.addr %s250, 4
        %s252 = scalar_lea.vmem [#allocation7], %s251
        %p253 = pneg %p106
        %p254 = pneg %p103
        %p255 = pneg %p134
        %p256 = pneg %p131
        %s257 = sand.u32 %s121, 1
        %s258 = scalar_lea.sflag [#allocation4], %s257
        %s259 = sand.u32 %s121, 1
        %s260 = smul.addr %s259, 1024
        %s261 = scalar_lea.vmem [#allocation8], %s260
        %s262 = smul.u32 64, %s25
        %s263 = smul.u32 4, %s26
        %s264 = smul.u32 4, %s26
        %s265 = smul.u32 64, %s25
        %s266 = smul.u32 4, %s26
        %v267 = vld [vmem:[#allocation2] sm:$0xff]
        %v268 = vld [vmem:[#allocation2 + $0x8] sm:$0xff]
        %v269 = vld [vmem:[#allocation2 + $0x10] sm:$0xff]
        %v270 = vld [vmem:[#allocation2 + $0x18] sm:$0xff]
        %v271 = vld [vmem:[#allocation2 + $0x20] sm:$0xff]
        %v272 = vld [vmem:[#allocation2 + $0x28] sm:$0xff]
        %v273 = vld [vmem:[#allocation2 + $0x30] sm:$0xff]
        %v274 = vld [vmem:[#allocation2 + $0x38] sm:$0xff]
        %v275 = vld [vmem:[#allocation2 + $0x40] sm:$0xff]
        %v276 = vld [vmem:[#allocation2 + $0x48] sm:$0xff]
        %v277 = vld [vmem:[#allocation2 + $0x50] sm:$0xff]
        %v278 = vld [vmem:[#allocation2 + $0x58] sm:$0xff]
        %v279 = vld [vmem:[#allocation2 + $0x60] sm:$0xff]
        %v280 = vld [vmem:[#allocation2 + $0x68] sm:$0xff]
        %v281 = vld [vmem:[#allocation2 + $0x70] sm:$0xff]
        %v282 = vld [vmem:[#allocation2 + $0x78] sm:$0xff]
        %v283 = vld [vmem:[#allocation2 + $0x80] sm:$0xff]
        %v284 = vld [vmem:[#allocation2 + $0x88] sm:$0xff]
        %v285 = vld [vmem:[#allocation2 + $0x90] sm:$0xff]
        %v286 = vld [vmem:[#allocation2 + $0x98] sm:$0xff]
        %v287 = vld [vmem:[#allocation2 + $0xa0] sm:$0xff]
        %v288 = vld [vmem:[#allocation2 + $0xa8] sm:$0xff]
        %v289 = vld [vmem:[#allocation2 + $0xb0] sm:$0xff]
        %v290 = vld [vmem:[#allocation2 + $0xb8] sm:$0xff]
        %v291 = vld [vmem:[#allocation2 + $0xc0] sm:$0xff]
        %v292 = vld [vmem:[#allocation2 + $0xc8] sm:$0xff]
        %v293 = vld [vmem:[#allocation2 + $0xd0] sm:$0xff]
        %v294 = vld [vmem:[#allocation2 + $0xd8] sm:$0xff]
        %v295 = vld [vmem:[#allocation2 + $0xe0] sm:$0xff]
        %v296 = vld [vmem:[#allocation2 + $0xe8] sm:$0xff]
        %v297 = vld [vmem:[#allocation2 + $0xf0] sm:$0xff]
        %v298 = vld [vmem:[#allocation2 + $0xf8] sm:$0xff]
        %v299 = vld [vmem:[#allocation2 + $0x100] sm:$0xff]
        %v300 = vld [vmem:[#allocation2 + $0x108] sm:$0xff]
        %v301 = vld [vmem:[#allocation2 + $0x110] sm:$0xff]
        %v302 = vld [vmem:[#allocation2 + $0x118] sm:$0xff]
        %v303 = vld [vmem:[#allocation2 + $0x120] sm:$0xff]
        %v304 = vld [vmem:[#allocation2 + $0x128] sm:$0xff]
        %v305 = vld [vmem:[#allocation2 + $0x130] sm:$0xff]
        %v306 = vld [vmem:[#allocation2 + $0x138] sm:$0xff]
        %v307 = vld [vmem:[#allocation2 + $0x140] sm:$0xff]
        %v308 = vld [vmem:[#allocation2 + $0x148] sm:$0xff]
        %v309 = vld [vmem:[#allocation2 + $0x150] sm:$0xff]
        %v310 = vld [vmem:[#allocation2 + $0x158] sm:$0xff]
        %v311 = vld [vmem:[#allocation2 + $0x160] sm:$0xff]
        %v312 = vld [vmem:[#allocation2 + $0x168] sm:$0xff]
        %v313 = vld [vmem:[#allocation2 + $0x170] sm:$0xff]
        %v314 = vld [vmem:[#allocation2 + $0x178] sm:$0xff]
        %v315 = vld [vmem:[#allocation2 + $0x180] sm:$0xff]
        %v316 = vld [vmem:[#allocation2 + $0x188] sm:$0xff]
        %v317 = vld [vmem:[#allocation2 + $0x190] sm:$0xff]
        %v318 = vld [vmem:[#allocation2 + $0x198] sm:$0xff]
        %v319 = vld [vmem:[#allocation2 + $0x1a0] sm:$0xff]
        %v320 = vld [vmem:[#allocation2 + $0x1a8] sm:$0xff]
        %v321 = vld [vmem:[#allocation2 + $0x1b0] sm:$0xff]
        %v322 = vld [vmem:[#allocation2 + $0x1b8] sm:$0xff]
        %v323 = vld [vmem:[#allocation2 + $0x1c0] sm:$0xff]
        %v324 = vld [vmem:[#allocation2 + $0x1c8] sm:$0xff]
        %v325 = vld [vmem:[#allocation2 + $0x1d0] sm:$0xff]
        %v326 = vld [vmem:[#allocation2 + $0x1d8] sm:$0xff]
        %v327 = vld [vmem:[#allocation2 + $0x1e0] sm:$0xff]
        %v328 = vld [vmem:[#allocation2 + $0x1e8] sm:$0xff]
        %v329 = vld [vmem:[#allocation2 + $0x1f0] sm:$0xff]
        %v330 = vld [vmem:[#allocation2 + $0x1f8] sm:$0xff]
        %v331 = vld [vmem:[#allocation2 + $0x200] sm:$0xff]
        %v332 = vld [vmem:[#allocation2 + $0x208] sm:$0xff]
        %v333 = vld [vmem:[#allocation2 + $0x210] sm:$0xff]
        %v334 = vld [vmem:[#allocation2 + $0x218] sm:$0xff]
        %v335 = vld [vmem:[#allocation2 + $0x220] sm:$0xff]
        %v336 = vld [vmem:[#allocation2 + $0x228] sm:$0xff]
        %v337 = vld [vmem:[#allocation2 + $0x230] sm:$0xff]
        %v338 = vld [vmem:[#allocation2 + $0x238] sm:$0xff]
        %v339 = vld [vmem:[#allocation2 + $0x240] sm:$0xff]
        %v340 = vld [vmem:[#allocation2 + $0x248] sm:$0xff]
        %v341 = vld [vmem:[#allocation2 + $0x250] sm:$0xff]
        %v342 = vld [vmem:[#allocation2 + $0x258] sm:$0xff]
        %v343 = vld [vmem:[#allocation2 + $0x260] sm:$0xff]
        %v344 = vld [vmem:[#allocation2 + $0x268] sm:$0xff]
        %v345 = vld [vmem:[#allocation2 + $0x270] sm:$0xff]
        %v346 = vld [vmem:[#allocation2 + $0x278] sm:$0xff]
        %v347 = vld [vmem:[#allocation2 + $0x280] sm:$0xff]
        %v348 = vld [vmem:[#allocation2 + $0x288] sm:$0xff]
        %v349 = vld [vmem:[#allocation2 + $0x290] sm:$0xff]
        %v350 = vld [vmem:[#allocation2 + $0x298] sm:$0xff]
        %v351 = vld [vmem:[#allocation2 + $0x2a0] sm:$0xff]
        %v352 = vld [vmem:[#allocation2 + $0x2a8] sm:$0xff]
        %v353 = vld [vmem:[#allocation2 + $0x2b0] sm:$0xff]
        %v354 = vld [vmem:[#allocation2 + $0x2b8] sm:$0xff]
        %v355 = vld [vmem:[#allocation2 + $0x2c0] sm:$0xff]
        %v356 = vld [vmem:[#allocation2 + $0x2c8] sm:$0xff]
        %v357 = vld [vmem:[#allocation2 + $0x2d0] sm:$0xff]
        %v358 = vld [vmem:[#allocation2 + $0x2d8] sm:$0xff]
        %v359 = vld [vmem:[#allocation2 + $0x2e0] sm:$0xff]
        %v360 = vld [vmem:[#allocation2 + $0x2e8] sm:$0xff]
        %v361 = vld [vmem:[#allocation2 + $0x2f0] sm:$0xff]
        %v362 = vld [vmem:[#allocation2 + $0x2f8] sm:$0xff]
        %v363 = vld [vmem:[#allocation2 + $0x300] sm:$0xff]
        %v364 = vld [vmem:[#allocation2 + $0x308] sm:$0xff]
        %v365 = vld [vmem:[#allocation2 + $0x310] sm:$0xff]
        %v366 = vld [vmem:[#allocation2 + $0x318] sm:$0xff]
        %v367 = vld [vmem:[#allocation2 + $0x320] sm:$0xff]
        %v368 = vld [vmem:[#allocation2 + $0x328] sm:$0xff]
        %v369 = vld [vmem:[#allocation2 + $0x330] sm:$0xff]
        %v370 = vld [vmem:[#allocation2 + $0x338] sm:$0xff]
        %v371 = vld [vmem:[#allocation2 + $0x340] sm:$0xff]
        %v372 = vld [vmem:[#allocation2 + $0x348] sm:$0xff]
        %v373 = vld [vmem:[#allocation2 + $0x350] sm:$0xff]
        %v374 = vld [vmem:[#allocation2 + $0x358] sm:$0xff]
        %v375 = vld [vmem:[#allocation2 + $0x360] sm:$0xff]
        %v376 = vld [vmem:[#allocation2 + $0x368] sm:$0xff]
        %v377 = vld [vmem:[#allocation2 + $0x370] sm:$0xff]
        %v378 = vld [vmem:[#allocation2 + $0x378] sm:$0xff]
        %v379 = vld [vmem:[#allocation2 + $0x380] sm:$0xff]
        %v380 = vld [vmem:[#allocation2 + $0x388] sm:$0xff]
        %v381 = vld [vmem:[#allocation2 + $0x390] sm:$0xff]
        %v382 = vld [vmem:[#allocation2 + $0x398] sm:$0xff]
        %v383 = vld [vmem:[#allocation2 + $0x3a0] sm:$0xff]
        %v384 = vld [vmem:[#allocation2 + $0x3a8] sm:$0xff]
        %v385 = vld [vmem:[#allocation2 + $0x3b0] sm:$0xff]
        %v386 = vld [vmem:[#allocation2 + $0x3b8] sm:$0xff]
        %v387 = vld [vmem:[#allocation2 + $0x3c0] sm:$0xff]
        %v388 = vld [vmem:[#allocation2 + $0x3c8] sm:$0xff]
        %v389 = vld [vmem:[#allocation2 + $0x3d0] sm:$0xff]
        %v390 = vld [vmem:[#allocation2 + $0x3d8] sm:$0xff]
        %v391 = vld [vmem:[#allocation2 + $0x3e0] sm:$0xff]
        %v392 = vld [vmem:[#allocation2 + $0x3e8] sm:$0xff]
        %v393 = vld [vmem:[#allocation2 + $0x3f0] sm:$0xff]
        %v394 = vld [vmem:[#allocation2 + $0x3f8] sm:$0xff]
        %v395 = vld [vmem:[%s225] sm:$0xff]
        %v396 = vld [vmem:[%s225 + $0x8] sm:$0xff]
        %v397 = vld [vmem:[%s225 + $0x10] sm:$0xff]
        %v398 = vld [vmem:[%s225 + $0x18] sm:$0xff]
        %v399 = vld [vmem:[%s225 + $0x20] sm:$0xff]
        %v400 = vld [vmem:[%s225 + $0x28] sm:$0xff]
        %v401 = vld [vmem:[%s225 + $0x30] sm:$0xff]
        %v402 = vld [vmem:[%s225 + $0x38] sm:$0xff]
        %v403 = vld [vmem:[%s225 + $0x40] sm:$0xff]
        %v404 = vld [vmem:[%s225 + $0x48] sm:$0xff]
        %v405 = vld [vmem:[%s225 + $0x50] sm:$0xff]
        %v406 = vld [vmem:[%s225 + $0x58] sm:$0xff]
        %v407 = vld [vmem:[%s225 + $0x60] sm:$0xff]
        %v408 = vld [vmem:[%s225 + $0x68] sm:$0xff]
        %v409 = vld [vmem:[%s225 + $0x70] sm:$0xff]
        %v410 = vld [vmem:[%s225 + $0x78] sm:$0xff]
        %v411 = vld [vmem:[%s225 + $0x80] sm:$0xff]
        %v412 = vld [vmem:[%s225 + $0x88] sm:$0xff]
        %v413 = vld [vmem:[%s225 + $0x90] sm:$0xff]
        %v414 = vld [vmem:[%s225 + $0x98] sm:$0xff]
        %v415 = vld [vmem:[%s225 + $0xa0] sm:$0xff]
        %v416 = vld [vmem:[%s225 + $0xa8] sm:$0xff]
        %v417 = vld [vmem:[%s225 + $0xb0] sm:$0xff]
        %v418 = vld [vmem:[%s225 + $0xb8] sm:$0xff]
        %v419 = vld [vmem:[%s225 + $0xc0] sm:$0xff]
        %v420 = vld [vmem:[%s225 + $0xc8] sm:$0xff]
        %v421 = vld [vmem:[%s225 + $0xd0] sm:$0xff]
        %v422 = vld [vmem:[%s225 + $0xd8] sm:$0xff]
        %v423 = vld [vmem:[%s225 + $0xe0] sm:$0xff]
        %v424 = vld [vmem:[%s225 + $0xe8] sm:$0xff]
        %v425 = vld [vmem:[%s225 + $0xf0] sm:$0xff]
        %v426 = vld [vmem:[%s225 + $0xf8] sm:$0xff]
        %v427 = vld [vmem:[%s225 + $0x100] sm:$0xff]
        %v428 = vld [vmem:[%s225 + $0x108] sm:$0xff]
        %v429 = vld [vmem:[%s225 + $0x110] sm:$0xff]
        %v430 = vld [vmem:[%s225 + $0x118] sm:$0xff]
        %v431 = vld [vmem:[%s225 + $0x120] sm:$0xff]
        %v432 = vld [vmem:[%s225 + $0x128] sm:$0xff]
        %v433 = vld [vmem:[%s225 + $0x130] sm:$0xff]
        %v434 = vld [vmem:[%s225 + $0x138] sm:$0xff]
        %v435 = vld [vmem:[%s225 + $0x140] sm:$0xff]
        %v436 = vld [vmem:[%s225 + $0x148] sm:$0xff]
        %v437 = vld [vmem:[%s225 + $0x150] sm:$0xff]
        %v438 = vld [vmem:[%s225 + $0x158] sm:$0xff]
        %v439 = vld [vmem:[%s225 + $0x160] sm:$0xff]
        %v440 = vld [vmem:[%s225 + $0x168] sm:$0xff]
        %v441 = vld [vmem:[%s225 + $0x170] sm:$0xff]
        %v442 = vld [vmem:[%s225 + $0x178] sm:$0xff]
        %v443 = vld [vmem:[%s225 + $0x180] sm:$0xff]
        %v444 = vld [vmem:[%s225 + $0x188] sm:$0xff]
        %v445 = vld [vmem:[%s225 + $0x190] sm:$0xff]
        %v446 = vld [vmem:[%s225 + $0x198] sm:$0xff]
        %v447 = vld [vmem:[%s225 + $0x1a0] sm:$0xff]
        %v448 = vld [vmem:[%s225 + $0x1a8] sm:$0xff]
        %v449 = vld [vmem:[%s225 + $0x1b0] sm:$0xff]
        %v450 = vld [vmem:[%s225 + $0x1b8] sm:$0xff]
        %v451 = vld [vmem:[%s225 + $0x1c0] sm:$0xff]
        %v452 = vld [vmem:[%s225 + $0x1c8] sm:$0xff]
        %v453 = vld [vmem:[%s225 + $0x1d0] sm:$0xff]
        %v454 = vld [vmem:[%s225 + $0x1d8] sm:$0xff]
        %v455 = vld [vmem:[%s225 + $0x1e0] sm:$0xff]
        %v456 = vld [vmem:[%s225 + $0x1e8] sm:$0xff]
        %v457 = vld [vmem:[%s225 + $0x1f0] sm:$0xff]
        %v458 = vld [vmem:[%s225 + $0x1f8] sm:$0xff]
        %v459 = vld [vmem:[%s225 + $0x200] sm:$0xff]
        %v460 = vld [vmem:[%s225 + $0x208] sm:$0xff]
        %v461 = vld [vmem:[%s225 + $0x210] sm:$0xff]
        %v462 = vld [vmem:[%s225 + $0x218] sm:$0xff]
        %v463 = vld [vmem:[%s225 + $0x220] sm:$0xff]
        %v464 = vld [vmem:[%s225 + $0x228] sm:$0xff]
        %v465 = vld [vmem:[%s225 + $0x230] sm:$0xff]
        %v466 = vld [vmem:[%s225 + $0x238] sm:$0xff]
        %v467 = vld [vmem:[%s225 + $0x240] sm:$0xff]
        %v468 = vld [vmem:[%s225 + $0x248] sm:$0xff]
        %v469 = vld [vmem:[%s225 + $0x250] sm:$0xff]
        %v470 = vld [vmem:[%s225 + $0x258] sm:$0xff]
        %v471 = vld [vmem:[%s225 + $0x260] sm:$0xff]
        %v472 = vld [vmem:[%s225 + $0x268] sm:$0xff]
        %v473 = vld [vmem:[%s225 + $0x270] sm:$0xff]
        %v474 = vld [vmem:[%s225 + $0x278] sm:$0xff]
        %v475 = vld [vmem:[%s225 + $0x280] sm:$0xff]
        %v476 = vld [vmem:[%s225 + $0x288] sm:$0xff]
        %v477 = vld [vmem:[%s225 + $0x290] sm:$0xff]
        %v478 = vld [vmem:[%s225 + $0x298] sm:$0xff]
        %v479 = vld [vmem:[%s225 + $0x2a0] sm:$0xff]
        %v480 = vld [vmem:[%s225 + $0x2a8] sm:$0xff]
        %v481 = vld [vmem:[%s225 + $0x2b0] sm:$0xff]
        %v482 = vld [vmem:[%s225 + $0x2b8] sm:$0xff]
        %v483 = vld [vmem:[%s225 + $0x2c0] sm:$0xff]
        %v484 = vld [vmem:[%s225 + $0x2c8] sm:$0xff]
        %v485 = vld [vmem:[%s225 + $0x2d0] sm:$0xff]
        %v486 = vld [vmem:[%s225 + $0x2d8] sm:$0xff]
        %v487 = vld [vmem:[%s225 + $0x2e0] sm:$0xff]
        %v488 = vld [vmem:[%s225 + $0x2e8] sm:$0xff]
        %v489 = vld [vmem:[%s225 + $0x2f0] sm:$0xff]
        %v490 = vld [vmem:[%s225 + $0x2f8] sm:$0xff]
        %v491 = vld [vmem:[%s225 + $0x300] sm:$0xff]
        %v492 = vld [vmem:[%s225 + $0x308] sm:$0xff]
        %v493 = vld [vmem:[%s225 + $0x310] sm:$0xff]
        %v494 = vld [vmem:[%s225 + $0x318] sm:$0xff]
        %v495 = vld [vmem:[%s225 + $0x320] sm:$0xff]
        %v496 = vld [vmem:[%s225 + $0x328] sm:$0xff]
        %v497 = vld [vmem:[%s225 + $0x330] sm:$0xff]
        %v498 = vld [vmem:[%s225 + $0x338] sm:$0xff]
        %v499 = vld [vmem:[%s225 + $0x340] sm:$0xff]
        %v500 = vld [vmem:[%s225 + $0x348] sm:$0xff]
        %v501 = vld [vmem:[%s225 + $0x350] sm:$0xff]
        %v502 = vld [vmem:[%s225 + $0x358] sm:$0xff]
        %v503 = vld [vmem:[%s225 + $0x360] sm:$0xff]
        %v504 = vld [vmem:[%s225 + $0x368] sm:$0xff]
        %v505 = vld [vmem:[%s225 + $0x370] sm:$0xff]
        %v506 = vld [vmem:[%s225 + $0x378] sm:$0xff]
        %v507 = vld [vmem:[%s225 + $0x380] sm:$0xff]
        %v508 = vld [vmem:[%s225 + $0x388] sm:$0xff]
        %v509 = vld [vmem:[%s225 + $0x390] sm:$0xff]
        %v510 = vld [vmem:[%s225 + $0x398] sm:$0xff]
        %v511 = vld [vmem:[%s225 + $0x3a0] sm:$0xff]
        %v512 = vld [vmem:[%s225 + $0x3a8] sm:$0xff]
        %v513 = vld [vmem:[%s225 + $0x3b0] sm:$0xff]
        %v514 = vld [vmem:[%s225 + $0x3b8] sm:$0xff]
        %v515 = vld [vmem:[%s225 + $0x3c0] sm:$0xff]
        %v516 = vld [vmem:[%s225 + $0x3c8] sm:$0xff]
        %v517 = vld [vmem:[%s225 + $0x3d0] sm:$0xff]
        %v518 = vld [vmem:[%s225 + $0x3d8] sm:$0xff]
        %v519 = vld [vmem:[%s225 + $0x3e0] sm:$0xff]
        %v520 = vld [vmem:[%s225 + $0x3e8] sm:$0xff]
        %v521 = vld [vmem:[%s225 + $0x3f0] sm:$0xff]
        %v522 = vld [vmem:[%s225 + $0x3f8] sm:$0xff]
        %v523 = vld [vmem:[%s234] sm:$0xf]
        %v525 = vlaneseq
        %v526 = vshrl.u32 %v525, 7
        %v527 = vsub.s32 0, %v526
        %v528 = vrot.slane %v523, %v527
        %v529 = vlaneseq
        %v530 = vshrl.u32 %v529, 7
        %v531 = vsub.s32 1, %v530
        %v532 = vrot.slane %v523, %v531
        %v533 = vlaneseq
        %v534 = vshrl.u32 %v533, 7
        %v535 = vsub.s32 2, %v534
        %v536 = vrot.slane %v523, %v535
        %v537 = vlaneseq
        %v538 = vshrl.u32 %v537, 7
        %v539 = vsub.s32 3, %v538
        %v540 = vrot.slane %v523, %v539
        %v673 = vunpack.c.l.b16 %v267
        %v674 = vunpack.c.h.b16 %v267
        %v675 = vunpack.c.l.b16 %v268
        %v676 = vunpack.c.h.b16 %v268
        %v677 = vunpack.c.l.b16 %v269
        %v678 = vunpack.c.h.b16 %v269
        %v679 = vunpack.c.l.b16 %v270
        %v680 = vunpack.c.h.b16 %v270
        %v681 = vunpack.c.l.b16 %v271
        %v682 = vunpack.c.h.b16 %v271
        %v683 = vunpack.c.l.b16 %v272
        %v684 = vunpack.c.h.b16 %v272
        %v685 = vunpack.c.l.b16 %v273
        %v686 = vunpack.c.h.b16 %v273
        %v687 = vunpack.c.l.b16 %v274
        %v688 = vunpack.c.h.b16 %v274
        %v689 = vunpack.c.l.b16 %v275
        %v690 = vunpack.c.h.b16 %v275
        %v691 = vunpack.c.l.b16 %v276
        %v692 = vunpack.c.h.b16 %v276
        %v693 = vunpack.c.l.b16 %v277
        %v694 = vunpack.c.h.b16 %v277
        %v695 = vunpack.c.l.b16 %v278
        %v696 = vunpack.c.h.b16 %v278
        %v697 = vunpack.c.l.b16 %v279
        %v698 = vunpack.c.h.b16 %v279
        %v699 = vunpack.c.l.b16 %v280
        %v700 = vunpack.c.h.b16 %v280
        %v701 = vunpack.c.l.b16 %v281
        %v702 = vunpack.c.h.b16 %v281
        %v703 = vunpack.c.l.b16 %v282
        %v704 = vunpack.c.h.b16 %v282
        %v705 = vunpack.c.l.b16 %v283
        %v706 = vunpack.c.h.b16 %v283
        %v707 = vunpack.c.l.b16 %v284
        %v708 = vunpack.c.h.b16 %v284
        %v709 = vunpack.c.l.b16 %v285
        %v710 = vunpack.c.h.b16 %v285
        %v711 = vunpack.c.l.b16 %v286
        %v712 = vunpack.c.h.b16 %v286
        %v713 = vunpack.c.l.b16 %v287
        %v714 = vunpack.c.h.b16 %v287
        %v715 = vunpack.c.l.b16 %v288
        %v716 = vunpack.c.h.b16 %v288
        %v717 = vunpack.c.l.b16 %v289
        %v718 = vunpack.c.h.b16 %v289
        %v719 = vunpack.c.l.b16 %v290
        %v720 = vunpack.c.h.b16 %v290
        %v721 = vunpack.c.l.b16 %v291
        %v722 = vunpack.c.h.b16 %v291
        %v723 = vunpack.c.l.b16 %v292
        %v724 = vunpack.c.h.b16 %v292
        %v725 = vunpack.c.l.b16 %v293
        %v726 = vunpack.c.h.b16 %v293
        %v727 = vunpack.c.l.b16 %v294
        %v728 = vunpack.c.h.b16 %v294
        %v729 = vunpack.c.l.b16 %v295
        %v730 = vunpack.c.h.b16 %v295
        %v731 = vunpack.c.l.b16 %v296
        %v732 = vunpack.c.h.b16 %v296
        %v733 = vunpack.c.l.b16 %v297
        %v734 = vunpack.c.h.b16 %v297
        %v735 = vunpack.c.l.b16 %v298
        %v736 = vunpack.c.h.b16 %v298
        %v737 = vunpack.c.l.b16 %v299
        %v738 = vunpack.c.h.b16 %v299
        %v739 = vunpack.c.l.b16 %v300
        %v740 = vunpack.c.h.b16 %v300
        %v741 = vunpack.c.l.b16 %v301
        %v742 = vunpack.c.h.b16 %v301
        %v743 = vunpack.c.l.b16 %v302
        %v744 = vunpack.c.h.b16 %v302
        %v745 = vunpack.c.l.b16 %v303
        %v746 = vunpack.c.h.b16 %v303
        %v747 = vunpack.c.l.b16 %v304
        %v748 = vunpack.c.h.b16 %v304
        %v749 = vunpack.c.l.b16 %v305
        %v750 = vunpack.c.h.b16 %v305
        %v751 = vunpack.c.l.b16 %v306
        %v752 = vunpack.c.h.b16 %v306
        %v753 = vunpack.c.l.b16 %v307
        %v754 = vunpack.c.h.b16 %v307
        %v755 = vunpack.c.l.b16 %v308
        %v756 = vunpack.c.h.b16 %v308
        %v757 = vunpack.c.l.b16 %v309
        %v758 = vunpack.c.h.b16 %v309
        %v759 = vunpack.c.l.b16 %v310
        %v760 = vunpack.c.h.b16 %v310
        %v761 = vunpack.c.l.b16 %v311
        %v762 = vunpack.c.h.b16 %v311
        %v763 = vunpack.c.l.b16 %v312
        %v764 = vunpack.c.h.b16 %v312
        %v765 = vunpack.c.l.b16 %v313
        %v766 = vunpack.c.h.b16 %v313
        %v767 = vunpack.c.l.b16 %v314
        %v768 = vunpack.c.h.b16 %v314
        %v769 = vunpack.c.l.b16 %v315
        %v770 = vunpack.c.h.b16 %v315
        %v771 = vunpack.c.l.b16 %v316
        %v772 = vunpack.c.h.b16 %v316
        %v773 = vunpack.c.l.b16 %v317
        %v774 = vunpack.c.h.b16 %v317
        %v775 = vunpack.c.l.b16 %v318
        %v776 = vunpack.c.h.b16 %v318
        %v777 = vunpack.c.l.b16 %v319
        %v778 = vunpack.c.h.b16 %v319
        %v779 = vunpack.c.l.b16 %v320
        %v780 = vunpack.c.h.b16 %v320
        %v781 = vunpack.c.l.b16 %v321
        %v782 = vunpack.c.h.b16 %v321
        %v783 = vunpack.c.l.b16 %v322
        %v784 = vunpack.c.h.b16 %v322
        %v785 = vunpack.c.l.b16 %v323
        %v786 = vunpack.c.h.b16 %v323
        %v787 = vunpack.c.l.b16 %v324
        %v788 = vunpack.c.h.b16 %v324
        %v789 = vunpack.c.l.b16 %v325
        %v790 = vunpack.c.h.b16 %v325
        %v791 = vunpack.c.l.b16 %v326
        %v792 = vunpack.c.h.b16 %v326
        %v793 = vunpack.c.l.b16 %v327
        %v794 = vunpack.c.h.b16 %v327
        %v795 = vunpack.c.l.b16 %v328
        %v796 = vunpack.c.h.b16 %v328
        %v797 = vunpack.c.l.b16 %v329
        %v798 = vunpack.c.h.b16 %v329
        %v799 = vunpack.c.l.b16 %v330
        %v800 = vunpack.c.h.b16 %v330
        %v801 = vunpack.c.l.b16 %v331
        %v802 = vunpack.c.h.b16 %v331
        %v803 = vunpack.c.l.b16 %v332
        %v804 = vunpack.c.h.b16 %v332
        %v805 = vunpack.c.l.b16 %v333
        %v806 = vunpack.c.h.b16 %v333
        %v807 = vunpack.c.l.b16 %v334
        %v808 = vunpack.c.h.b16 %v334
        %v809 = vunpack.c.l.b16 %v335
        %v810 = vunpack.c.h.b16 %v335
        %v811 = vunpack.c.l.b16 %v336
        %v812 = vunpack.c.h.b16 %v336
        %v813 = vunpack.c.l.b16 %v337
        %v814 = vunpack.c.h.b16 %v337
        %v815 = vunpack.c.l.b16 %v338
        %v816 = vunpack.c.h.b16 %v338
        %v817 = vunpack.c.l.b16 %v339
        %v818 = vunpack.c.h.b16 %v339
        %v819 = vunpack.c.l.b16 %v340
        %v820 = vunpack.c.h.b16 %v340
        %v821 = vunpack.c.l.b16 %v341
        %v822 = vunpack.c.h.b16 %v341
        %v823 = vunpack.c.l.b16 %v342
        %v824 = vunpack.c.h.b16 %v342
        %v825 = vunpack.c.l.b16 %v343
        %v826 = vunpack.c.h.b16 %v343
        %v827 = vunpack.c.l.b16 %v344
        %v828 = vunpack.c.h.b16 %v344
        %v829 = vunpack.c.l.b16 %v345
        %v830 = vunpack.c.h.b16 %v345
        %v831 = vunpack.c.l.b16 %v346
        %v832 = vunpack.c.h.b16 %v346
        %v833 = vunpack.c.l.b16 %v347
        %v834 = vunpack.c.h.b16 %v347
        %v835 = vunpack.c.l.b16 %v348
        %v836 = vunpack.c.h.b16 %v348
        %v837 = vunpack.c.l.b16 %v349
        %v838 = vunpack.c.h.b16 %v349
        %v839 = vunpack.c.l.b16 %v350
        %v840 = vunpack.c.h.b16 %v350
        %v841 = vunpack.c.l.b16 %v351
        %v842 = vunpack.c.h.b16 %v351
        %v843 = vunpack.c.l.b16 %v352
        %v844 = vunpack.c.h.b16 %v352
        %v845 = vunpack.c.l.b16 %v353
        %v846 = vunpack.c.h.b16 %v353
        %v847 = vunpack.c.l.b16 %v354
        %v848 = vunpack.c.h.b16 %v354
        %v849 = vunpack.c.l.b16 %v355
        %v850 = vunpack.c.h.b16 %v355
        %v851 = vunpack.c.l.b16 %v356
        %v852 = vunpack.c.h.b16 %v356
        %v853 = vunpack.c.l.b16 %v357
        %v854 = vunpack.c.h.b16 %v357
        %v855 = vunpack.c.l.b16 %v358
        %v856 = vunpack.c.h.b16 %v358
        %v857 = vunpack.c.l.b16 %v359
        %v858 = vunpack.c.h.b16 %v359
        %v859 = vunpack.c.l.b16 %v360
        %v860 = vunpack.c.h.b16 %v360
        %v861 = vunpack.c.l.b16 %v361
        %v862 = vunpack.c.h.b16 %v361
        %v863 = vunpack.c.l.b16 %v362
        %v864 = vunpack.c.h.b16 %v362
        %v865 = vunpack.c.l.b16 %v363
        %v866 = vunpack.c.h.b16 %v363
        %v867 = vunpack.c.l.b16 %v364
        %v868 = vunpack.c.h.b16 %v364
        %v869 = vunpack.c.l.b16 %v365
        %v870 = vunpack.c.h.b16 %v365
        %v871 = vunpack.c.l.b16 %v366
        %v872 = vunpack.c.h.b16 %v366
        %v873 = vunpack.c.l.b16 %v367
        %v874 = vunpack.c.h.b16 %v367
        %v875 = vunpack.c.l.b16 %v368
        %v876 = vunpack.c.h.b16 %v368
        %v877 = vunpack.c.l.b16 %v369
        %v878 = vunpack.c.h.b16 %v369
        %v879 = vunpack.c.l.b16 %v370
        %v880 = vunpack.c.h.b16 %v370
        %v881 = vunpack.c.l.b16 %v371
        %v882 = vunpack.c.h.b16 %v371
        %v883 = vunpack.c.l.b16 %v372
        %v884 = vunpack.c.h.b16 %v372
        %v885 = vunpack.c.l.b16 %v373
        %v886 = vunpack.c.h.b16 %v373
        %v887 = vunpack.c.l.b16 %v374
        %v888 = vunpack.c.h.b16 %v374
        %v889 = vunpack.c.l.b16 %v375
        %v890 = vunpack.c.h.b16 %v375
        %v891 = vunpack.c.l.b16 %v376
        %v892 = vunpack.c.h.b16 %v376
        %v893 = vunpack.c.l.b16 %v377
        %v894 = vunpack.c.h.b16 %v377
        %v895 = vunpack.c.l.b16 %v378
        %v896 = vunpack.c.h.b16 %v378
        %v897 = vunpack.c.l.b16 %v379
        %v898 = vunpack.c.h.b16 %v379
        %v899 = vunpack.c.l.b16 %v380
        %v900 = vunpack.c.h.b16 %v380
        %v901 = vunpack.c.l.b16 %v381
        %v902 = vunpack.c.h.b16 %v381
        %v903 = vunpack.c.l.b16 %v382
        %v904 = vunpack.c.h.b16 %v382
        %v905 = vunpack.c.l.b16 %v383
        %v906 = vunpack.c.h.b16 %v383
        %v907 = vunpack.c.l.b16 %v384
        %v908 = vunpack.c.h.b16 %v384
        %v909 = vunpack.c.l.b16 %v385
        %v910 = vunpack.c.h.b16 %v385
        %v911 = vunpack.c.l.b16 %v386
        %v912 = vunpack.c.h.b16 %v386
        %v913 = vunpack.c.l.b16 %v387
        %v914 = vunpack.c.h.b16 %v387
        %v915 = vunpack.c.l.b16 %v388
        %v916 = vunpack.c.h.b16 %v388
        %v917 = vunpack.c.l.b16 %v389
        %v918 = vunpack.c.h.b16 %v389
        %v919 = vunpack.c.l.b16 %v390
        %v920 = vunpack.c.h.b16 %v390
        %v921 = vunpack.c.l.b16 %v391
        %v922 = vunpack.c.h.b16 %v391
        %v923 = vunpack.c.l.b16 %v392
        %v924 = vunpack.c.h.b16 %v392
        %v925 = vunpack.c.l.b16 %v393
        %v926 = vunpack.c.h.b16 %v393
        %v927 = vunpack.c.l.b16 %v394
        %v928 = vunpack.c.h.b16 %v394
        %v929 = vpack.c.b16 %v677, %v673
        %v930 = vpack.c.b16 %v678, %v674
        %v931 = vpack.c.b16 %v679, %v675
        %v932 = vpack.c.b16 %v680, %v676
        %v933 = vpack.c.b16 %v685, %v681
        %v934 = vpack.c.b16 %v686, %v682
        %v935 = vpack.c.b16 %v687, %v683
        %v936 = vpack.c.b16 %v688, %v684
        %v937 = vpack.c.b16 %v693, %v689
        %v938 = vpack.c.b16 %v694, %v690
        %v939 = vpack.c.b16 %v695, %v691
        %v940 = vpack.c.b16 %v696, %v692
        %v941 = vpack.c.b16 %v701, %v697
        %v942 = vpack.c.b16 %v702, %v698
        %v943 = vpack.c.b16 %v703, %v699
        %v944 = vpack.c.b16 %v704, %v700
        %v945 = vpack.c.b16 %v709, %v705
        %v946 = vpack.c.b16 %v710, %v706
        %v947 = vpack.c.b16 %v711, %v707
        %v948 = vpack.c.b16 %v712, %v708
        %v949 = vpack.c.b16 %v717, %v713
        %v950 = vpack.c.b16 %v718, %v714
        %v951 = vpack.c.b16 %v719, %v715
        %v952 = vpack.c.b16 %v720, %v716
        %v953 = vpack.c.b16 %v725, %v721
        %v954 = vpack.c.b16 %v726, %v722
        %v955 = vpack.c.b16 %v727, %v723
        %v956 = vpack.c.b16 %v728, %v724
        %v957 = vpack.c.b16 %v733, %v729
        %v958 = vpack.c.b16 %v734, %v730
        %v959 = vpack.c.b16 %v735, %v731
        %v960 = vpack.c.b16 %v736, %v732
        %v961 = vpack.c.b16 %v741, %v737
        %v962 = vpack.c.b16 %v742, %v738
        %v963 = vpack.c.b16 %v743, %v739
        %v964 = vpack.c.b16 %v744, %v740
        %v965 = vpack.c.b16 %v749, %v745
        %v966 = vpack.c.b16 %v750, %v746
        %v967 = vpack.c.b16 %v751, %v747
        %v968 = vpack.c.b16 %v752, %v748
        %v969 = vpack.c.b16 %v757, %v753
        %v970 = vpack.c.b16 %v758, %v754
        %v971 = vpack.c.b16 %v759, %v755
        %v972 = vpack.c.b16 %v760, %v756
        %v973 = vpack.c.b16 %v765, %v761
        %v974 = vpack.c.b16 %v766, %v762
        %v975 = vpack.c.b16 %v767, %v763
        %v976 = vpack.c.b16 %v768, %v764
        %v977 = vpack.c.b16 %v773, %v769
        %v978 = vpack.c.b16 %v774, %v770
        %v979 = vpack.c.b16 %v775, %v771
        %v980 = vpack.c.b16 %v776, %v772
        %v981 = vpack.c.b16 %v781, %v777
        %v982 = vpack.c.b16 %v782, %v778
        %v983 = vpack.c.b16 %v783, %v779
        %v984 = vpack.c.b16 %v784, %v780
        %v985 = vpack.c.b16 %v789, %v785
        %v986 = vpack.c.b16 %v790, %v786
        %v987 = vpack.c.b16 %v791, %v787
        %v988 = vpack.c.b16 %v792, %v788
        %v989 = vpack.c.b16 %v797, %v793
        %v990 = vpack.c.b16 %v798, %v794
        %v991 = vpack.c.b16 %v799, %v795
        %v992 = vpack.c.b16 %v800, %v796
        %v993 = vpack.c.b16 %v805, %v801
        %v994 = vpack.c.b16 %v806, %v802
        %v995 = vpack.c.b16 %v807, %v803
        %v996 = vpack.c.b16 %v808, %v804
        %v997 = vpack.c.b16 %v813, %v809
        %v998 = vpack.c.b16 %v814, %v810
        %v999 = vpack.c.b16 %v815, %v811
        %v1000 = vpack.c.b16 %v816, %v812
        %v1001 = vpack.c.b16 %v821, %v817
        %v1002 = vpack.c.b16 %v822, %v818
        %v1003 = vpack.c.b16 %v823, %v819
        %v1004 = vpack.c.b16 %v824, %v820
        %v1005 = vpack.c.b16 %v829, %v825
        %v1006 = vpack.c.b16 %v830, %v826
        %v1007 = vpack.c.b16 %v831, %v827
        %v1008 = vpack.c.b16 %v832, %v828
        %v1009 = vpack.c.b16 %v837, %v833
        %v1010 = vpack.c.b16 %v838, %v834
        %v1011 = vpack.c.b16 %v839, %v835
        %v1012 = vpack.c.b16 %v840, %v836
        %v1013 = vpack.c.b16 %v845, %v841
        %v1014 = vpack.c.b16 %v846, %v842
        %v1015 = vpack.c.b16 %v847, %v843
        %v1016 = vpack.c.b16 %v848, %v844
        %v1017 = vpack.c.b16 %v853, %v849
        %v1018 = vpack.c.b16 %v854, %v850
        %v1019 = vpack.c.b16 %v855, %v851
        %v1020 = vpack.c.b16 %v856, %v852
        %v1021 = vpack.c.b16 %v861, %v857
        %v1022 = vpack.c.b16 %v862, %v858
        %v1023 = vpack.c.b16 %v863, %v859
        %v1024 = vpack.c.b16 %v864, %v860
        %v1025 = vpack.c.b16 %v869, %v865
        %v1026 = vpack.c.b16 %v870, %v866
        %v1027 = vpack.c.b16 %v871, %v867
        %v1028 = vpack.c.b16 %v872, %v868
        %v1029 = vpack.c.b16 %v877, %v873
        %v1030 = vpack.c.b16 %v878, %v874
        %v1031 = vpack.c.b16 %v879, %v875
        %v1032 = vpack.c.b16 %v880, %v876
        %v1033 = vpack.c.b16 %v885, %v881
        %v1034 = vpack.c.b16 %v886, %v882
        %v1035 = vpack.c.b16 %v887, %v883
        %v1036 = vpack.c.b16 %v888, %v884
        %v1037 = vpack.c.b16 %v893, %v889
        %v1038 = vpack.c.b16 %v894, %v890
        %v1039 = vpack.c.b16 %v895, %v891
        %v1040 = vpack.c.b16 %v896, %v892
        %v1041 = vpack.c.b16 %v901, %v897
        %v1042 = vpack.c.b16 %v902, %v898
        %v1043 = vpack.c.b16 %v903, %v899
        %v1044 = vpack.c.b16 %v904, %v900
        %v1045 = vpack.c.b16 %v909, %v905
        %v1046 = vpack.c.b16 %v910, %v906
        %v1047 = vpack.c.b16 %v911, %v907
        %v1048 = vpack.c.b16 %v912, %v908
        %v1049 = vpack.c.b16 %v917, %v913
        %v1050 = vpack.c.b16 %v918, %v914
        %v1051 = vpack.c.b16 %v919, %v915
        %v1052 = vpack.c.b16 %v920, %v916
        %v1053 = vpack.c.b16 %v925, %v921
        %v1054 = vpack.c.b16 %v926, %v922
        %v1055 = vpack.c.b16 %v927, %v923
        %v1056 = vpack.c.b16 %v928, %v924
        %v1313 = vunpack.c.l.b16 %v395
        %v1314 = vunpack.c.h.b16 %v395
        %v1315 = vunpack.c.l.b16 %v396
        %v1316 = vunpack.c.h.b16 %v396
        %v1317 = vunpack.c.l.b16 %v397
        %v1318 = vunpack.c.h.b16 %v397
        %v1319 = vunpack.c.l.b16 %v398
        %v1320 = vunpack.c.h.b16 %v398
        %v1321 = vunpack.c.l.b16 %v399
        %v1322 = vunpack.c.h.b16 %v399
        %v1323 = vunpack.c.l.b16 %v400
        %v1324 = vunpack.c.h.b16 %v400
        %v1325 = vunpack.c.l.b16 %v401
        %v1326 = vunpack.c.h.b16 %v401
        %v1327 = vunpack.c.l.b16 %v402
        %v1328 = vunpack.c.h.b16 %v402
        %v1329 = vunpack.c.l.b16 %v403
        %v1330 = vunpack.c.h.b16 %v403
        %v1331 = vunpack.c.l.b16 %v404
        %v1332 = vunpack.c.h.b16 %v404
        %v1333 = vunpack.c.l.b16 %v405
        %v1334 = vunpack.c.h.b16 %v405
        %v1335 = vunpack.c.l.b16 %v406
        %v1336 = vunpack.c.h.b16 %v406
        %v1337 = vunpack.c.l.b16 %v407
        %v1338 = vunpack.c.h.b16 %v407
        %v1339 = vunpack.c.l.b16 %v408
        %v1340 = vunpack.c.h.b16 %v408
        %v1341 = vunpack.c.l.b16 %v409
        %v1342 = vunpack.c.h.b16 %v409
        %v1343 = vunpack.c.l.b16 %v410
        %v1344 = vunpack.c.h.b16 %v410
        %v1345 = vunpack.c.l.b16 %v411
        %v1346 = vunpack.c.h.b16 %v411
        %v1347 = vunpack.c.l.b16 %v412
        %v1348 = vunpack.c.h.b16 %v412
        %v1349 = vunpack.c.l.b16 %v413
        %v1350 = vunpack.c.h.b16 %v413
        %v1351 = vunpack.c.l.b16 %v414
        %v1352 = vunpack.c.h.b16 %v414
        %v1353 = vunpack.c.l.b16 %v415
        %v1354 = vunpack.c.h.b16 %v415
        %v1355 = vunpack.c.l.b16 %v416
        %v1356 = vunpack.c.h.b16 %v416
        %v1357 = vunpack.c.l.b16 %v417
        %v1358 = vunpack.c.h.b16 %v417
        %v1359 = vunpack.c.l.b16 %v418
        %v1360 = vunpack.c.h.b16 %v418
        %v1361 = vunpack.c.l.b16 %v419
        %v1362 = vunpack.c.h.b16 %v419
        %v1363 = vunpack.c.l.b16 %v420
        %v1364 = vunpack.c.h.b16 %v420
        %v1365 = vunpack.c.l.b16 %v421
        %v1366 = vunpack.c.h.b16 %v421
        %v1367 = vunpack.c.l.b16 %v422
        %v1368 = vunpack.c.h.b16 %v422
        %v1369 = vunpack.c.l.b16 %v423
        %v1370 = vunpack.c.h.b16 %v423
        %v1371 = vunpack.c.l.b16 %v424
        %v1372 = vunpack.c.h.b16 %v424
        %v1373 = vunpack.c.l.b16 %v425
        %v1374 = vunpack.c.h.b16 %v425
        %v1375 = vunpack.c.l.b16 %v426
        %v1376 = vunpack.c.h.b16 %v426
        %v1377 = vunpack.c.l.b16 %v427
        %v1378 = vunpack.c.h.b16 %v427
        %v1379 = vunpack.c.l.b16 %v428
        %v1380 = vunpack.c.h.b16 %v428
        %v1381 = vunpack.c.l.b16 %v429
        %v1382 = vunpack.c.h.b16 %v429
        %v1383 = vunpack.c.l.b16 %v430
        %v1384 = vunpack.c.h.b16 %v430
        %v1385 = vunpack.c.l.b16 %v431
        %v1386 = vunpack.c.h.b16 %v431
        %v1387 = vunpack.c.l.b16 %v432
        %v1388 = vunpack.c.h.b16 %v432
        %v1389 = vunpack.c.l.b16 %v433
        %v1390 = vunpack.c.h.b16 %v433
        %v1391 = vunpack.c.l.b16 %v434
        %v1392 = vunpack.c.h.b16 %v434
        %v1393 = vunpack.c.l.b16 %v435
        %v1394 = vunpack.c.h.b16 %v435
        %v1395 = vunpack.c.l.b16 %v436
        %v1396 = vunpack.c.h.b16 %v436
        %v1397 = vunpack.c.l.b16 %v437
        %v1398 = vunpack.c.h.b16 %v437
        %v1399 = vunpack.c.l.b16 %v438
        %v1400 = vunpack.c.h.b16 %v438
        %v1401 = vunpack.c.l.b16 %v439
        %v1402 = vunpack.c.h.b16 %v439
        %v1403 = vunpack.c.l.b16 %v440
        %v1404 = vunpack.c.h.b16 %v440
        %v1405 = vunpack.c.l.b16 %v441
        %v1406 = vunpack.c.h.b16 %v441
        %v1407 = vunpack.c.l.b16 %v442
        %v1408 = vunpack.c.h.b16 %v442
        %v1409 = vunpack.c.l.b16 %v443
        %v1410 = vunpack.c.h.b16 %v443
        %v1411 = vunpack.c.l.b16 %v444
        %v1412 = vunpack.c.h.b16 %v444
        %v1413 = vunpack.c.l.b16 %v445
        %v1414 = vunpack.c.h.b16 %v445
        %v1415 = vunpack.c.l.b16 %v446
        %v1416 = vunpack.c.h.b16 %v446
        %v1417 = vunpack.c.l.b16 %v447
        %v1418 = vunpack.c.h.b16 %v447
        %v1419 = vunpack.c.l.b16 %v448
        %v1420 = vunpack.c.h.b16 %v448
        %v1421 = vunpack.c.l.b16 %v449
        %v1422 = vunpack.c.h.b16 %v449
        %v1423 = vunpack.c.l.b16 %v450
        %v1424 = vunpack.c.h.b16 %v450
        %v1425 = vunpack.c.l.b16 %v451
        %v1426 = vunpack.c.h.b16 %v451
        %v1427 = vunpack.c.l.b16 %v452
        %v1428 = vunpack.c.h.b16 %v452
        %v1429 = vunpack.c.l.b16 %v453
        %v1430 = vunpack.c.h.b16 %v453
        %v1431 = vunpack.c.l.b16 %v454
        %v1432 = vunpack.c.h.b16 %v454
        %v1433 = vunpack.c.l.b16 %v455
        %v1434 = vunpack.c.h.b16 %v455
        %v1435 = vunpack.c.l.b16 %v456
        %v1436 = vunpack.c.h.b16 %v456
        %v1437 = vunpack.c.l.b16 %v457
        %v1438 = vunpack.c.h.b16 %v457
        %v1439 = vunpack.c.l.b16 %v458
        %v1440 = vunpack.c.h.b16 %v458
        %v1441 = vunpack.c.l.b16 %v459
        %v1442 = vunpack.c.h.b16 %v459
        %v1443 = vunpack.c.l.b16 %v460
        %v1444 = vunpack.c.h.b16 %v460
        %v1445 = vunpack.c.l.b16 %v461
        %v1446 = vunpack.c.h.b16 %v461
        %v1447 = vunpack.c.l.b16 %v462
        %v1448 = vunpack.c.h.b16 %v462
        %v1449 = vunpack.c.l.b16 %v463
        %v1450 = vunpack.c.h.b16 %v463
        %v1451 = vunpack.c.l.b16 %v464
        %v1452 = vunpack.c.h.b16 %v464
        %v1453 = vunpack.c.l.b16 %v465
        %v1454 = vunpack.c.h.b16 %v465
        %v1455 = vunpack.c.l.b16 %v466
        %v1456 = vunpack.c.h.b16 %v466
        %v1457 = vunpack.c.l.b16 %v467
        %v1458 = vunpack.c.h.b16 %v467
        %v1459 = vunpack.c.l.b16 %v468
        %v1460 = vunpack.c.h.b16 %v468
        %v1461 = vunpack.c.l.b16 %v469
        %v1462 = vunpack.c.h.b16 %v469
        %v1463 = vunpack.c.l.b16 %v470
        %v1464 = vunpack.c.h.b16 %v470
        %v1465 = vunpack.c.l.b16 %v471
        %v1466 = vunpack.c.h.b16 %v471
        %v1467 = vunpack.c.l.b16 %v472
        %v1468 = vunpack.c.h.b16 %v472
        %v1469 = vunpack.c.l.b16 %v473
        %v1470 = vunpack.c.h.b16 %v473
        %v1471 = vunpack.c.l.b16 %v474
        %v1472 = vunpack.c.h.b16 %v474
        %v1473 = vunpack.c.l.b16 %v475
        %v1474 = vunpack.c.h.b16 %v475
        %v1475 = vunpack.c.l.b16 %v476
        %v1476 = vunpack.c.h.b16 %v476
        %v1477 = vunpack.c.l.b16 %v477
        %v1478 = vunpack.c.h.b16 %v477
        %v1479 = vunpack.c.l.b16 %v478
        %v1480 = vunpack.c.h.b16 %v478
        %v1481 = vunpack.c.l.b16 %v479
        %v1482 = vunpack.c.h.b16 %v479
        %v1483 = vunpack.c.l.b16 %v480
        %v1484 = vunpack.c.h.b16 %v480
        %v1485 = vunpack.c.l.b16 %v481
        %v1486 = vunpack.c.h.b16 %v481
        %v1487 = vunpack.c.l.b16 %v482
        %v1488 = vunpack.c.h.b16 %v482
        %v1489 = vunpack.c.l.b16 %v483
        %v1490 = vunpack.c.h.b16 %v483
        %v1491 = vunpack.c.l.b16 %v484
        %v1492 = vunpack.c.h.b16 %v484
        %v1493 = vunpack.c.l.b16 %v485
        %v1494 = vunpack.c.h.b16 %v485
        %v1495 = vunpack.c.l.b16 %v486
        %v1496 = vunpack.c.h.b16 %v486
        %v1497 = vunpack.c.l.b16 %v487
        %v1498 = vunpack.c.h.b16 %v487
        %v1499 = vunpack.c.l.b16 %v488
        %v1500 = vunpack.c.h.b16 %v488
        %v1501 = vunpack.c.l.b16 %v489
        %v1502 = vunpack.c.h.b16 %v489
        %v1503 = vunpack.c.l.b16 %v490
        %v1504 = vunpack.c.h.b16 %v490
        %v1505 = vunpack.c.l.b16 %v491
        %v1506 = vunpack.c.h.b16 %v491
        %v1507 = vunpack.c.l.b16 %v492
        %v1508 = vunpack.c.h.b16 %v492
        %v1509 = vunpack.c.l.b16 %v493
        %v1510 = vunpack.c.h.b16 %v493
        %v1511 = vunpack.c.l.b16 %v494
        %v1512 = vunpack.c.h.b16 %v494
        %v1513 = vunpack.c.l.b16 %v495
        %v1514 = vunpack.c.h.b16 %v495
        %v1515 = vunpack.c.l.b16 %v496
        %v1516 = vunpack.c.h.b16 %v496
        %v1517 = vunpack.c.l.b16 %v497
        %v1518 = vunpack.c.h.b16 %v497
        %v1519 = vunpack.c.l.b16 %v498
        %v1520 = vunpack.c.h.b16 %v498
        %v1521 = vunpack.c.l.b16 %v499
        %v1522 = vunpack.c.h.b16 %v499
        %v1523 = vunpack.c.l.b16 %v500
        %v1524 = vunpack.c.h.b16 %v500
        %v1525 = vunpack.c.l.b16 %v501
        %v1526 = vunpack.c.h.b16 %v501
        %v1527 = vunpack.c.l.b16 %v502
        %v1528 = vunpack.c.h.b16 %v502
        %v1529 = vunpack.c.l.b16 %v503
        %v1530 = vunpack.c.h.b16 %v503
        %v1531 = vunpack.c.l.b16 %v504
        %v1532 = vunpack.c.h.b16 %v504
        %v1533 = vunpack.c.l.b16 %v505
        %v1534 = vunpack.c.h.b16 %v505
        %v1535 = vunpack.c.l.b16 %v506
        %v1536 = vunpack.c.h.b16 %v506
        %v1537 = vunpack.c.l.b16 %v507
        %v1538 = vunpack.c.h.b16 %v507
        %v1539 = vunpack.c.l.b16 %v508
        %v1540 = vunpack.c.h.b16 %v508
        %v1541 = vunpack.c.l.b16 %v509
        %v1542 = vunpack.c.h.b16 %v509
        %v1543 = vunpack.c.l.b16 %v510
        %v1544 = vunpack.c.h.b16 %v510
        %v1545 = vunpack.c.l.b16 %v511
        %v1546 = vunpack.c.h.b16 %v511
        %v1547 = vunpack.c.l.b16 %v512
        %v1548 = vunpack.c.h.b16 %v512
        %v1549 = vunpack.c.l.b16 %v513
        %v1550 = vunpack.c.h.b16 %v513
        %v1551 = vunpack.c.l.b16 %v514
        %v1552 = vunpack.c.h.b16 %v514
        %v1553 = vunpack.c.l.b16 %v515
        %v1554 = vunpack.c.h.b16 %v515
        %v1555 = vunpack.c.l.b16 %v516
        %v1556 = vunpack.c.h.b16 %v516
        %v1557 = vunpack.c.l.b16 %v517
        %v1558 = vunpack.c.h.b16 %v517
        %v1559 = vunpack.c.l.b16 %v518
        %v1560 = vunpack.c.h.b16 %v518
        %v1561 = vunpack.c.l.b16 %v519
        %v1562 = vunpack.c.h.b16 %v519
        %v1563 = vunpack.c.l.b16 %v520
        %v1564 = vunpack.c.h.b16 %v520
        %v1565 = vunpack.c.l.b16 %v521
        %v1566 = vunpack.c.h.b16 %v521
        %v1567 = vunpack.c.l.b16 %v522
        %v1568 = vunpack.c.h.b16 %v522
        %v1569 = vpack.c.b16 %v1317, %v1313
        %v1570 = vpack.c.b16 %v1318, %v1314
        %v1571 = vpack.c.b16 %v1319, %v1315
        %v1572 = vpack.c.b16 %v1320, %v1316
        %v1573 = vpack.c.b16 %v1325, %v1321
        %v1574 = vpack.c.b16 %v1326, %v1322
        %v1575 = vpack.c.b16 %v1327, %v1323
        %v1576 = vpack.c.b16 %v1328, %v1324
        %v1577 = vpack.c.b16 %v1333, %v1329
        %v1578 = vpack.c.b16 %v1334, %v1330
        %v1579 = vpack.c.b16 %v1335, %v1331
        %v1580 = vpack.c.b16 %v1336, %v1332
        %v1581 = vpack.c.b16 %v1341, %v1337
        %v1582 = vpack.c.b16 %v1342, %v1338
        %v1583 = vpack.c.b16 %v1343, %v1339
        %v1584 = vpack.c.b16 %v1344, %v1340
        %v1585 = vpack.c.b16 %v1349, %v1345
        %v1586 = vpack.c.b16 %v1350, %v1346
        %v1587 = vpack.c.b16 %v1351, %v1347
        %v1588 = vpack.c.b16 %v1352, %v1348
        %v1589 = vpack.c.b16 %v1357, %v1353
        %v1590 = vpack.c.b16 %v1358, %v1354
        %v1591 = vpack.c.b16 %v1359, %v1355
        %v1592 = vpack.c.b16 %v1360, %v1356
        %v1593 = vpack.c.b16 %v1365, %v1361
        %v1594 = vpack.c.b16 %v1366, %v1362
        %v1595 = vpack.c.b16 %v1367, %v1363
        %v1596 = vpack.c.b16 %v1368, %v1364
        %v1597 = vpack.c.b16 %v1373, %v1369
        %v1598 = vpack.c.b16 %v1374, %v1370
        %v1599 = vpack.c.b16 %v1375, %v1371
        %v1600 = vpack.c.b16 %v1376, %v1372
        %v1601 = vpack.c.b16 %v1381, %v1377
        %v1602 = vpack.c.b16 %v1382, %v1378
        %v1603 = vpack.c.b16 %v1383, %v1379
        %v1604 = vpack.c.b16 %v1384, %v1380
        %v1605 = vpack.c.b16 %v1389, %v1385
        %v1606 = vpack.c.b16 %v1390, %v1386
        %v1607 = vpack.c.b16 %v1391, %v1387
        %v1608 = vpack.c.b16 %v1392, %v1388
        %v1609 = vpack.c.b16 %v1397, %v1393
        %v1610 = vpack.c.b16 %v1398, %v1394
        %v1611 = vpack.c.b16 %v1399, %v1395
        %v1612 = vpack.c.b16 %v1400, %v1396
        %v1613 = vpack.c.b16 %v1405, %v1401
        %v1614 = vpack.c.b16 %v1406, %v1402
        %v1615 = vpack.c.b16 %v1407, %v1403
        %v1616 = vpack.c.b16 %v1408, %v1404
        %v1617 = vpack.c.b16 %v1413, %v1409
        %v1618 = vpack.c.b16 %v1414, %v1410
        %v1619 = vpack.c.b16 %v1415, %v1411
        %v1620 = vpack.c.b16 %v1416, %v1412
        %v1621 = vpack.c.b16 %v1421, %v1417
        %v1622 = vpack.c.b16 %v1422, %v1418
        %v1623 = vpack.c.b16 %v1423, %v1419
        %v1624 = vpack.c.b16 %v1424, %v1420
        %v1625 = vpack.c.b16 %v1429, %v1425
        %v1626 = vpack.c.b16 %v1430, %v1426
        %v1627 = vpack.c.b16 %v1431, %v1427
        %v1628 = vpack.c.b16 %v1432, %v1428
        %v1629 = vpack.c.b16 %v1437, %v1433
        %v1630 = vpack.c.b16 %v1438, %v1434
        %v1631 = vpack.c.b16 %v1439, %v1435
        %v1632 = vpack.c.b16 %v1440, %v1436
        %v1633 = vpack.c.b16 %v1445, %v1441
        %v1634 = vpack.c.b16 %v1446, %v1442
        %v1635 = vpack.c.b16 %v1447, %v1443
        %v1636 = vpack.c.b16 %v1448, %v1444
        %v1637 = vpack.c.b16 %v1453, %v1449
        %v1638 = vpack.c.b16 %v1454, %v1450
        %v1639 = vpack.c.b16 %v1455, %v1451
        %v1640 = vpack.c.b16 %v1456, %v1452
        %v1641 = vpack.c.b16 %v1461, %v1457
        %v1642 = vpack.c.b16 %v1462, %v1458
        %v1643 = vpack.c.b16 %v1463, %v1459
        %v1644 = vpack.c.b16 %v1464, %v1460
        %v1645 = vpack.c.b16 %v1469, %v1465
        %v1646 = vpack.c.b16 %v1470, %v1466
        %v1647 = vpack.c.b16 %v1471, %v1467
        %v1648 = vpack.c.b16 %v1472, %v1468
        %v1649 = vpack.c.b16 %v1477, %v1473
        %v1650 = vpack.c.b16 %v1478, %v1474
        %v1651 = vpack.c.b16 %v1479, %v1475
        %v1652 = vpack.c.b16 %v1480, %v1476
        %v1653 = vpack.c.b16 %v1485, %v1481
        %v1654 = vpack.c.b16 %v1486, %v1482
        %v1655 = vpack.c.b16 %v1487, %v1483
        %v1656 = vpack.c.b16 %v1488, %v1484
        %v1657 = vpack.c.b16 %v1493, %v1489
        %v1658 = vpack.c.b16 %v1494, %v1490
        %v1659 = vpack.c.b16 %v1495, %v1491
        %v1660 = vpack.c.b16 %v1496, %v1492
        %v1661 = vpack.c.b16 %v1501, %v1497
        %v1662 = vpack.c.b16 %v1502, %v1498
        %v1663 = vpack.c.b16 %v1503, %v1499
        %v1664 = vpack.c.b16 %v1504, %v1500
        %v1665 = vpack.c.b16 %v1509, %v1505
        %v1666 = vpack.c.b16 %v1510, %v1506
        %v1667 = vpack.c.b16 %v1511, %v1507
        %v1668 = vpack.c.b16 %v1512, %v1508
        %v1669 = vpack.c.b16 %v1517, %v1513
        %v1670 = vpack.c.b16 %v1518, %v1514
        %v1671 = vpack.c.b16 %v1519, %v1515
        %v1672 = vpack.c.b16 %v1520, %v1516
        %v1673 = vpack.c.b16 %v1525, %v1521
        %v1674 = vpack.c.b16 %v1526, %v1522
        %v1675 = vpack.c.b16 %v1527, %v1523
        %v1676 = vpack.c.b16 %v1528, %v1524
        %v1677 = vpack.c.b16 %v1533, %v1529
        %v1678 = vpack.c.b16 %v1534, %v1530
        %v1679 = vpack.c.b16 %v1535, %v1531
        %v1680 = vpack.c.b16 %v1536, %v1532
        %v1681 = vpack.c.b16 %v1541, %v1537
        %v1682 = vpack.c.b16 %v1542, %v1538
        %v1683 = vpack.c.b16 %v1543, %v1539
        %v1684 = vpack.c.b16 %v1544, %v1540
        %v1685 = vpack.c.b16 %v1549, %v1545
        %v1686 = vpack.c.b16 %v1550, %v1546
        %v1687 = vpack.c.b16 %v1551, %v1547
        %v1688 = vpack.c.b16 %v1552, %v1548
        %v1689 = vpack.c.b16 %v1557, %v1553
        %v1690 = vpack.c.b16 %v1558, %v1554
        %v1691 = vpack.c.b16 %v1559, %v1555
        %v1692 = vpack.c.b16 %v1560, %v1556
        %v1693 = vpack.c.b16 %v1565, %v1561
        %v1694 = vpack.c.b16 %v1566, %v1562
        %v1695 = vpack.c.b16 %v1567, %v1563
        %v1696 = vpack.c.b16 %v1568, %v1564
        %1825 = vmatprep.subr.bf16.mxu0 %v1570
        %1826 = vmatpush1.bf16.msra.mxu0 %v1569
        %1827 = vmatprep.subr.bf16.mxu0 %v1574
        %1828 = vmatpush1.bf16.msra.mxu0 %v1573
        %1829 = vmatprep.subr.bf16.mxu0 %v1578
        %1830 = vmatpush1.bf16.msra.mxu0 %v1577
        %1831 = vmatprep.subr.bf16.mxu0 %v1582
        %1832 = vmatpush1.bf16.msra.mxu0 %v1581
        %1833 = vmatprep.subr.bf16.mxu0 %v1586
        %1834 = vmatpush1.bf16.msra.mxu0 %v1585
        %1835 = vmatprep.subr.bf16.mxu0 %v1590
        %1836 = vmatpush1.bf16.msra.mxu0 %v1589
        %1837 = vmatprep.subr.bf16.mxu0 %v1594
        %1838 = vmatpush1.bf16.msra.mxu0 %v1593
        %1839 = vmatprep.subr.bf16.mxu0 %v1598
        %1840 = vmatpush1.bf16.msra.mxu0 %v1597
        %1841 = vmatprep.subr.bf16.mxu0 %v1602
        %1842 = vmatpush1.bf16.msra.mxu0 %v1601
        %1843 = vmatprep.subr.bf16.mxu0 %v1606
        %1844 = vmatpush1.bf16.msra.mxu0 %v1605
        %1845 = vmatprep.subr.bf16.mxu0 %v1610
        %1846 = vmatpush1.bf16.msra.mxu0 %v1609
        %1847 = vmatprep.subr.bf16.mxu0 %v1614
        %1848 = vmatpush1.bf16.msra.mxu0 %v1613
        %1849 = vmatprep.subr.bf16.mxu0 %v1618
        %1850 = vmatpush1.bf16.msra.mxu0 %v1617
        %1851 = vmatprep.subr.bf16.mxu0 %v1622
        %1852 = vmatpush1.bf16.msra.mxu0 %v1621
        %1853 = vmatprep.subr.bf16.mxu0 %v1626
        %1854 = vmatpush1.bf16.msra.mxu0 %v1625
        %1855 = vmatprep.subr.bf16.mxu0 %v1630
        %1856 = vmatpush1.bf16.msra.mxu0 %v1629
        %1857 = vmatprep.mubr.bf16.mxu0 %v930
        %1858 = vmatmul.mubr.bf16.gmra.mrb[0].mxu0 %v929
        %v1859 = vpop.f32.mrb[0].mxu0
        %v1860 = vadd.f32 %v528, %v1859
        %v1861 = vpop.f32.mrb[0].mxu0
        %v1862 = vadd.f32 %v532, %v1861
        %v1863 = vpop.f32.mrb[0].mxu0
        %v1864 = vadd.f32 %v528, %v1863
        %v1865 = vpop.f32.mrb[0].mxu0
        %v1866 = vadd.f32 %v532, %v1865
        %1867 = vmatprep.mubr.bf16.mxu0 %v934
        %1868 = vmatmul.mubr.bf16.gmra.mrb[0].mxu0 %v933
        %v1869 = vpop.f32.mrb[0].mxu0
        %v1870 = vadd.f32 %v528, %v1869
        %v1871 = vpop.f32.mrb[0].mxu0
        %v1872 = vadd.f32 %v532, %v1871
        %v1873 = vpop.f32.mrb[0].mxu0
        %v1874 = vadd.f32 %v528, %v1873
        %v1875 = vpop.f32.mrb[0].mxu0
        %v1876 = vadd.f32 %v532, %v1875
        %1877 = vmatprep.mubr.bf16.mxu0 %v938
        %1878 = vmatmul.mubr.bf16.gmra.mrb[0].mxu0 %v937
        %v1879 = vpop.f32.mrb[0].mxu0
        %v1880 = vadd.f32 %v528, %v1879
        %v1881 = vpop.f32.mrb[0].mxu0
        %v1882 = vadd.f32 %v532, %v1881
        %v1883 = vpop.f32.mrb[0].mxu0
        %v1884 = vadd.f32 %v528, %v1883
        %v1885 = vpop.f32.mrb[0].mxu0
        %v1886 = vadd.f32 %v532, %v1885
        %1887 = vmatprep.mubr.bf16.mxu0 %v942
        %1888 = vmatmul.mubr.bf16.gmra.mrb[0].mxu0 %v941
        %v1889 = vpop.f32.mrb[0].mxu0
        %v1890 = vadd.f32 %v528, %v1889
        %v1891 = vpop.f32.mrb[0].mxu0
        %v1892 = vadd.f32 %v532, %v1891
        %v1893 = vpop.f32.mrb[0].mxu0
        %v1894 = vadd.f32 %v528, %v1893
        %v1895 = vpop.f32.mrb[0].mxu0
        %v1896 = vadd.f32 %v532, %v1895
        %1897 = vmatprep.mubr.bf16.mxu0 %v946
        %1898 = vmatmul.mubr.bf16.gmra.mrb[0].mxu0 %v945
        %v1899 = vpop.f32.mrb[0].mxu0
        %v1900 = vadd.f32 %v528, %v1899
        %v1901 = vpop.f32.mrb[0].mxu0
        %v1902 = vadd.f32 %v532, %v1901
        %v1903 = vpop.f32.mrb[0].mxu0
        %v1904 = vadd.f32 %v528, %v1903
        %v1905 = vpop.f32.mrb[0].mxu0
        %v1906 = vadd.f32 %v532, %v1905
        %1907 = vmatprep.mubr.bf16.mxu0 %v950
        %1908 = vmatmul.mubr.bf16.gmra.mrb[0].mxu0 %v949
        %v1909 = vpop.f32.mrb[0].mxu0
        %v1910 = vadd.f32 %v528, %v1909
        %v1911 = vpop.f32.mrb[0].mxu0
        %v1912 = vadd.f32 %v532, %v1911
        %v1913 = vpop.f32.mrb[0].mxu0
        %v1914 = vadd.f32 %v528, %v1913
        %v1915 = vpop.f32.mrb[0].mxu0
        %v1916 = vadd.f32 %v532, %v1915
        %1917 = vmatprep.mubr.bf16.mxu0 %v954
        %1918 = vmatmul.mubr.bf16.gmra.mrb[0].mxu0 %v953
        %v1919 = vpop.f32.mrb[0].mxu0
        %v1920 = vadd.f32 %v528, %v1919
        %v1921 = vpop.f32.mrb[0].mxu0
        %v1922 = vadd.f32 %v532, %v1921
        %v1923 = vpop.f32.mrb[0].mxu0
        %v1924 = vadd.f32 %v528, %v1923
        %v1925 = vpop.f32.mrb[0].mxu0
        %v1926 = vadd.f32 %v532, %v1925
        %1927 = vmatprep.mubr.bf16.mxu0 %v958
        %1928 = vmatmul.mubr.bf16.gmra.mrb[0].mxu0 %v957
        %v1929 = vpop.f32.mrb[0].mxu0
        %v1930 = vadd.f32 %v528, %v1929
        %v1931 = vpop.f32.mrb[0].mxu0
        %v1932 = vadd.f32 %v532, %v1931
        %v1933 = vpop.f32.mrb[0].mxu0
        %v1934 = vadd.f32 %v528, %v1933
        %v1935 = vpop.f32.mrb[0].mxu0
        %v1936 = vadd.f32 %v532, %v1935
        %1937 = vmatprep.mubr.bf16.mxu0 %v962
        %1938 = vmatmul.mubr.bf16.gmra.mrb[0].mxu0 %v961
        %v1939 = vpop.f32.mrb[0].mxu0
        %v1940 = vadd.f32 %v528, %v1939
        %v1941 = vpop.f32.mrb[0].mxu0
        %v1942 = vadd.f32 %v532, %v1941
        %v1943 = vpop.f32.mrb[0].mxu0
        %v1944 = vadd.f32 %v528, %v1943
        %v1945 = vpop.f32.mrb[0].mxu0
        %v1946 = vadd.f32 %v532, %v1945
        %1947 = vmatprep.mubr.bf16.mxu0 %v966
        %1948 = vmatmul.mubr.bf16.gmra.mrb[0].mxu0 %v965
        %v1949 = vpop.f32.mrb[0].mxu0
        %v1950 = vadd.f32 %v528, %v1949
        %v1951 = vpop.f32.mrb[0].mxu0
        %v1952 = vadd.f32 %v532, %v1951
        %v1953 = vpop.f32.mrb[0].mxu0
        %v1954 = vadd.f32 %v528, %v1953
        %v1955 = vpop.f32.mrb[0].mxu0
        %v1956 = vadd.f32 %v532, %v1955
        %1957 = vmatprep.mubr.bf16.mxu0 %v970
        %1958 = vmatmul.mubr.bf16.gmra.mrb[0].mxu0 %v969
        %v1959 = vpop.f32.mrb[0].mxu0
        %v1960 = vadd.f32 %v528, %v1959
        %v1961 = vpop.f32.mrb[0].mxu0
        %v1962 = vadd.f32 %v532, %v1961
        %v1963 = vpop.f32.mrb[0].mxu0
        %v1964 = vadd.f32 %v528, %v1963
        %v1965 = vpop.f32.mrb[0].mxu0
        %v1966 = vadd.f32 %v532, %v1965
        %1967 = vmatprep.mubr.bf16.mxu0 %v974
        %1968 = vmatmul.mubr.bf16.gmra.mrb[0].mxu0 %v973
        %v1969 = vpop.f32.mrb[0].mxu0
        %v1970 = vadd.f32 %v528, %v1969
        %v1971 = vpop.f32.mrb[0].mxu0
        %v1972 = vadd.f32 %v532, %v1971
        %v1973 = vpop.f32.mrb[0].mxu0
        %v1974 = vadd.f32 %v528, %v1973
        %v1975 = vpop.f32.mrb[0].mxu0
        %v1976 = vadd.f32 %v532, %v1975
        %1977 = vmatprep.mubr.bf16.mxu0 %v978
        %1978 = vmatmul.mubr.bf16.gmra.mrb[0].mxu0 %v977
        %v1979 = vpop.f32.mrb[0].mxu0
        %v1980 = vadd.f32 %v528, %v1979
        %v1981 = vpop.f32.mrb[0].mxu0
        %v1982 = vadd.f32 %v532, %v1981
        %v1983 = vpop.f32.mrb[0].mxu0
        %v1984 = vadd.f32 %v528, %v1983
        %v1985 = vpop.f32.mrb[0].mxu0
        %v1986 = vadd.f32 %v532, %v1985
        %1987 = vmatprep.mubr.bf16.mxu0 %v982
        %1988 = vmatmul.mubr.bf16.gmra.mrb[0].mxu0 %v981
        %v1989 = vpop.f32.mrb[0].mxu0
        %v1990 = vadd.f32 %v528, %v1989
        %v1991 = vpop.f32.mrb[0].mxu0
        %v1992 = vadd.f32 %v532, %v1991
        %v1993 = vpop.f32.mrb[0].mxu0
        %v1994 = vadd.f32 %v528, %v1993
        %v1995 = vpop.f32.mrb[0].mxu0
        %v1996 = vadd.f32 %v532, %v1995
        %1997 = vmatprep.mubr.bf16.mxu0 %v986
        %1998 = vmatmul.mubr.bf16.gmra.mrb[0].mxu0 %v985
        %v1999 = vpop.f32.mrb[0].mxu0
        %v2000 = vadd.f32 %v528, %v1999
        %v2001 = vpop.f32.mrb[0].mxu0
        %v2002 = vadd.f32 %v532, %v2001
        %v2003 = vpop.f32.mrb[0].mxu0
        %v2004 = vadd.f32 %v528, %v2003
        %v2005 = vpop.f32.mrb[0].mxu0
        %v2006 = vadd.f32 %v532, %v2005
        %2007 = vmatprep.mubr.bf16.mxu0 %v990
        %2008 = vmatmul.mubr.bf16.gmra.mrb[0].mxu0 %v989
        %v2009 = vpop.f32.mrb[0].mxu0
        %v2010 = vadd.f32 %v528, %v2009
        %v2011 = vpop.f32.mrb[0].mxu0
        %v2012 = vadd.f32 %v532, %v2011
        %v2013 = vpop.f32.mrb[0].mxu0
        %v2014 = vadd.f32 %v528, %v2013
        %v2015 = vpop.f32.mrb[0].mxu0
        %v2016 = vadd.f32 %v532, %v2015
        %2017 = vmatprep.mubr.bf16.mxu0 %v994
        %2018 = vmatmul.mubr.bf16.gmra.mrb[0].mxu0 %v993
        %v2019 = vpop.f32.mrb[0].mxu0
        %v2020 = vadd.f32 %v528, %v2019
        %v2021 = vpop.f32.mrb[0].mxu0
        %v2022 = vadd.f32 %v532, %v2021
        %v2023 = vpop.f32.mrb[0].mxu0
        %v2024 = vadd.f32 %v528, %v2023
        %v2025 = vpop.f32.mrb[0].mxu0
        %v2026 = vadd.f32 %v532, %v2025
        %2027 = vmatprep.mubr.bf16.mxu0 %v998
        %2028 = vmatmul.mubr.bf16.gmra.mrb[0].mxu0 %v997
        %v2029 = vpop.f32.mrb[0].mxu0
        %v2030 = vadd.f32 %v528, %v2029
        %v2031 = vpop.f32.mrb[0].mxu0
        %v2032 = vadd.f32 %v532, %v2031
        %v2033 = vpop.f32.mrb[0].mxu0
        %v2034 = vadd.f32 %v528, %v2033
        %v2035 = vpop.f32.mrb[0].mxu0
        %v2036 = vadd.f32 %v532, %v2035
        %2037 = vmatprep.mubr.bf16.mxu0 %v1002
        %2038 = vmatmul.mubr.bf16.gmra.mrb[0].mxu0 %v1001
        %v2039 = vpop.f32.mrb[0].mxu0
        %v2040 = vadd.f32 %v528, %v2039
        %v2041 = vpop.f32.mrb[0].mxu0
        %v2042 = vadd.f32 %v532, %v2041
        %v2043 = vpop.f32.mrb[0].mxu0
        %v2044 = vadd.f32 %v528, %v2043
        %v2045 = vpop.f32.mrb[0].mxu0
        %v2046 = vadd.f32 %v532, %v2045
        %2047 = vmatprep.mubr.bf16.mxu0 %v1006
        %2048 = vmatmul.mubr.bf16.gmra.mrb[0].mxu0 %v1005
        %v2049 = vpop.f32.mrb[0].mxu0
        %v2050 = vadd.f32 %v528, %v2049
        %v2051 = vpop.f32.mrb[0].mxu0
        %v2052 = vadd.f32 %v532, %v2051
        %v2053 = vpop.f32.mrb[0].mxu0
        %v2054 = vadd.f32 %v528, %v2053
        %v2055 = vpop.f32.mrb[0].mxu0
        %v2056 = vadd.f32 %v532, %v2055
        %2057 = vmatprep.mubr.bf16.mxu0 %v1010
        %2058 = vmatmul.mubr.bf16.gmra.mrb[0].mxu0 %v1009
        %v2059 = vpop.f32.mrb[0].mxu0
        %v2060 = vadd.f32 %v528, %v2059
        %v2061 = vpop.f32.mrb[0].mxu0
        %v2062 = vadd.f32 %v532, %v2061
        %v2063 = vpop.f32.mrb[0].mxu0
        %v2064 = vadd.f32 %v528, %v2063
        %v2065 = vpop.f32.mrb[0].mxu0
        %v2066 = vadd.f32 %v532, %v2065
        %2067 = vmatprep.mubr.bf16.mxu0 %v1014
        %2068 = vmatmul.mubr.bf16.gmra.mrb[0].mxu0 %v1013
        %v2069 = vpop.f32.mrb[0].mxu0
        %v2070 = vadd.f32 %v528, %v2069
        %v2071 = vpop.f32.mrb[0].mxu0
        %v2072 = vadd.f32 %v532, %v2071
        %v2073 = vpop.f32.mrb[0].mxu0
        %v2074 = vadd.f32 %v528, %v2073
        %v2075 = vpop.f32.mrb[0].mxu0
        %v2076 = vadd.f32 %v532, %v2075
        %2077 = vmatprep.mubr.bf16.mxu0 %v1018
        %2078 = vmatmul.mubr.bf16.gmra.mrb[0].mxu0 %v1017
        %v2079 = vpop.f32.mrb[0].mxu0
        %v2080 = vadd.f32 %v528, %v2079
        %v2081 = vpop.f32.mrb[0].mxu0
        %v2082 = vadd.f32 %v532, %v2081
        %v2083 = vpop.f32.mrb[0].mxu0
        %v2084 = vadd.f32 %v528, %v2083
        %v2085 = vpop.f32.mrb[0].mxu0
        %v2086 = vadd.f32 %v532, %v2085
        %2087 = vmatprep.mubr.bf16.mxu0 %v1022
        %2088 = vmatmul.mubr.bf16.gmra.mrb[0].mxu0 %v1021
        %v2089 = vpop.f32.mrb[0].mxu0
        %v2090 = vadd.f32 %v528, %v2089
        %v2091 = vpop.f32.mrb[0].mxu0
        %v2092 = vadd.f32 %v532, %v2091
        %v2093 = vpop.f32.mrb[0].mxu0
        %v2094 = vadd.f32 %v528, %v2093
        %v2095 = vpop.f32.mrb[0].mxu0
        %v2096 = vadd.f32 %v532, %v2095
        %2097 = vmatprep.mubr.bf16.mxu0 %v1026
        %2098 = vmatmul.mubr.bf16.gmra.mrb[0].mxu0 %v1025
        %v2099 = vpop.f32.mrb[0].mxu0
        %v2100 = vadd.f32 %v528, %v2099
        %v2101 = vpop.f32.mrb[0].mxu0
        %v2102 = vadd.f32 %v532, %v2101
        %v2103 = vpop.f32.mrb[0].mxu0
        %v2104 = vadd.f32 %v528, %v2103
        %v2105 = vpop.f32.mrb[0].mxu0
        %v2106 = vadd.f32 %v532, %v2105
        %2107 = vmatprep.mubr.bf16.mxu0 %v1030
        %2108 = vmatmul.mubr.bf16.gmra.mrb[0].mxu0 %v1029
        %v2109 = vpop.f32.mrb[0].mxu0
        %v2110 = vadd.f32 %v528, %v2109
        %v2111 = vpop.f32.mrb[0].mxu0
        %v2112 = vadd.f32 %v532, %v2111
        %v2113 = vpop.f32.mrb[0].mxu0
        %v2114 = vadd.f32 %v528, %v2113
        %v2115 = vpop.f32.mrb[0].mxu0
        %v2116 = vadd.f32 %v532, %v2115
        %2117 = vmatprep.mubr.bf16.mxu0 %v1034
        %2118 = vmatmul.mubr.bf16.gmra.mrb[0].mxu0 %v1033
        %v2119 = vpop.f32.mrb[0].mxu0
        %v2120 = vadd.f32 %v528, %v2119
        %v2121 = vpop.f32.mrb[0].mxu0
        %v2122 = vadd.f32 %v532, %v2121
        %v2123 = vpop.f32.mrb[0].mxu0
        %v2124 = vadd.f32 %v528, %v2123
        %v2125 = vpop.f32.mrb[0].mxu0
        %v2126 = vadd.f32 %v532, %v2125
        %2127 = vmatprep.mubr.bf16.mxu0 %v1038
        %2128 = vmatmul.mubr.bf16.gmra.mrb[0].mxu0 %v1037
        %v2129 = vpop.f32.mrb[0].mxu0
        %v2130 = vadd.f32 %v528, %v2129
        %v2131 = vpop.f32.mrb[0].mxu0
        %v2132 = vadd.f32 %v532, %v2131
        %v2133 = vpop.f32.mrb[0].mxu0
        %v2134 = vadd.f32 %v528, %v2133
        %v2135 = vpop.f32.mrb[0].mxu0
        %v2136 = vadd.f32 %v532, %v2135
        %2137 = vmatprep.mubr.bf16.mxu0 %v1042
        %2138 = vmatmul.mubr.bf16.gmra.mrb[0].mxu0 %v1041
        %v2139 = vpop.f32.mrb[0].mxu0
        %v2140 = vadd.f32 %v528, %v2139
        %v2141 = vpop.f32.mrb[0].mxu0
        %v2142 = vadd.f32 %v532, %v2141
        %v2143 = vpop.f32.mrb[0].mxu0
        %v2144 = vadd.f32 %v528, %v2143
        %v2145 = vpop.f32.mrb[0].mxu0
        %v2146 = vadd.f32 %v532, %v2145
        %2147 = vmatprep.mubr.bf16.mxu0 %v1046
        %2148 = vmatmul.mubr.bf16.gmra.mrb[0].mxu0 %v1045
        %v2149 = vpop.f32.mrb[0].mxu0
        %v2150 = vadd.f32 %v528, %v2149
        %v2151 = vpop.f32.mrb[0].mxu0
        %v2152 = vadd.f32 %v532, %v2151
        %v2153 = vpop.f32.mrb[0].mxu0
        %v2154 = vadd.f32 %v528, %v2153
        %v2155 = vpop.f32.mrb[0].mxu0
        %v2156 = vadd.f32 %v532, %v2155
        %2157 = vmatprep.mubr.bf16.mxu0 %v1050
        %2158 = vmatmul.mubr.bf16.gmra.mrb[0].mxu0 %v1049
        %v2159 = vpop.f32.mrb[0].mxu0
        %v2160 = vadd.f32 %v528, %v2159
        %v2161 = vpop.f32.mrb[0].mxu0
        %v2162 = vadd.f32 %v532, %v2161
        %v2163 = vpop.f32.mrb[0].mxu0
        %v2164 = vadd.f32 %v528, %v2163
        %v2165 = vpop.f32.mrb[0].mxu0
        %v2166 = vadd.f32 %v532, %v2165
        %2167 = vmatprep.mubr.bf16.mxu0 %v1054
        %2168 = vmatmul.mubr.bf16.gmra.mrb[0].mxu0 %v1053
        %v2169 = vpop.f32.mrb[0].mxu0
        %v2170 = vadd.f32 %v528, %v2169
        %v2171 = vpop.f32.mrb[0].mxu0
        %v2172 = vadd.f32 %v532, %v2171
        %v2173 = vpop.f32.mrb[0].mxu0
        %v2174 = vadd.f32 %v528, %v2173
        %v2175 = vpop.f32.mrb[0].mxu0
        %v2176 = vadd.f32 %v532, %v2175
        %2177 = vdwg.mxu0
        %2178 = vmatprep.subr.bf16.mxu0 %v1634
        %2179 = vmatpush1.bf16.msra.mxu0 %v1633
        %2180 = vmatprep.subr.bf16.mxu0 %v1638
        %2181 = vmatpush1.bf16.msra.mxu0 %v1637
        %2182 = vmatprep.subr.bf16.mxu0 %v1642
        %2183 = vmatpush1.bf16.msra.mxu0 %v1641
        %2184 = vmatprep.subr.bf16.mxu0 %v1646
        %2185 = vmatpush1.bf16.msra.mxu0 %v1645
        %2186 = vmatprep.subr.bf16.mxu0 %v1650
        %2187 = vmatpush1.bf16.msra.mxu0 %v1649
        %2188 = vmatprep.subr.bf16.mxu0 %v1654
        %2189 = vmatpush1.bf16.msra.mxu0 %v1653
        %2190 = vmatprep.subr.bf16.mxu0 %v1658
        %2191 = vmatpush1.bf16.msra.mxu0 %v1657
        %2192 = vmatprep.subr.bf16.mxu0 %v1662
        %2193 = vmatpush1.bf16.msra.mxu0 %v1661
        %2194 = vmatprep.subr.bf16.mxu0 %v1666
        %2195 = vmatpush1.bf16.msra.mxu0 %v1665
        %2196 = vmatprep.subr.bf16.mxu0 %v1670
        %2197 = vmatpush1.bf16.msra.mxu0 %v1669
        %2198 = vmatprep.subr.bf16.mxu0 %v1674
        %2199 = vmatpush1.bf16.msra.mxu0 %v1673
        %2200 = vmatprep.subr.bf16.mxu0 %v1678
        %2201 = vmatpush1.bf16.msra.mxu0 %v1677
        %2202 = vmatprep.subr.bf16.mxu0 %v1682
        %2203 = vmatpush1.bf16.msra.mxu0 %v1681
        %2204 = vmatprep.subr.bf16.mxu0 %v1686
        %2205 = vmatpush1.bf16.msra.mxu0 %v1685
        %2206 = vmatprep.subr.bf16.mxu0 %v1690
        %2207 = vmatpush1.bf16.msra.mxu0 %v1689
        %2208 = vmatprep.subr.bf16.mxu0 %v1694
        %2209 = vmatpush1.bf16.msra.mxu0 %v1693
        %2210 = vmatprep.mubr.bf16.mxu0 %v932
        %2211 = vmatmul.mubr.bf16.gmra.mrb[0].mxu0 %v931
        %v2212 = vpop.f32.mrb[0].mxu0
        %v2213 = vadd.f32 %v1860, %v2212
        %v2214 = vpop.f32.mrb[0].mxu0
        %v2215 = vadd.f32 %v1862, %v2214
        %v2216 = vpop.f32.mrb[0].mxu0
        %v2217 = vadd.f32 %v1864, %v2216
        %v2218 = vpop.f32.mrb[0].mxu0
        %v2219 = vadd.f32 %v1866, %v2218
        %2220 = vmatprep.mubr.bf16.mxu0 %v936
        %2221 = vmatmul.mubr.bf16.gmra.mrb[0].mxu0 %v935
        %v2222 = vpop.f32.mrb[0].mxu0
        %v2223 = vadd.f32 %v1870, %v2222
        %v2224 = vpop.f32.mrb[0].mxu0
        %v2225 = vadd.f32 %v1872, %v2224
        %v2226 = vpop.f32.mrb[0].mxu0
        %v2227 = vadd.f32 %v1874, %v2226
        %v2228 = vpop.f32.mrb[0].mxu0
        %v2229 = vadd.f32 %v1876, %v2228
        %2230 = vmatprep.mubr.bf16.mxu0 %v940
        %2231 = vmatmul.mubr.bf16.gmra.mrb[0].mxu0 %v939
        %v2232 = vpop.f32.mrb[0].mxu0
        %v2233 = vadd.f32 %v1880, %v2232
        %v2234 = vpop.f32.mrb[0].mxu0
        %v2235 = vadd.f32 %v1882, %v2234
        %v2236 = vpop.f32.mrb[0].mxu0
        %v2237 = vadd.f32 %v1884, %v2236
        %v2238 = vpop.f32.mrb[0].mxu0
        %v2239 = vadd.f32 %v1886, %v2238
        %2240 = vmatprep.mubr.bf16.mxu0 %v944
        %2241 = vmatmul.mubr.bf16.gmra.mrb[0].mxu0 %v943
        %v2242 = vpop.f32.mrb[0].mxu0
        %v2243 = vadd.f32 %v1890, %v2242
        %v2244 = vpop.f32.mrb[0].mxu0
        %v2245 = vadd.f32 %v1892, %v2244
        %v2246 = vpop.f32.mrb[0].mxu0
        %v2247 = vadd.f32 %v1894, %v2246
        %v2248 = vpop.f32.mrb[0].mxu0
        %v2249 = vadd.f32 %v1896, %v2248
        %2250 = vmatprep.mubr.bf16.mxu0 %v948
        %2251 = vmatmul.mubr.bf16.gmra.mrb[0].mxu0 %v947
        %v2252 = vpop.f32.mrb[0].mxu0
        %v2253 = vadd.f32 %v1900, %v2252
        %v2254 = vpop.f32.mrb[0].mxu0
        %v2255 = vadd.f32 %v1902, %v2254
        %v2256 = vpop.f32.mrb[0].mxu0
        %v2257 = vadd.f32 %v1904, %v2256
        %v2258 = vpop.f32.mrb[0].mxu0
        %v2259 = vadd.f32 %v1906, %v2258
        %2260 = vmatprep.mubr.bf16.mxu0 %v952
        %2261 = vmatmul.mubr.bf16.gmra.mrb[0].mxu0 %v951
        %v2262 = vpop.f32.mrb[0].mxu0
        %v2263 = vadd.f32 %v1910, %v2262
        %v2264 = vpop.f32.mrb[0].mxu0
        %v2265 = vadd.f32 %v1912, %v2264
        %v2266 = vpop.f32.mrb[0].mxu0
        %v2267 = vadd.f32 %v1914, %v2266
        %v2268 = vpop.f32.mrb[0].mxu0
        %v2269 = vadd.f32 %v1916, %v2268
        %2270 = vmatprep.mubr.bf16.mxu0 %v956
        %2271 = vmatmul.mubr.bf16.gmra.mrb[0].mxu0 %v955
        %v2272 = vpop.f32.mrb[0].mxu0
        %v2273 = vadd.f32 %v1920, %v2272
        %v2274 = vpop.f32.mrb[0].mxu0
        %v2275 = vadd.f32 %v1922, %v2274
        %v2276 = vpop.f32.mrb[0].mxu0
        %v2277 = vadd.f32 %v1924, %v2276
        %v2278 = vpop.f32.mrb[0].mxu0
        %v2279 = vadd.f32 %v1926, %v2278
        %2280 = vmatprep.mubr.bf16.mxu0 %v960
        %2281 = vmatmul.mubr.bf16.gmra.mrb[0].mxu0 %v959
        %v2282 = vpop.f32.mrb[0].mxu0
        %v2283 = vadd.f32 %v1930, %v2282
        %v2284 = vpop.f32.mrb[0].mxu0
        %v2285 = vadd.f32 %v1932, %v2284
        %v2286 = vpop.f32.mrb[0].mxu0
        %v2287 = vadd.f32 %v1934, %v2286
        %v2288 = vpop.f32.mrb[0].mxu0
        %v2289 = vadd.f32 %v1936, %v2288
        %2290 = vmatprep.mubr.bf16.mxu0 %v964
        %2291 = vmatmul.mubr.bf16.gmra.mrb[0].mxu0 %v963
        %v2292 = vpop.f32.mrb[0].mxu0
        %v2293 = vadd.f32 %v1940, %v2292
        %v2294 = vpop.f32.mrb[0].mxu0
        %v2295 = vadd.f32 %v1942, %v2294
        %v2296 = vpop.f32.mrb[0].mxu0
        %v2297 = vadd.f32 %v1944, %v2296
        %v2298 = vpop.f32.mrb[0].mxu0
        %v2299 = vadd.f32 %v1946, %v2298
        %2300 = vmatprep.mubr.bf16.mxu0 %v968
        %2301 = vmatmul.mubr.bf16.gmra.mrb[0].mxu0 %v967
        %v2302 = vpop.f32.mrb[0].mxu0
        %v2303 = vadd.f32 %v1950, %v2302
        %v2304 = vpop.f32.mrb[0].mxu0
        %v2305 = vadd.f32 %v1952, %v2304
        %v2306 = vpop.f32.mrb[0].mxu0
        %v2307 = vadd.f32 %v1954, %v2306
        %v2308 = vpop.f32.mrb[0].mxu0
        %v2309 = vadd.f32 %v1956, %v2308
        %2310 = vmatprep.mubr.bf16.mxu0 %v972
        %2311 = vmatmul.mubr.bf16.gmra.mrb[0].mxu0 %v971
        %v2312 = vpop.f32.mrb[0].mxu0
        %v2313 = vadd.f32 %v1960, %v2312
        %v2314 = vpop.f32.mrb[0].mxu0
        %v2315 = vadd.f32 %v1962, %v2314
        %v2316 = vpop.f32.mrb[0].mxu0
        %v2317 = vadd.f32 %v1964, %v2316
        %v2318 = vpop.f32.mrb[0].mxu0
        %v2319 = vadd.f32 %v1966, %v2318
        %2320 = vmatprep.mubr.bf16.mxu0 %v976
        %2321 = vmatmul.mubr.bf16.gmra.mrb[0].mxu0 %v975
        %v2322 = vpop.f32.mrb[0].mxu0
        %v2323 = vadd.f32 %v1970, %v2322
        %v2324 = vpop.f32.mrb[0].mxu0
        %v2325 = vadd.f32 %v1972, %v2324
        %v2326 = vpop.f32.mrb[0].mxu0
        %v2327 = vadd.f32 %v1974, %v2326
        %v2328 = vpop.f32.mrb[0].mxu0
        %v2329 = vadd.f32 %v1976, %v2328
        %2330 = vmatprep.mubr.bf16.mxu0 %v980
        %2331 = vmatmul.mubr.bf16.gmra.mrb[0].mxu0 %v979
        %v2332 = vpop.f32.mrb[0].mxu0
        %v2333 = vadd.f32 %v1980, %v2332
        %v2334 = vpop.f32.mrb[0].mxu0
        %v2335 = vadd.f32 %v1982, %v2334
        %v2336 = vpop.f32.mrb[0].mxu0
        %v2337 = vadd.f32 %v1984, %v2336
        %v2338 = vpop.f32.mrb[0].mxu0
        %v2339 = vadd.f32 %v1986, %v2338
        %2340 = vmatprep.mubr.bf16.mxu0 %v984
        %2341 = vmatmul.mubr.bf16.gmra.mrb[0].mxu0 %v983
        %v2342 = vpop.f32.mrb[0].mxu0
        %v2343 = vadd.f32 %v1990, %v2342
        %v2344 = vpop.f32.mrb[0].mxu0
        %v2345 = vadd.f32 %v1992, %v2344
        %v2346 = vpop.f32.mrb[0].mxu0
        %v2347 = vadd.f32 %v1994, %v2346
        %v2348 = vpop.f32.mrb[0].mxu0
        %v2349 = vadd.f32 %v1996, %v2348
        %2350 = vmatprep.mubr.bf16.mxu0 %v988
        %2351 = vmatmul.mubr.bf16.gmra.mrb[0].mxu0 %v987
        %v2352 = vpop.f32.mrb[0].mxu0
        %v2353 = vadd.f32 %v2000, %v2352
        %v2354 = vpop.f32.mrb[0].mxu0
        %v2355 = vadd.f32 %v2002, %v2354
        %v2356 = vpop.f32.mrb[0].mxu0
        %v2357 = vadd.f32 %v2004, %v2356
        %v2358 = vpop.f32.mrb[0].mxu0
        %v2359 = vadd.f32 %v2006, %v2358
        %2360 = vmatprep.mubr.bf16.mxu0 %v992
        %2361 = vmatmul.mubr.bf16.gmra.mrb[0].mxu0 %v991
        %v2362 = vpop.f32.mrb[0].mxu0
        %v2363 = vadd.f32 %v2010, %v2362
        %v2364 = vpop.f32.mrb[0].mxu0
        %v2365 = vadd.f32 %v2012, %v2364
        %v2366 = vpop.f32.mrb[0].mxu0
        %v2367 = vadd.f32 %v2014, %v2366
        %v2368 = vpop.f32.mrb[0].mxu0
        %v2369 = vadd.f32 %v2016, %v2368
        %2370 = vmatprep.mubr.bf16.mxu0 %v996
        %2371 = vmatmul.mubr.bf16.gmra.mrb[0].mxu0 %v995
        %v2372 = vpop.f32.mrb[0].mxu0
        %v2373 = vadd.f32 %v2020, %v2372
        %v2374 = vpop.f32.mrb[0].mxu0
        %v2375 = vadd.f32 %v2022, %v2374
        %v2376 = vpop.f32.mrb[0].mxu0
        %v2377 = vadd.f32 %v2024, %v2376
        %v2378 = vpop.f32.mrb[0].mxu0
        %v2379 = vadd.f32 %v2026, %v2378
        %2380 = vmatprep.mubr.bf16.mxu0 %v1000
        %2381 = vmatmul.mubr.bf16.gmra.mrb[0].mxu0 %v999
        %v2382 = vpop.f32.mrb[0].mxu0
        %v2383 = vadd.f32 %v2030, %v2382
        %v2384 = vpop.f32.mrb[0].mxu0
        %v2385 = vadd.f32 %v2032, %v2384
        %v2386 = vpop.f32.mrb[0].mxu0
        %v2387 = vadd.f32 %v2034, %v2386
        %v2388 = vpop.f32.mrb[0].mxu0
        %v2389 = vadd.f32 %v2036, %v2388
        %2390 = vmatprep.mubr.bf16.mxu0 %v1004
        %2391 = vmatmul.mubr.bf16.gmra.mrb[0].mxu0 %v1003
        %v2392 = vpop.f32.mrb[0].mxu0
        %v2393 = vadd.f32 %v2040, %v2392
        %v2394 = vpop.f32.mrb[0].mxu0
        %v2395 = vadd.f32 %v2042, %v2394
        %v2396 = vpop.f32.mrb[0].mxu0
        %v2397 = vadd.f32 %v2044, %v2396
        %v2398 = vpop.f32.mrb[0].mxu0
        %v2399 = vadd.f32 %v2046, %v2398
        %2400 = vmatprep.mubr.bf16.mxu0 %v1008
        %2401 = vmatmul.mubr.bf16.gmra.mrb[0].mxu0 %v1007
        %v2402 = vpop.f32.mrb[0].mxu0
        %v2403 = vadd.f32 %v2050, %v2402
        %v2404 = vpop.f32.mrb[0].mxu0
        %v2405 = vadd.f32 %v2052, %v2404
        %v2406 = vpop.f32.mrb[0].mxu0
        %v2407 = vadd.f32 %v2054, %v2406
        %v2408 = vpop.f32.mrb[0].mxu0
        %v2409 = vadd.f32 %v2056, %v2408
        %2410 = vmatprep.mubr.bf16.mxu0 %v1012
        %2411 = vmatmul.mubr.bf16.gmra.mrb[0].mxu0 %v1011
        %v2412 = vpop.f32.mrb[0].mxu0
        %v2413 = vadd.f32 %v2060, %v2412
        %v2414 = vpop.f32.mrb[0].mxu0
        %v2415 = vadd.f32 %v2062, %v2414
        %v2416 = vpop.f32.mrb[0].mxu0
        %v2417 = vadd.f32 %v2064, %v2416
        %v2418 = vpop.f32.mrb[0].mxu0
        %v2419 = vadd.f32 %v2066, %v2418
        %2420 = vmatprep.mubr.bf16.mxu0 %v1016
        %2421 = vmatmul.mubr.bf16.gmra.mrb[0].mxu0 %v1015
        %v2422 = vpop.f32.mrb[0].mxu0
        %v2423 = vadd.f32 %v2070, %v2422
        %v2424 = vpop.f32.mrb[0].mxu0
        %v2425 = vadd.f32 %v2072, %v2424
        %v2426 = vpop.f32.mrb[0].mxu0
        %v2427 = vadd.f32 %v2074, %v2426
        %v2428 = vpop.f32.mrb[0].mxu0
        %v2429 = vadd.f32 %v2076, %v2428
        %2430 = vmatprep.mubr.bf16.mxu0 %v1020
        %2431 = vmatmul.mubr.bf16.gmra.mrb[0].mxu0 %v1019
        %v2432 = vpop.f32.mrb[0].mxu0
        %v2433 = vadd.f32 %v2080, %v2432
        %v2434 = vpop.f32.mrb[0].mxu0
        %v2435 = vadd.f32 %v2082, %v2434
        %v2436 = vpop.f32.mrb[0].mxu0
        %v2437 = vadd.f32 %v2084, %v2436
        %v2438 = vpop.f32.mrb[0].mxu0
        %v2439 = vadd.f32 %v2086, %v2438
        %2440 = vmatprep.mubr.bf16.mxu0 %v1024
        %2441 = vmatmul.mubr.bf16.gmra.mrb[0].mxu0 %v1023
        %v2442 = vpop.f32.mrb[0].mxu0
        %v2443 = vadd.f32 %v2090, %v2442
        %v2444 = vpop.f32.mrb[0].mxu0
        %v2445 = vadd.f32 %v2092, %v2444
        %v2446 = vpop.f32.mrb[0].mxu0
        %v2447 = vadd.f32 %v2094, %v2446
        %v2448 = vpop.f32.mrb[0].mxu0
        %v2449 = vadd.f32 %v2096, %v2448
        %2450 = vmatprep.mubr.bf16.mxu0 %v1028
        %2451 = vmatmul.mubr.bf16.gmra.mrb[0].mxu0 %v1027
        %v2452 = vpop.f32.mrb[0].mxu0
        %v2453 = vadd.f32 %v2100, %v2452
        %v2454 = vpop.f32.mrb[0].mxu0
        %v2455 = vadd.f32 %v2102, %v2454
        %v2456 = vpop.f32.mrb[0].mxu0
        %v2457 = vadd.f32 %v2104, %v2456
        %v2458 = vpop.f32.mrb[0].mxu0
        %v2459 = vadd.f32 %v2106, %v2458
        %2460 = vmatprep.mubr.bf16.mxu0 %v1032
        %2461 = vmatmul.mubr.bf16.gmra.mrb[0].mxu0 %v1031
        %v2462 = vpop.f32.mrb[0].mxu0
        %v2463 = vadd.f32 %v2110, %v2462
        %v2464 = vpop.f32.mrb[0].mxu0
        %v2465 = vadd.f32 %v2112, %v2464
        %v2466 = vpop.f32.mrb[0].mxu0
        %v2467 = vadd.f32 %v2114, %v2466
        %v2468 = vpop.f32.mrb[0].mxu0
        %v2469 = vadd.f32 %v2116, %v2468
        %2470 = vmatprep.mubr.bf16.mxu0 %v1036
        %2471 = vmatmul.mubr.bf16.gmra.mrb[0].mxu0 %v1035
        %v2472 = vpop.f32.mrb[0].mxu0
        %v2473 = vadd.f32 %v2120, %v2472
        %v2474 = vpop.f32.mrb[0].mxu0
        %v2475 = vadd.f32 %v2122, %v2474
        %v2476 = vpop.f32.mrb[0].mxu0
        %v2477 = vadd.f32 %v2124, %v2476
        %v2478 = vpop.f32.mrb[0].mxu0
        %v2479 = vadd.f32 %v2126, %v2478
        %2480 = vmatprep.mubr.bf16.mxu0 %v1040
        %2481 = vmatmul.mubr.bf16.gmra.mrb[0].mxu0 %v1039
        %v2482 = vpop.f32.mrb[0].mxu0
        %v2483 = vadd.f32 %v2130, %v2482
        %v2484 = vpop.f32.mrb[0].mxu0
        %v2485 = vadd.f32 %v2132, %v2484
        %v2486 = vpop.f32.mrb[0].mxu0
        %v2487 = vadd.f32 %v2134, %v2486
        %v2488 = vpop.f32.mrb[0].mxu0
        %v2489 = vadd.f32 %v2136, %v2488
        %2490 = vmatprep.mubr.bf16.mxu0 %v1044
        %2491 = vmatmul.mubr.bf16.gmra.mrb[0].mxu0 %v1043
        %v2492 = vpop.f32.mrb[0].mxu0
        %v2493 = vadd.f32 %v2140, %v2492
        %v2494 = vpop.f32.mrb[0].mxu0
        %v2495 = vadd.f32 %v2142, %v2494
        %v2496 = vpop.f32.mrb[0].mxu0
        %v2497 = vadd.f32 %v2144, %v2496
        %v2498 = vpop.f32.mrb[0].mxu0
        %v2499 = vadd.f32 %v2146, %v2498
        %2500 = vmatprep.mubr.bf16.mxu0 %v1048
        %2501 = vmatmul.mubr.bf16.gmra.mrb[0].mxu0 %v1047
        %v2502 = vpop.f32.mrb[0].mxu0
        %v2503 = vadd.f32 %v2150, %v2502
        %v2504 = vpop.f32.mrb[0].mxu0
        %v2505 = vadd.f32 %v2152, %v2504
        %v2506 = vpop.f32.mrb[0].mxu0
        %v2507 = vadd.f32 %v2154, %v2506
        %v2508 = vpop.f32.mrb[0].mxu0
        %v2509 = vadd.f32 %v2156, %v2508
        %2510 = vmatprep.mubr.bf16.mxu0 %v1052
        %2511 = vmatmul.mubr.bf16.gmra.mrb[0].mxu0 %v1051
        %v2512 = vpop.f32.mrb[0].mxu0
        %v2513 = vadd.f32 %v2160, %v2512
        %v2514 = vpop.f32.mrb[0].mxu0
        %v2515 = vadd.f32 %v2162, %v2514
        %v2516 = vpop.f32.mrb[0].mxu0
        %v2517 = vadd.f32 %v2164, %v2516
        %v2518 = vpop.f32.mrb[0].mxu0
        %v2519 = vadd.f32 %v2166, %v2518
        %2520 = vmatprep.mubr.bf16.mxu0 %v1056
        %2521 = vmatmul.mubr.bf16.gmra.mrb[0].mxu0 %v1055
        %v2522 = vpop.f32.mrb[0].mxu0
        %v2523 = vadd.f32 %v2170, %v2522
        %v2524 = vpop.f32.mrb[0].mxu0
        %v2525 = vadd.f32 %v2172, %v2524
        %v2526 = vpop.f32.mrb[0].mxu0
        %v2527 = vadd.f32 %v2174, %v2526
        %v2528 = vpop.f32.mrb[0].mxu0
        %v2529 = vadd.f32 %v2176, %v2528
        %2530 = vdwg.mxu0
        %2531 = vmatprep.subr.bf16.mxu0 %v1572
        %2532 = vmatpush1.bf16.msra.mxu0 %v1571
        %2533 = vmatprep.subr.bf16.mxu0 %v1576
        %2534 = vmatpush1.bf16.msra.mxu0 %v1575
        %2535 = vmatprep.subr.bf16.mxu0 %v1580
        %2536 = vmatpush1.bf16.msra.mxu0 %v1579
        %2537 = vmatprep.subr.bf16.mxu0 %v1584
        %2538 = vmatpush1.bf16.msra.mxu0 %v1583
        %2539 = vmatprep.subr.bf16.mxu0 %v1588
        %2540 = vmatpush1.bf16.msra.mxu0 %v1587
        %2541 = vmatprep.subr.bf16.mxu0 %v1592
        %2542 = vmatpush1.bf16.msra.mxu0 %v1591
        %2543 = vmatprep.subr.bf16.mxu0 %v1596
        %2544 = vmatpush1.bf16.msra.mxu0 %v1595
        %2545 = vmatprep.subr.bf16.mxu0 %v1600
        %2546 = vmatpush1.bf16.msra.mxu0 %v1599
        %2547 = vmatprep.subr.bf16.mxu0 %v1604
        %2548 = vmatpush1.bf16.msra.mxu0 %v1603
        %2549 = vmatprep.subr.bf16.mxu0 %v1608
        %2550 = vmatpush1.bf16.msra.mxu0 %v1607
        %2551 = vmatprep.subr.bf16.mxu0 %v1612
        %2552 = vmatpush1.bf16.msra.mxu0 %v1611
        %2553 = vmatprep.subr.bf16.mxu0 %v1616
        %2554 = vmatpush1.bf16.msra.mxu0 %v1615
        %2555 = vmatprep.subr.bf16.mxu0 %v1620
        %2556 = vmatpush1.bf16.msra.mxu0 %v1619
        %2557 = vmatprep.subr.bf16.mxu0 %v1624
        %2558 = vmatpush1.bf16.msra.mxu0 %v1623
        %2559 = vmatprep.subr.bf16.mxu0 %v1628
        %2560 = vmatpush1.bf16.msra.mxu0 %v1627
        %2561 = vmatprep.subr.bf16.mxu0 %v1632
        %2562 = vmatpush1.bf16.msra.mxu0 %v1631
        %2563 = vmatprep.mubr.bf16.mxu0 %v930
        %2564 = vmatmul.mubr.bf16.gmra.mrb[0].mxu0 %v929
        %v2565 = vpop.f32.mrb[0].mxu0
        %v2566 = vadd.f32 %v536, %v2565
        %v2567 = vpop.f32.mrb[0].mxu0
        %v2568 = vadd.f32 %v540, %v2567
        %v2569 = vpop.f32.mrb[0].mxu0
        %v2570 = vadd.f32 %v536, %v2569
        %v2571 = vpop.f32.mrb[0].mxu0
        %v2572 = vadd.f32 %v540, %v2571
        %2573 = vmatprep.mubr.bf16.mxu0 %v934
        %2574 = vmatmul.mubr.bf16.gmra.mrb[0].mxu0 %v933
        %v2575 = vpop.f32.mrb[0].mxu0
        %v2576 = vadd.f32 %v536, %v2575
        %v2577 = vpop.f32.mrb[0].mxu0
        %v2578 = vadd.f32 %v540, %v2577
        %v2579 = vpop.f32.mrb[0].mxu0
        %v2580 = vadd.f32 %v536, %v2579
        %v2581 = vpop.f32.mrb[0].mxu0
        %v2582 = vadd.f32 %v540, %v2581
        %2583 = vmatprep.mubr.bf16.mxu0 %v938
        %2584 = vmatmul.mubr.bf16.gmra.mrb[0].mxu0 %v937
        %v2585 = vpop.f32.mrb[0].mxu0
        %v2586 = vadd.f32 %v536, %v2585
        %v2587 = vpop.f32.mrb[0].mxu0
        %v2588 = vadd.f32 %v540, %v2587
        %v2589 = vpop.f32.mrb[0].mxu0
        %v2590 = vadd.f32 %v536, %v2589
        %v2591 = vpop.f32.mrb[0].mxu0
        %v2592 = vadd.f32 %v540, %v2591
        %2593 = vmatprep.mubr.bf16.mxu0 %v942
        %2594 = vmatmul.mubr.bf16.gmra.mrb[0].mxu0 %v941
        %v2595 = vpop.f32.mrb[0].mxu0
        %v2596 = vadd.f32 %v536, %v2595
        %v2597 = vpop.f32.mrb[0].mxu0
        %v2598 = vadd.f32 %v540, %v2597
        %v2599 = vpop.f32.mrb[0].mxu0
        %v2600 = vadd.f32 %v536, %v2599
        %v2601 = vpop.f32.mrb[0].mxu0
        %v2602 = vadd.f32 %v540, %v2601
        %2603 = vmatprep.mubr.bf16.mxu0 %v946
        %2604 = vmatmul.mubr.bf16.gmra.mrb[0].mxu0 %v945
        %v2605 = vpop.f32.mrb[0].mxu0
        %v2606 = vadd.f32 %v536, %v2605
        %v2607 = vpop.f32.mrb[0].mxu0
        %v2608 = vadd.f32 %v540, %v2607
        %v2609 = vpop.f32.mrb[0].mxu0
        %v2610 = vadd.f32 %v536, %v2609
        %v2611 = vpop.f32.mrb[0].mxu0
        %v2612 = vadd.f32 %v540, %v2611
        %2613 = vmatprep.mubr.bf16.mxu0 %v950
        %2614 = vmatmul.mubr.bf16.gmra.mrb[0].mxu0 %v949
        %v2615 = vpop.f32.mrb[0].mxu0
        %v2616 = vadd.f32 %v536, %v2615
        %v2617 = vpop.f32.mrb[0].mxu0
        %v2618 = vadd.f32 %v540, %v2617
        %v2619 = vpop.f32.mrb[0].mxu0
        %v2620 = vadd.f32 %v536, %v2619
        %v2621 = vpop.f32.mrb[0].mxu0
        %v2622 = vadd.f32 %v540, %v2621
        %2623 = vmatprep.mubr.bf16.mxu0 %v954
        %2624 = vmatmul.mubr.bf16.gmra.mrb[0].mxu0 %v953
        %v2625 = vpop.f32.mrb[0].mxu0
        %v2626 = vadd.f32 %v536, %v2625
        %v2627 = vpop.f32.mrb[0].mxu0
        %v2628 = vadd.f32 %v540, %v2627
        %v2629 = vpop.f32.mrb[0].mxu0
        %v2630 = vadd.f32 %v536, %v2629
        %v2631 = vpop.f32.mrb[0].mxu0
        %v2632 = vadd.f32 %v540, %v2631
        %2633 = vmatprep.mubr.bf16.mxu0 %v958
        %2634 = vmatmul.mubr.bf16.gmra.mrb[0].mxu0 %v957
        %v2635 = vpop.f32.mrb[0].mxu0
        %v2636 = vadd.f32 %v536, %v2635
        %v2637 = vpop.f32.mrb[0].mxu0
        %v2638 = vadd.f32 %v540, %v2637
        %v2639 = vpop.f32.mrb[0].mxu0
        %v2640 = vadd.f32 %v536, %v2639
        %v2641 = vpop.f32.mrb[0].mxu0
        %v2642 = vadd.f32 %v540, %v2641
        %2643 = vmatprep.mubr.bf16.mxu0 %v962
        %2644 = vmatmul.mubr.bf16.gmra.mrb[0].mxu0 %v961
        %v2645 = vpop.f32.mrb[0].mxu0
        %v2646 = vadd.f32 %v536, %v2645
        %v2647 = vpop.f32.mrb[0].mxu0
        %v2648 = vadd.f32 %v540, %v2647
        %v2649 = vpop.f32.mrb[0].mxu0
        %v2650 = vadd.f32 %v536, %v2649
        %v2651 = vpop.f32.mrb[0].mxu0
        %v2652 = vadd.f32 %v540, %v2651
        %2653 = vmatprep.mubr.bf16.mxu0 %v966
        %2654 = vmatmul.mubr.bf16.gmra.mrb[0].mxu0 %v965
        %v2655 = vpop.f32.mrb[0].mxu0
        %v2656 = vadd.f32 %v536, %v2655
        %v2657 = vpop.f32.mrb[0].mxu0
        %v2658 = vadd.f32 %v540, %v2657
        %v2659 = vpop.f32.mrb[0].mxu0
        %v2660 = vadd.f32 %v536, %v2659
        %v2661 = vpop.f32.mrb[0].mxu0
        %v2662 = vadd.f32 %v540, %v2661
        %2663 = vmatprep.mubr.bf16.mxu0 %v970
        %2664 = vmatmul.mubr.bf16.gmra.mrb[0].mxu0 %v969
        %v2665 = vpop.f32.mrb[0].mxu0
        %v2666 = vadd.f32 %v536, %v2665
        %v2667 = vpop.f32.mrb[0].mxu0
        %v2668 = vadd.f32 %v540, %v2667
        %v2669 = vpop.f32.mrb[0].mxu0
        %v2670 = vadd.f32 %v536, %v2669
        %v2671 = vpop.f32.mrb[0].mxu0
        %v2672 = vadd.f32 %v540, %v2671
        %2673 = vmatprep.mubr.bf16.mxu0 %v974
        %2674 = vmatmul.mubr.bf16.gmra.mrb[0].mxu0 %v973
        %v2675 = vpop.f32.mrb[0].mxu0
        %v2676 = vadd.f32 %v536, %v2675
        %v2677 = vpop.f32.mrb[0].mxu0
        %v2678 = vadd.f32 %v540, %v2677
        %v2679 = vpop.f32.mrb[0].mxu0
        %v2680 = vadd.f32 %v536, %v2679
        %v2681 = vpop.f32.mrb[0].mxu0
        %v2682 = vadd.f32 %v540, %v2681
        %2683 = vmatprep.mubr.bf16.mxu0 %v978
        %2684 = vmatmul.mubr.bf16.gmra.mrb[0].mxu0 %v977
        %v2685 = vpop.f32.mrb[0].mxu0
        %v2686 = vadd.f32 %v536, %v2685
        %v2687 = vpop.f32.mrb[0].mxu0
        %v2688 = vadd.f32 %v540, %v2687
        %v2689 = vpop.f32.mrb[0].mxu0
        %v2690 = vadd.f32 %v536, %v2689
        %v2691 = vpop.f32.mrb[0].mxu0
        %v2692 = vadd.f32 %v540, %v2691
        %2693 = vmatprep.mubr.bf16.mxu0 %v982
        %2694 = vmatmul.mubr.bf16.gmra.mrb[0].mxu0 %v981
        %v2695 = vpop.f32.mrb[0].mxu0
        %v2696 = vadd.f32 %v536, %v2695
        %v2697 = vpop.f32.mrb[0].mxu0
        %v2698 = vadd.f32 %v540, %v2697
        %v2699 = vpop.f32.mrb[0].mxu0
        %v2700 = vadd.f32 %v536, %v2699
        %v2701 = vpop.f32.mrb[0].mxu0
        %v2702 = vadd.f32 %v540, %v2701
        %2703 = vmatprep.mubr.bf16.mxu0 %v986
        %2704 = vmatmul.mubr.bf16.gmra.mrb[0].mxu0 %v985
        %v2705 = vpop.f32.mrb[0].mxu0
        %v2706 = vadd.f32 %v536, %v2705
        %v2707 = vpop.f32.mrb[0].mxu0
        %v2708 = vadd.f32 %v540, %v2707
        %v2709 = vpop.f32.mrb[0].mxu0
        %v2710 = vadd.f32 %v536, %v2709
        %v2711 = vpop.f32.mrb[0].mxu0
        %v2712 = vadd.f32 %v540, %v2711
        %2713 = vmatprep.mubr.bf16.mxu0 %v990
        %2714 = vmatmul.mubr.bf16.gmra.mrb[0].mxu0 %v989
        %v2715 = vpop.f32.mrb[0].mxu0
        %v2716 = vadd.f32 %v536, %v2715
        %v2717 = vpop.f32.mrb[0].mxu0
        %v2718 = vadd.f32 %v540, %v2717
        %v2719 = vpop.f32.mrb[0].mxu0
        %v2720 = vadd.f32 %v536, %v2719
        %v2721 = vpop.f32.mrb[0].mxu0
        %v2722 = vadd.f32 %v540, %v2721
        %2723 = vmatprep.mubr.bf16.mxu0 %v994
        %2724 = vmatmul.mubr.bf16.gmra.mrb[0].mxu0 %v993
        %v2725 = vpop.f32.mrb[0].mxu0
        %v2726 = vadd.f32 %v536, %v2725
        %v2727 = vpop.f32.mrb[0].mxu0
        %v2728 = vadd.f32 %v540, %v2727
        %v2729 = vpop.f32.mrb[0].mxu0
        %v2730 = vadd.f32 %v536, %v2729
        %v2731 = vpop.f32.mrb[0].mxu0
        %v2732 = vadd.f32 %v540, %v2731
        %2733 = vmatprep.mubr.bf16.mxu0 %v998
        %2734 = vmatmul.mubr.bf16.gmra.mrb[0].mxu0 %v997
        %v2735 = vpop.f32.mrb[0].mxu0
        %v2736 = vadd.f32 %v536, %v2735
        %v2737 = vpop.f32.mrb[0].mxu0
        %v2738 = vadd.f32 %v540, %v2737
        %v2739 = vpop.f32.mrb[0].mxu0
        %v2740 = vadd.f32 %v536, %v2739
        %v2741 = vpop.f32.mrb[0].mxu0
        %v2742 = vadd.f32 %v540, %v2741
        %2743 = vmatprep.mubr.bf16.mxu0 %v1002
        %2744 = vmatmul.mubr.bf16.gmra.mrb[0].mxu0 %v1001
        %v2745 = vpop.f32.mrb[0].mxu0
        %v2746 = vadd.f32 %v536, %v2745
        %v2747 = vpop.f32.mrb[0].mxu0
        %v2748 = vadd.f32 %v540, %v2747
        %v2749 = vpop.f32.mrb[0].mxu0
        %v2750 = vadd.f32 %v536, %v2749
        %v2751 = vpop.f32.mrb[0].mxu0
        %v2752 = vadd.f32 %v540, %v2751
        %2753 = vmatprep.mubr.bf16.mxu0 %v1006
        %2754 = vmatmul.mubr.bf16.gmra.mrb[0].mxu0 %v1005
        %v2755 = vpop.f32.mrb[0].mxu0
        %v2756 = vadd.f32 %v536, %v2755
        %v2757 = vpop.f32.mrb[0].mxu0
        %v2758 = vadd.f32 %v540, %v2757
        %v2759 = vpop.f32.mrb[0].mxu0
        %v2760 = vadd.f32 %v536, %v2759
        %v2761 = vpop.f32.mrb[0].mxu0
        %v2762 = vadd.f32 %v540, %v2761
        %2763 = vmatprep.mubr.bf16.mxu0 %v1010
        %2764 = vmatmul.mubr.bf16.gmra.mrb[0].mxu0 %v1009
        %v2765 = vpop.f32.mrb[0].mxu0
        %v2766 = vadd.f32 %v536, %v2765
        %v2767 = vpop.f32.mrb[0].mxu0
        %v2768 = vadd.f32 %v540, %v2767
        %v2769 = vpop.f32.mrb[0].mxu0
        %v2770 = vadd.f32 %v536, %v2769
        %v2771 = vpop.f32.mrb[0].mxu0
        %v2772 = vadd.f32 %v540, %v2771
        %2773 = vmatprep.mubr.bf16.mxu0 %v1014
        %2774 = vmatmul.mubr.bf16.gmra.mrb[0].mxu0 %v1013
        %v2775 = vpop.f32.mrb[0].mxu0
        %v2776 = vadd.f32 %v536, %v2775
        %v2777 = vpop.f32.mrb[0].mxu0
        %v2778 = vadd.f32 %v540, %v2777
        %v2779 = vpop.f32.mrb[0].mxu0
        %v2780 = vadd.f32 %v536, %v2779
        %v2781 = vpop.f32.mrb[0].mxu0
        %v2782 = vadd.f32 %v540, %v2781
        %2783 = vmatprep.mubr.bf16.mxu0 %v1018
        %2784 = vmatmul.mubr.bf16.gmra.mrb[0].mxu0 %v1017
        %v2785 = vpop.f32.mrb[0].mxu0
        %v2786 = vadd.f32 %v536, %v2785
        %v2787 = vpop.f32.mrb[0].mxu0
        %v2788 = vadd.f32 %v540, %v2787
        %v2789 = vpop.f32.mrb[0].mxu0
        %v2790 = vadd.f32 %v536, %v2789
        %v2791 = vpop.f32.mrb[0].mxu0
        %v2792 = vadd.f32 %v540, %v2791
        %2793 = vmatprep.mubr.bf16.mxu0 %v1022
        %2794 = vmatmul.mubr.bf16.gmra.mrb[0].mxu0 %v1021
        %v2795 = vpop.f32.mrb[0].mxu0
        %v2796 = vadd.f32 %v536, %v2795
        %v2797 = vpop.f32.mrb[0].mxu0
        %v2798 = vadd.f32 %v540, %v2797
        %v2799 = vpop.f32.mrb[0].mxu0
        %v2800 = vadd.f32 %v536, %v2799
        %v2801 = vpop.f32.mrb[0].mxu0
        %v2802 = vadd.f32 %v540, %v2801
        %2803 = vmatprep.mubr.bf16.mxu0 %v1026
        %2804 = vmatmul.mubr.bf16.gmra.mrb[0].mxu0 %v1025
        %v2805 = vpop.f32.mrb[0].mxu0
        %v2806 = vadd.f32 %v536, %v2805
        %v2807 = vpop.f32.mrb[0].mxu0
        %v2808 = vadd.f32 %v540, %v2807
        %v2809 = vpop.f32.mrb[0].mxu0
        %v2810 = vadd.f32 %v536, %v2809
        %v2811 = vpop.f32.mrb[0].mxu0
        %v2812 = vadd.f32 %v540, %v2811
        %2813 = vmatprep.mubr.bf16.mxu0 %v1030
        %2814 = vmatmul.mubr.bf16.gmra.mrb[0].mxu0 %v1029
        %v2815 = vpop.f32.mrb[0].mxu0
        %v2816 = vadd.f32 %v536, %v2815
        %v2817 = vpop.f32.mrb[0].mxu0
        %v2818 = vadd.f32 %v540, %v2817
        %v2819 = vpop.f32.mrb[0].mxu0
        %v2820 = vadd.f32 %v536, %v2819
        %v2821 = vpop.f32.mrb[0].mxu0
        %v2822 = vadd.f32 %v540, %v2821
        %2823 = vmatprep.mubr.bf16.mxu0 %v1034
        %2824 = vmatmul.mubr.bf16.gmra.mrb[0].mxu0 %v1033
        %v2825 = vpop.f32.mrb[0].mxu0
        %v2826 = vadd.f32 %v536, %v2825
        %v2827 = vpop.f32.mrb[0].mxu0
        %v2828 = vadd.f32 %v540, %v2827
        %v2829 = vpop.f32.mrb[0].mxu0
        %v2830 = vadd.f32 %v536, %v2829
        %v2831 = vpop.f32.mrb[0].mxu0
        %v2832 = vadd.f32 %v540, %v2831
        %2833 = vmatprep.mubr.bf16.mxu0 %v1038
        %2834 = vmatmul.mubr.bf16.gmra.mrb[0].mxu0 %v1037
        %v2835 = vpop.f32.mrb[0].mxu0
        %v2836 = vadd.f32 %v536, %v2835
        %v2837 = vpop.f32.mrb[0].mxu0
        %v2838 = vadd.f32 %v540, %v2837
        %v2839 = vpop.f32.mrb[0].mxu0
        %v2840 = vadd.f32 %v536, %v2839
        %v2841 = vpop.f32.mrb[0].mxu0
        %v2842 = vadd.f32 %v540, %v2841
        %2843 = vmatprep.mubr.bf16.mxu0 %v1042
        %2844 = vmatmul.mubr.bf16.gmra.mrb[0].mxu0 %v1041
        %v2845 = vpop.f32.mrb[0].mxu0
        %v2846 = vadd.f32 %v536, %v2845
        %v2847 = vpop.f32.mrb[0].mxu0
        %v2848 = vadd.f32 %v540, %v2847
        %v2849 = vpop.f32.mrb[0].mxu0
        %v2850 = vadd.f32 %v536, %v2849
        %v2851 = vpop.f32.mrb[0].mxu0
        %v2852 = vadd.f32 %v540, %v2851
        %2853 = vmatprep.mubr.bf16.mxu0 %v1046
        %2854 = vmatmul.mubr.bf16.gmra.mrb[0].mxu0 %v1045
        %v2855 = vpop.f32.mrb[0].mxu0
        %v2856 = vadd.f32 %v536, %v2855
        %v2857 = vpop.f32.mrb[0].mxu0
        %v2858 = vadd.f32 %v540, %v2857
        %v2859 = vpop.f32.mrb[0].mxu0
        %v2860 = vadd.f32 %v536, %v2859
        %v2861 = vpop.f32.mrb[0].mxu0
        %v2862 = vadd.f32 %v540, %v2861
        %2863 = vmatprep.mubr.bf16.mxu0 %v1050
        %2864 = vmatmul.mubr.bf16.gmra.mrb[0].mxu0 %v1049
        %v2865 = vpop.f32.mrb[0].mxu0
        %v2866 = vadd.f32 %v536, %v2865
        %v2867 = vpop.f32.mrb[0].mxu0
        %v2868 = vadd.f32 %v540, %v2867
        %v2869 = vpop.f32.mrb[0].mxu0
        %v2870 = vadd.f32 %v536, %v2869
        %v2871 = vpop.f32.mrb[0].mxu0
        %v2872 = vadd.f32 %v540, %v2871
        %2873 = vmatprep.mubr.bf16.mxu0 %v1054
        %2874 = vmatmul.mubr.bf16.gmra.mrb[0].mxu0 %v1053
        %v2875 = vpop.f32.mrb[0].mxu0
        %v2876 = vadd.f32 %v536, %v2875
        %v2877 = vpop.f32.mrb[0].mxu0
        %v2878 = vadd.f32 %v540, %v2877
        %v2879 = vpop.f32.mrb[0].mxu0
        %v2880 = vadd.f32 %v536, %v2879
        %v2881 = vpop.f32.mrb[0].mxu0
        %v2882 = vadd.f32 %v540, %v2881
        %2883 = vdwg.mxu0
        %2884 = vmatprep.subr.bf16.mxu0 %v1636
        %2885 = vmatpush1.bf16.msra.mxu0 %v1635
        %2886 = vmatprep.subr.bf16.mxu0 %v1640
        %2887 = vmatpush1.bf16.msra.mxu0 %v1639
        %2888 = vmatprep.subr.bf16.mxu0 %v1644
        %2889 = vmatpush1.bf16.msra.mxu0 %v1643
        %2890 = vmatprep.subr.bf16.mxu0 %v1648
        %2891 = vmatpush1.bf16.msra.mxu0 %v1647
        %2892 = vmatprep.subr.bf16.mxu0 %v1652
        %2893 = vmatpush1.bf16.msra.mxu0 %v1651
        %2894 = vmatprep.subr.bf16.mxu0 %v1656
        %2895 = vmatpush1.bf16.msra.mxu0 %v1655
        %2896 = vmatprep.subr.bf16.mxu0 %v1660
        %2897 = vmatpush1.bf16.msra.mxu0 %v1659
        %2898 = vmatprep.subr.bf16.mxu0 %v1664
        %2899 = vmatpush1.bf16.msra.mxu0 %v1663
        %2900 = vmatprep.subr.bf16.mxu0 %v1668
        %2901 = vmatpush1.bf16.msra.mxu0 %v1667
        %2902 = vmatprep.subr.bf16.mxu0 %v1672
        %2903 = vmatpush1.bf16.msra.mxu0 %v1671
        %2904 = vmatprep.subr.bf16.mxu0 %v1676
        %2905 = vmatpush1.bf16.msra.mxu0 %v1675
        %2906 = vmatprep.subr.bf16.mxu0 %v1680
        %2907 = vmatpush1.bf16.msra.mxu0 %v1679
        %2908 = vmatprep.subr.bf16.mxu0 %v1684
        %2909 = vmatpush1.bf16.msra.mxu0 %v1683
        %2910 = vmatprep.subr.bf16.mxu0 %v1688
        %2911 = vmatpush1.bf16.msra.mxu0 %v1687
        %2912 = vmatprep.subr.bf16.mxu0 %v1692
        %2913 = vmatpush1.bf16.msra.mxu0 %v1691
        %2914 = vmatprep.subr.bf16.mxu0 %v1696
        %2915 = vmatpush1.bf16.msra.mxu0 %v1695
        %2916 = vmatprep.mubr.bf16.mxu0 %v932
        %2917 = vmatmul.mubr.bf16.gmra.mrb[0].mxu0 %v931
        %v2918 = vpop.f32.mrb[0].mxu0
        %v2919 = vadd.f32 %v2566, %v2918
        %v2920 = vpop.f32.mrb[0].mxu0
        %v2921 = vadd.f32 %v2568, %v2920
        %v2922 = vpop.f32.mrb[0].mxu0
        %v2923 = vadd.f32 %v2570, %v2922
        %v2924 = vpop.f32.mrb[0].mxu0
        %v2925 = vadd.f32 %v2572, %v2924
        %2926 = vmatprep.mubr.bf16.mxu0 %v936
        %2927 = vmatmul.mubr.bf16.gmra.mrb[0].mxu0 %v935
        %v2928 = vpop.f32.mrb[0].mxu0
        %v2929 = vadd.f32 %v2576, %v2928
        %v2930 = vpop.f32.mrb[0].mxu0
        %v2931 = vadd.f32 %v2578, %v2930
        %v2932 = vpop.f32.mrb[0].mxu0
        %v2933 = vadd.f32 %v2580, %v2932
        %v2934 = vpop.f32.mrb[0].mxu0
        %v2935 = vadd.f32 %v2582, %v2934
        %2936 = vmatprep.mubr.bf16.mxu0 %v940
        %2937 = vmatmul.mubr.bf16.gmra.mrb[0].mxu0 %v939
        %v2938 = vpop.f32.mrb[0].mxu0
        %v2939 = vadd.f32 %v2586, %v2938
        %v2940 = vpop.f32.mrb[0].mxu0
        %v2941 = vadd.f32 %v2588, %v2940
        %v2942 = vpop.f32.mrb[0].mxu0
        %v2943 = vadd.f32 %v2590, %v2942
        %v2944 = vpop.f32.mrb[0].mxu0
        %v2945 = vadd.f32 %v2592, %v2944
        %2946 = vmatprep.mubr.bf16.mxu0 %v944
        %2947 = vmatmul.mubr.bf16.gmra.mrb[0].mxu0 %v943
        %v2948 = vpop.f32.mrb[0].mxu0
        %v2949 = vadd.f32 %v2596, %v2948
        %v2950 = vpop.f32.mrb[0].mxu0
        %v2951 = vadd.f32 %v2598, %v2950
        %v2952 = vpop.f32.mrb[0].mxu0
        %v2953 = vadd.f32 %v2600, %v2952
        %v2954 = vpop.f32.mrb[0].mxu0
        %v2955 = vadd.f32 %v2602, %v2954
        %2956 = vmatprep.mubr.bf16.mxu0 %v948
        %2957 = vmatmul.mubr.bf16.gmra.mrb[0].mxu0 %v947
        %v2958 = vpop.f32.mrb[0].mxu0
        %v2959 = vadd.f32 %v2606, %v2958
        %v2960 = vpop.f32.mrb[0].mxu0
        %v2961 = vadd.f32 %v2608, %v2960
        %v2962 = vpop.f32.mrb[0].mxu0
        %v2963 = vadd.f32 %v2610, %v2962
        %v2964 = vpop.f32.mrb[0].mxu0
        %v2965 = vadd.f32 %v2612, %v2964
        %2966 = vmatprep.mubr.bf16.mxu0 %v952
        %2967 = vmatmul.mubr.bf16.gmra.mrb[0].mxu0 %v951
        %v2968 = vpop.f32.mrb[0].mxu0
        %v2969 = vadd.f32 %v2616, %v2968
        %v2970 = vpop.f32.mrb[0].mxu0
        %v2971 = vadd.f32 %v2618, %v2970
        %v2972 = vpop.f32.mrb[0].mxu0
        %v2973 = vadd.f32 %v2620, %v2972
        %v2974 = vpop.f32.mrb[0].mxu0
        %v2975 = vadd.f32 %v2622, %v2974
        %2976 = vmatprep.mubr.bf16.mxu0 %v956
        %2977 = vmatmul.mubr.bf16.gmra.mrb[0].mxu0 %v955
        %v2978 = vpop.f32.mrb[0].mxu0
        %v2979 = vadd.f32 %v2626, %v2978
        %v2980 = vpop.f32.mrb[0].mxu0
        %v2981 = vadd.f32 %v2628, %v2980
        %v2982 = vpop.f32.mrb[0].mxu0
        %v2983 = vadd.f32 %v2630, %v2982
        %v2984 = vpop.f32.mrb[0].mxu0
        %v2985 = vadd.f32 %v2632, %v2984
        %2986 = vmatprep.mubr.bf16.mxu0 %v960
        %2987 = vmatmul.mubr.bf16.gmra.mrb[0].mxu0 %v959
        %v2988 = vpop.f32.mrb[0].mxu0
        %v2989 = vadd.f32 %v2636, %v2988
        %v2990 = vpop.f32.mrb[0].mxu0
        %v2991 = vadd.f32 %v2638, %v2990
        %v2992 = vpop.f32.mrb[0].mxu0
        %v2993 = vadd.f32 %v2640, %v2992
        %v2994 = vpop.f32.mrb[0].mxu0
        %v2995 = vadd.f32 %v2642, %v2994
        %2996 = vmatprep.mubr.bf16.mxu0 %v964
        %2997 = vmatmul.mubr.bf16.gmra.mrb[0].mxu0 %v963
        %v2998 = vpop.f32.mrb[0].mxu0
        %v2999 = vadd.f32 %v2646, %v2998
        %v3000 = vpop.f32.mrb[0].mxu0
        %v3001 = vadd.f32 %v2648, %v3000
        %v3002 = vpop.f32.mrb[0].mxu0
        %v3003 = vadd.f32 %v2650, %v3002
        %v3004 = vpop.f32.mrb[0].mxu0
        %v3005 = vadd.f32 %v2652, %v3004
        %3006 = vmatprep.mubr.bf16.mxu0 %v968
        %3007 = vmatmul.mubr.bf16.gmra.mrb[0].mxu0 %v967
        %v3008 = vpop.f32.mrb[0].mxu0
        %v3009 = vadd.f32 %v2656, %v3008
        %v3010 = vpop.f32.mrb[0].mxu0
        %v3011 = vadd.f32 %v2658, %v3010
        %v3012 = vpop.f32.mrb[0].mxu0
        %v3013 = vadd.f32 %v2660, %v3012
        %v3014 = vpop.f32.mrb[0].mxu0
        %v3015 = vadd.f32 %v2662, %v3014
        %3016 = vmatprep.mubr.bf16.mxu0 %v972
        %3017 = vmatmul.mubr.bf16.gmra.mrb[0].mxu0 %v971
        %v3018 = vpop.f32.mrb[0].mxu0
        %v3019 = vadd.f32 %v2666, %v3018
        %v3020 = vpop.f32.mrb[0].mxu0
        %v3021 = vadd.f32 %v2668, %v3020
        %v3022 = vpop.f32.mrb[0].mxu0
        %v3023 = vadd.f32 %v2670, %v3022
        %v3024 = vpop.f32.mrb[0].mxu0
        %v3025 = vadd.f32 %v2672, %v3024
        %3026 = vmatprep.mubr.bf16.mxu0 %v976
        %3027 = vmatmul.mubr.bf16.gmra.mrb[0].mxu0 %v975
        %v3028 = vpop.f32.mrb[0].mxu0
        %v3029 = vadd.f32 %v2676, %v3028
        %v3030 = vpop.f32.mrb[0].mxu0
        %v3031 = vadd.f32 %v2678, %v3030
        %v3032 = vpop.f32.mrb[0].mxu0
        %v3033 = vadd.f32 %v2680, %v3032
        %v3034 = vpop.f32.mrb[0].mxu0
        %v3035 = vadd.f32 %v2682, %v3034
        %3036 = vmatprep.mubr.bf16.mxu0 %v980
        %3037 = vmatmul.mubr.bf16.gmra.mrb[0].mxu0 %v979
        %v3038 = vpop.f32.mrb[0].mxu0
        %v3039 = vadd.f32 %v2686, %v3038
        %v3040 = vpop.f32.mrb[0].mxu0
        %v3041 = vadd.f32 %v2688, %v3040
        %v3042 = vpop.f32.mrb[0].mxu0
        %v3043 = vadd.f32 %v2690, %v3042
        %v3044 = vpop.f32.mrb[0].mxu0
        %v3045 = vadd.f32 %v2692, %v3044
        %3046 = vmatprep.mubr.bf16.mxu0 %v984
        %3047 = vmatmul.mubr.bf16.gmra.mrb[0].mxu0 %v983
        %v3048 = vpop.f32.mrb[0].mxu0
        %v3049 = vadd.f32 %v2696, %v3048
        %v3050 = vpop.f32.mrb[0].mxu0
        %v3051 = vadd.f32 %v2698, %v3050
        %v3052 = vpop.f32.mrb[0].mxu0
        %v3053 = vadd.f32 %v2700, %v3052
        %v3054 = vpop.f32.mrb[0].mxu0
        %v3055 = vadd.f32 %v2702, %v3054
        %3056 = vmatprep.mubr.bf16.mxu0 %v988
        %3057 = vmatmul.mubr.bf16.gmra.mrb[0].mxu0 %v987
        %v3058 = vpop.f32.mrb[0].mxu0
        %v3059 = vadd.f32 %v2706, %v3058
        %v3060 = vpop.f32.mrb[0].mxu0
        %v3061 = vadd.f32 %v2708, %v3060
        %v3062 = vpop.f32.mrb[0].mxu0
        %v3063 = vadd.f32 %v2710, %v3062
        %v3064 = vpop.f32.mrb[0].mxu0
        %v3065 = vadd.f32 %v2712, %v3064
        %3066 = vmatprep.mubr.bf16.mxu0 %v992
        %3067 = vmatmul.mubr.bf16.gmra.mrb[0].mxu0 %v991
        %v3068 = vpop.f32.mrb[0].mxu0
        %v3069 = vadd.f32 %v2716, %v3068
        %v3070 = vpop.f32.mrb[0].mxu0
        %v3071 = vadd.f32 %v2718, %v3070
        %v3072 = vpop.f32.mrb[0].mxu0
        %v3073 = vadd.f32 %v2720, %v3072
        %v3074 = vpop.f32.mrb[0].mxu0
        %v3075 = vadd.f32 %v2722, %v3074
        %3076 = vmatprep.mubr.bf16.mxu0 %v996
        %3077 = vmatmul.mubr.bf16.gmra.mrb[0].mxu0 %v995
        %v3078 = vpop.f32.mrb[0].mxu0
        %v3079 = vadd.f32 %v2726, %v3078
        %v3080 = vpop.f32.mrb[0].mxu0
        %v3081 = vadd.f32 %v2728, %v3080
        %v3082 = vpop.f32.mrb[0].mxu0
        %v3083 = vadd.f32 %v2730, %v3082
        %v3084 = vpop.f32.mrb[0].mxu0
        %v3085 = vadd.f32 %v2732, %v3084
        %3086 = vmatprep.mubr.bf16.mxu0 %v1000
        %3087 = vmatmul.mubr.bf16.gmra.mrb[0].mxu0 %v999
        %v3088 = vpop.f32.mrb[0].mxu0
        %v3089 = vadd.f32 %v2736, %v3088
        %v3090 = vpop.f32.mrb[0].mxu0
        %v3091 = vadd.f32 %v2738, %v3090
        %v3092 = vpop.f32.mrb[0].mxu0
        %v3093 = vadd.f32 %v2740, %v3092
        %v3094 = vpop.f32.mrb[0].mxu0
        %v3095 = vadd.f32 %v2742, %v3094
        %3096 = vmatprep.mubr.bf16.mxu0 %v1004
        %3097 = vmatmul.mubr.bf16.gmra.mrb[0].mxu0 %v1003
        %v3098 = vpop.f32.mrb[0].mxu0
        %v3099 = vadd.f32 %v2746, %v3098
        %v3100 = vpop.f32.mrb[0].mxu0
        %v3101 = vadd.f32 %v2748, %v3100
        %v3102 = vpop.f32.mrb[0].mxu0
        %v3103 = vadd.f32 %v2750, %v3102
        %v3104 = vpop.f32.mrb[0].mxu0
        %v3105 = vadd.f32 %v2752, %v3104
        %3106 = vmatprep.mubr.bf16.mxu0 %v1008
        %3107 = vmatmul.mubr.bf16.gmra.mrb[0].mxu0 %v1007
        %v3108 = vpop.f32.mrb[0].mxu0
        %v3109 = vadd.f32 %v2756, %v3108
        %v3110 = vpop.f32.mrb[0].mxu0
        %v3111 = vadd.f32 %v2758, %v3110
        %v3112 = vpop.f32.mrb[0].mxu0
        %v3113 = vadd.f32 %v2760, %v3112
        %v3114 = vpop.f32.mrb[0].mxu0
        %v3115 = vadd.f32 %v2762, %v3114
        %3116 = vmatprep.mubr.bf16.mxu0 %v1012
        %3117 = vmatmul.mubr.bf16.gmra.mrb[0].mxu0 %v1011
        %v3118 = vpop.f32.mrb[0].mxu0
        %v3119 = vadd.f32 %v2766, %v3118
        %v3120 = vpop.f32.mrb[0].mxu0
        %v3121 = vadd.f32 %v2768, %v3120
        %v3122 = vpop.f32.mrb[0].mxu0
        %v3123 = vadd.f32 %v2770, %v3122
        %v3124 = vpop.f32.mrb[0].mxu0
        %v3125 = vadd.f32 %v2772, %v3124
        %3126 = vmatprep.mubr.bf16.mxu0 %v1016
        %3127 = vmatmul.mubr.bf16.gmra.mrb[0].mxu0 %v1015
        %v3128 = vpop.f32.mrb[0].mxu0
        %v3129 = vadd.f32 %v2776, %v3128
        %v3130 = vpop.f32.mrb[0].mxu0
        %v3131 = vadd.f32 %v2778, %v3130
        %v3132 = vpop.f32.mrb[0].mxu0
        %v3133 = vadd.f32 %v2780, %v3132
        %v3134 = vpop.f32.mrb[0].mxu0
        %v3135 = vadd.f32 %v2782, %v3134
        %3136 = vmatprep.mubr.bf16.mxu0 %v1020
        %3137 = vmatmul.mubr.bf16.gmra.mrb[0].mxu0 %v1019
        %v3138 = vpop.f32.mrb[0].mxu0
        %v3139 = vadd.f32 %v2786, %v3138
        %v3140 = vpop.f32.mrb[0].mxu0
        %v3141 = vadd.f32 %v2788, %v3140
        %v3142 = vpop.f32.mrb[0].mxu0
        %v3143 = vadd.f32 %v2790, %v3142
        %v3144 = vpop.f32.mrb[0].mxu0
        %v3145 = vadd.f32 %v2792, %v3144
        %3146 = vmatprep.mubr.bf16.mxu0 %v1024
        %3147 = vmatmul.mubr.bf16.gmra.mrb[0].mxu0 %v1023
        %v3148 = vpop.f32.mrb[0].mxu0
        %v3149 = vadd.f32 %v2796, %v3148
        %v3150 = vpop.f32.mrb[0].mxu0
        %v3151 = vadd.f32 %v2798, %v3150
        %v3152 = vpop.f32.mrb[0].mxu0
        %v3153 = vadd.f32 %v2800, %v3152
        %v3154 = vpop.f32.mrb[0].mxu0
        %v3155 = vadd.f32 %v2802, %v3154
        %3156 = vmatprep.mubr.bf16.mxu0 %v1028
        %3157 = vmatmul.mubr.bf16.gmra.mrb[0].mxu0 %v1027
        %v3158 = vpop.f32.mrb[0].mxu0
        %v3159 = vadd.f32 %v2806, %v3158
        %v3160 = vpop.f32.mrb[0].mxu0
        %v3161 = vadd.f32 %v2808, %v3160
        %v3162 = vpop.f32.mrb[0].mxu0
        %v3163 = vadd.f32 %v2810, %v3162
        %v3164 = vpop.f32.mrb[0].mxu0
        %v3165 = vadd.f32 %v2812, %v3164
        %3166 = vmatprep.mubr.bf16.mxu0 %v1032
        %3167 = vmatmul.mubr.bf16.gmra.mrb[0].mxu0 %v1031
        %v3168 = vpop.f32.mrb[0].mxu0
        %v3169 = vadd.f32 %v2816, %v3168
        %v3170 = vpop.f32.mrb[0].mxu0
        %v3171 = vadd.f32 %v2818, %v3170
        %v3172 = vpop.f32.mrb[0].mxu0
        %v3173 = vadd.f32 %v2820, %v3172
        %v3174 = vpop.f32.mrb[0].mxu0
        %v3175 = vadd.f32 %v2822, %v3174
        %3176 = vmatprep.mubr.bf16.mxu0 %v1036
        %3177 = vmatmul.mubr.bf16.gmra.mrb[0].mxu0 %v1035
        %v3178 = vpop.f32.mrb[0].mxu0
        %v3179 = vadd.f32 %v2826, %v3178
        %v3180 = vpop.f32.mrb[0].mxu0
        %v3181 = vadd.f32 %v2828, %v3180
        %v3182 = vpop.f32.mrb[0].mxu0
        %v3183 = vadd.f32 %v2830, %v3182
        %v3184 = vpop.f32.mrb[0].mxu0
        %v3185 = vadd.f32 %v2832, %v3184
        %3186 = vmatprep.mubr.bf16.mxu0 %v1040
        %3187 = vmatmul.mubr.bf16.gmra.mrb[0].mxu0 %v1039
        %v3188 = vpop.f32.mrb[0].mxu0
        %v3189 = vadd.f32 %v2836, %v3188
        %v3190 = vpop.f32.mrb[0].mxu0
        %v3191 = vadd.f32 %v2838, %v3190
        %v3192 = vpop.f32.mrb[0].mxu0
        %v3193 = vadd.f32 %v2840, %v3192
        %v3194 = vpop.f32.mrb[0].mxu0
        %v3195 = vadd.f32 %v2842, %v3194
        %3196 = vmatprep.mubr.bf16.mxu0 %v1044
        %3197 = vmatmul.mubr.bf16.gmra.mrb[0].mxu0 %v1043
        %v3198 = vpop.f32.mrb[0].mxu0
        %v3199 = vadd.f32 %v2846, %v3198
        %v3200 = vpop.f32.mrb[0].mxu0
        %v3201 = vadd.f32 %v2848, %v3200
        %v3202 = vpop.f32.mrb[0].mxu0
        %v3203 = vadd.f32 %v2850, %v3202
        %v3204 = vpop.f32.mrb[0].mxu0
        %v3205 = vadd.f32 %v2852, %v3204
        %3206 = vmatprep.mubr.bf16.mxu0 %v1048
        %3207 = vmatmul.mubr.bf16.gmra.mrb[0].mxu0 %v1047
        %v3208 = vpop.f32.mrb[0].mxu0
        %v3209 = vadd.f32 %v2856, %v3208
        %v3210 = vpop.f32.mrb[0].mxu0
        %v3211 = vadd.f32 %v2858, %v3210
        %v3212 = vpop.f32.mrb[0].mxu0
        %v3213 = vadd.f32 %v2860, %v3212
        %v3214 = vpop.f32.mrb[0].mxu0
        %v3215 = vadd.f32 %v2862, %v3214
        %3216 = vmatprep.mubr.bf16.mxu0 %v1052
        %3217 = vmatmul.mubr.bf16.gmra.mrb[0].mxu0 %v1051
        %v3218 = vpop.f32.mrb[0].mxu0
        %v3219 = vadd.f32 %v2866, %v3218
        %v3220 = vpop.f32.mrb[0].mxu0
        %v3221 = vadd.f32 %v2868, %v3220
        %v3222 = vpop.f32.mrb[0].mxu0
        %v3223 = vadd.f32 %v2870, %v3222
        %v3224 = vpop.f32.mrb[0].mxu0
        %v3225 = vadd.f32 %v2872, %v3224
        %3226 = vmatprep.mubr.bf16.mxu0 %v1056
        %3227 = vmatmul.mubr.bf16.gmra.mrb[0].mxu0 %v1055
        %v3228 = vpop.f32.mrb[0].mxu0
        %v3229 = vadd.f32 %v2876, %v3228
        %v3230 = vpop.f32.mrb[0].mxu0
        %v3231 = vadd.f32 %v2878, %v3230
        %v3232 = vpop.f32.mrb[0].mxu0
        %v3233 = vadd.f32 %v2880, %v3232
        %v3234 = vpop.f32.mrb[0].mxu0
        %v3235 = vadd.f32 %v2882, %v3234
        %3236 = vdwg.mxu0
        %v3237 = vpack.c.bf16 %v2217, %v2213
        %v3238 = vpack.c.bf16 %v2219, %v2215
        %v3239 = vpack.c.bf16 %v2923, %v2919
        %v3240 = vpack.c.bf16 %v2925, %v2921
        %v3241 = vpack.c.bf16 %v2227, %v2223
        %v3242 = vpack.c.bf16 %v2229, %v2225
        %v3243 = vpack.c.bf16 %v2933, %v2929
        %v3244 = vpack.c.bf16 %v2935, %v2931
        %v3245 = vpack.c.bf16 %v2237, %v2233
        %v3246 = vpack.c.bf16 %v2239, %v2235
        %v3247 = vpack.c.bf16 %v2943, %v2939
        %v3248 = vpack.c.bf16 %v2945, %v2941
        %v3249 = vpack.c.bf16 %v2247, %v2243
        %v3250 = vpack.c.bf16 %v2249, %v2245
        %v3251 = vpack.c.bf16 %v2953, %v2949
        %v3252 = vpack.c.bf16 %v2955, %v2951
        %v3253 = vpack.c.bf16 %v2257, %v2253
        %v3254 = vpack.c.bf16 %v2259, %v2255
        %v3255 = vpack.c.bf16 %v2963, %v2959
        %v3256 = vpack.c.bf16 %v2965, %v2961
        %v3257 = vpack.c.bf16 %v2267, %v2263
        %v3258 = vpack.c.bf16 %v2269, %v2265
        %v3259 = vpack.c.bf16 %v2973, %v2969
        %v3260 = vpack.c.bf16 %v2975, %v2971
        %v3261 = vpack.c.bf16 %v2277, %v2273
        %v3262 = vpack.c.bf16 %v2279, %v2275
        %v3263 = vpack.c.bf16 %v2983, %v2979
        %v3264 = vpack.c.bf16 %v2985, %v2981
        %v3265 = vpack.c.bf16 %v2287, %v2283
        %v3266 = vpack.c.bf16 %v2289, %v2285
        %v3267 = vpack.c.bf16 %v2993, %v2989
        %v3268 = vpack.c.bf16 %v2995, %v2991
        %v3269 = vpack.c.bf16 %v2297, %v2293
        %v3270 = vpack.c.bf16 %v2299, %v2295
        %v3271 = vpack.c.bf16 %v3003, %v2999
        %v3272 = vpack.c.bf16 %v3005, %v3001
        %v3273 = vpack.c.bf16 %v2307, %v2303
        %v3274 = vpack.c.bf16 %v2309, %v2305
        %v3275 = vpack.c.bf16 %v3013, %v3009
        %v3276 = vpack.c.bf16 %v3015, %v3011
        %v3277 = vpack.c.bf16 %v2317, %v2313
        %v3278 = vpack.c.bf16 %v2319, %v2315
        %v3279 = vpack.c.bf16 %v3023, %v3019
        %v3280 = vpack.c.bf16 %v3025, %v3021
        %v3281 = vpack.c.bf16 %v2327, %v2323
        %v3282 = vpack.c.bf16 %v2329, %v2325
        %v3283 = vpack.c.bf16 %v3033, %v3029
        %v3284 = vpack.c.bf16 %v3035, %v3031
        %v3285 = vpack.c.bf16 %v2337, %v2333
        %v3286 = vpack.c.bf16 %v2339, %v2335
        %v3287 = vpack.c.bf16 %v3043, %v3039
        %v3288 = vpack.c.bf16 %v3045, %v3041
        %v3289 = vpack.c.bf16 %v2347, %v2343
        %v3290 = vpack.c.bf16 %v2349, %v2345
        %v3291 = vpack.c.bf16 %v3053, %v3049
        %v3292 = vpack.c.bf16 %v3055, %v3051
        %v3293 = vpack.c.bf16 %v2357, %v2353
        %v3294 = vpack.c.bf16 %v2359, %v2355
        %v3295 = vpack.c.bf16 %v3063, %v3059
        %v3296 = vpack.c.bf16 %v3065, %v3061
        %v3297 = vpack.c.bf16 %v2367, %v2363
        %v3298 = vpack.c.bf16 %v2369, %v2365
        %v3299 = vpack.c.bf16 %v3073, %v3069
        %v3300 = vpack.c.bf16 %v3075, %v3071
        %v3301 = vpack.c.bf16 %v2377, %v2373
        %v3302 = vpack.c.bf16 %v2379, %v2375
        %v3303 = vpack.c.bf16 %v3083, %v3079
        %v3304 = vpack.c.bf16 %v3085, %v3081
        %v3305 = vpack.c.bf16 %v2387, %v2383
        %v3306 = vpack.c.bf16 %v2389, %v2385
        %v3307 = vpack.c.bf16 %v3093, %v3089
        %v3308 = vpack.c.bf16 %v3095, %v3091
        %v3309 = vpack.c.bf16 %v2397, %v2393
        %v3310 = vpack.c.bf16 %v2399, %v2395
        %v3311 = vpack.c.bf16 %v3103, %v3099
        %v3312 = vpack.c.bf16 %v3105, %v3101
        %v3313 = vpack.c.bf16 %v2407, %v2403
        %v3314 = vpack.c.bf16 %v2409, %v2405
        %v3315 = vpack.c.bf16 %v3113, %v3109
        %v3316 = vpack.c.bf16 %v3115, %v3111
        %v3317 = vpack.c.bf16 %v2417, %v2413
        %v3318 = vpack.c.bf16 %v2419, %v2415
        %v3319 = vpack.c.bf16 %v3123, %v3119
        %v3320 = vpack.c.bf16 %v3125, %v3121
        %v3321 = vpack.c.bf16 %v2427, %v2423
        %v3322 = vpack.c.bf16 %v2429, %v2425
        %v3323 = vpack.c.bf16 %v3133, %v3129
        %v3324 = vpack.c.bf16 %v3135, %v3131
        %v3325 = vpack.c.bf16 %v2437, %v2433
        %v3326 = vpack.c.bf16 %v2439, %v2435
        %v3327 = vpack.c.bf16 %v3143, %v3139
        %v3328 = vpack.c.bf16 %v3145, %v3141
        %v3329 = vpack.c.bf16 %v2447, %v2443
        %v3330 = vpack.c.bf16 %v2449, %v2445
        %v3331 = vpack.c.bf16 %v3153, %v3149
        %v3332 = vpack.c.bf16 %v3155, %v3151
        %v3333 = vpack.c.bf16 %v2457, %v2453
        %v3334 = vpack.c.bf16 %v2459, %v2455
        %v3335 = vpack.c.bf16 %v3163, %v3159
        %v3336 = vpack.c.bf16 %v3165, %v3161
        %v3337 = vpack.c.bf16 %v2467, %v2463
        %v3338 = vpack.c.bf16 %v2469, %v2465
        %v3339 = vpack.c.bf16 %v3173, %v3169
        %v3340 = vpack.c.bf16 %v3175, %v3171
        %v3341 = vpack.c.bf16 %v2477, %v2473
        %v3342 = vpack.c.bf16 %v2479, %v2475
        %v3343 = vpack.c.bf16 %v3183, %v3179
        %v3344 = vpack.c.bf16 %v3185, %v3181
        %v3345 = vpack.c.bf16 %v2487, %v2483
        %v3346 = vpack.c.bf16 %v2489, %v2485
        %v3347 = vpack.c.bf16 %v3193, %v3189
        %v3348 = vpack.c.bf16 %v3195, %v3191
        %v3349 = vpack.c.bf16 %v2497, %v2493
        %v3350 = vpack.c.bf16 %v2499, %v2495
        %v3351 = vpack.c.bf16 %v3203, %v3199
        %v3352 = vpack.c.bf16 %v3205, %v3201
        %v3353 = vpack.c.bf16 %v2507, %v2503
        %v3354 = vpack.c.bf16 %v2509, %v2505
        %v3355 = vpack.c.bf16 %v3213, %v3209
        %v3356 = vpack.c.bf16 %v3215, %v3211
        %v3357 = vpack.c.bf16 %v2517, %v2513
        %v3358 = vpack.c.bf16 %v2519, %v2515
        %v3359 = vpack.c.bf16 %v3223, %v3219
        %v3360 = vpack.c.bf16 %v3225, %v3221
        %v3361 = vpack.c.bf16 %v2527, %v2523
        %v3362 = vpack.c.bf16 %v2529, %v2525
        %v3363 = vpack.c.bf16 %v3233, %v3229
        %v3364 = vpack.c.bf16 %v3235, %v3231
        %v3493 = vunpack.c.l.b16 %v3237
        %v3494 = vunpack.c.l.b16 %v3238
        %v3495 = vunpack.c.l.b16 %v3239
        %v3496 = vunpack.c.l.b16 %v3240
        %v3497 = vunpack.c.h.b16 %v3237
        %v3498 = vunpack.c.h.b16 %v3238
        %v3499 = vunpack.c.h.b16 %v3239
        %v3500 = vunpack.c.h.b16 %v3240
        %v3501 = vunpack.c.l.b16 %v3241
        %v3502 = vunpack.c.l.b16 %v3242
        %v3503 = vunpack.c.l.b16 %v3243
        %v3504 = vunpack.c.l.b16 %v3244
        %v3505 = vunpack.c.h.b16 %v3241
        %v3506 = vunpack.c.h.b16 %v3242
        %v3507 = vunpack.c.h.b16 %v3243
        %v3508 = vunpack.c.h.b16 %v3244
        %v3509 = vunpack.c.l.b16 %v3245
        %v3510 = vunpack.c.l.b16 %v3246
        %v3511 = vunpack.c.l.b16 %v3247
        %v3512 = vunpack.c.l.b16 %v3248
        %v3513 = vunpack.c.h.b16 %v3245
        %v3514 = vunpack.c.h.b16 %v3246
        %v3515 = vunpack.c.h.b16 %v3247
        %v3516 = vunpack.c.h.b16 %v3248
        %v3517 = vunpack.c.l.b16 %v3249
        %v3518 = vunpack.c.l.b16 %v3250
        %v3519 = vunpack.c.l.b16 %v3251
        %v3520 = vunpack.c.l.b16 %v3252
        %v3521 = vunpack.c.h.b16 %v3249
        %v3522 = vunpack.c.h.b16 %v3250
        %v3523 = vunpack.c.h.b16 %v3251
        %v3524 = vunpack.c.h.b16 %v3252
        %v3525 = vunpack.c.l.b16 %v3253
        %v3526 = vunpack.c.l.b16 %v3254
        %v3527 = vunpack.c.l.b16 %v3255
        %v3528 = vunpack.c.l.b16 %v3256
        %v3529 = vunpack.c.h.b16 %v3253
        %v3530 = vunpack.c.h.b16 %v3254
        %v3531 = vunpack.c.h.b16 %v3255
        %v3532 = vunpack.c.h.b16 %v3256
        %v3533 = vunpack.c.l.b16 %v3257
        %v3534 = vunpack.c.l.b16 %v3258
        %v3535 = vunpack.c.l.b16 %v3259
        %v3536 = vunpack.c.l.b16 %v3260
        %v3537 = vunpack.c.h.b16 %v3257
        %v3538 = vunpack.c.h.b16 %v3258
        %v3539 = vunpack.c.h.b16 %v3259
        %v3540 = vunpack.c.h.b16 %v3260
        %v3541 = vunpack.c.l.b16 %v3261
        %v3542 = vunpack.c.l.b16 %v3262
        %v3543 = vunpack.c.l.b16 %v3263
        %v3544 = vunpack.c.l.b16 %v3264
        %v3545 = vunpack.c.h.b16 %v3261
        %v3546 = vunpack.c.h.b16 %v3262
        %v3547 = vunpack.c.h.b16 %v3263
        %v3548 = vunpack.c.h.b16 %v3264
        %v3549 = vunpack.c.l.b16 %v3265
        %v3550 = vunpack.c.l.b16 %v3266
        %v3551 = vunpack.c.l.b16 %v3267
        %v3552 = vunpack.c.l.b16 %v3268
        %v3553 = vunpack.c.h.b16 %v3265
        %v3554 = vunpack.c.h.b16 %v3266
        %v3555 = vunpack.c.h.b16 %v3267
        %v3556 = vunpack.c.h.b16 %v3268
        %v3557 = vunpack.c.l.b16 %v3269
        %v3558 = vunpack.c.l.b16 %v3270
        %v3559 = vunpack.c.l.b16 %v3271
        %v3560 = vunpack.c.l.b16 %v3272
        %v3561 = vunpack.c.h.b16 %v3269
        %v3562 = vunpack.c.h.b16 %v3270
        %v3563 = vunpack.c.h.b16 %v3271
        %v3564 = vunpack.c.h.b16 %v3272
        %v3565 = vunpack.c.l.b16 %v3273
        %v3566 = vunpack.c.l.b16 %v3274
        %v3567 = vunpack.c.l.b16 %v3275
        %v3568 = vunpack.c.l.b16 %v3276
        %v3569 = vunpack.c.h.b16 %v3273
        %v3570 = vunpack.c.h.b16 %v3274
        %v3571 = vunpack.c.h.b16 %v3275
        %v3572 = vunpack.c.h.b16 %v3276
        %v3573 = vunpack.c.l.b16 %v3277
        %v3574 = vunpack.c.l.b16 %v3278
        %v3575 = vunpack.c.l.b16 %v3279
        %v3576 = vunpack.c.l.b16 %v3280
        %v3577 = vunpack.c.h.b16 %v3277
        %v3578 = vunpack.c.h.b16 %v3278
        %v3579 = vunpack.c.h.b16 %v3279
        %v3580 = vunpack.c.h.b16 %v3280
        %v3581 = vunpack.c.l.b16 %v3281
        %v3582 = vunpack.c.l.b16 %v3282
        %v3583 = vunpack.c.l.b16 %v3283
        %v3584 = vunpack.c.l.b16 %v3284
        %v3585 = vunpack.c.h.b16 %v3281
        %v3586 = vunpack.c.h.b16 %v3282
        %v3587 = vunpack.c.h.b16 %v3283
        %v3588 = vunpack.c.h.b16 %v3284
        %v3589 = vunpack.c.l.b16 %v3285
        %v3590 = vunpack.c.l.b16 %v3286
        %v3591 = vunpack.c.l.b16 %v3287
        %v3592 = vunpack.c.l.b16 %v3288
        %v3593 = vunpack.c.h.b16 %v3285
        %v3594 = vunpack.c.h.b16 %v3286
        %v3595 = vunpack.c.h.b16 %v3287
        %v3596 = vunpack.c.h.b16 %v3288
        %v3597 = vunpack.c.l.b16 %v3289
        %v3598 = vunpack.c.l.b16 %v3290
        %v3599 = vunpack.c.l.b16 %v3291
        %v3600 = vunpack.c.l.b16 %v3292
        %v3601 = vunpack.c.h.b16 %v3289
        %v3602 = vunpack.c.h.b16 %v3290
        %v3603 = vunpack.c.h.b16 %v3291
        %v3604 = vunpack.c.h.b16 %v3292
        %v3605 = vunpack.c.l.b16 %v3293
        %v3606 = vunpack.c.l.b16 %v3294
        %v3607 = vunpack.c.l.b16 %v3295
        %v3608 = vunpack.c.l.b16 %v3296
        %v3609 = vunpack.c.h.b16 %v3293
        %v3610 = vunpack.c.h.b16 %v3294
        %v3611 = vunpack.c.h.b16 %v3295
        %v3612 = vunpack.c.h.b16 %v3296
        %v3613 = vunpack.c.l.b16 %v3297
        %v3614 = vunpack.c.l.b16 %v3298
        %v3615 = vunpack.c.l.b16 %v3299
        %v3616 = vunpack.c.l.b16 %v3300
        %v3617 = vunpack.c.h.b16 %v3297
        %v3618 = vunpack.c.h.b16 %v3298
        %v3619 = vunpack.c.h.b16 %v3299
        %v3620 = vunpack.c.h.b16 %v3300
        %v3621 = vunpack.c.l.b16 %v3301
        %v3622 = vunpack.c.l.b16 %v3302
        %v3623 = vunpack.c.l.b16 %v3303
        %v3624 = vunpack.c.l.b16 %v3304
        %v3625 = vunpack.c.h.b16 %v3301
        %v3626 = vunpack.c.h.b16 %v3302
        %v3627 = vunpack.c.h.b16 %v3303
        %v3628 = vunpack.c.h.b16 %v3304
        %v3629 = vunpack.c.l.b16 %v3305
        %v3630 = vunpack.c.l.b16 %v3306
        %v3631 = vunpack.c.l.b16 %v3307
        %v3632 = vunpack.c.l.b16 %v3308
        %v3633 = vunpack.c.h.b16 %v3305
        %v3634 = vunpack.c.h.b16 %v3306
        %v3635 = vunpack.c.h.b16 %v3307
        %v3636 = vunpack.c.h.b16 %v3308
        %v3637 = vunpack.c.l.b16 %v3309
        %v3638 = vunpack.c.l.b16 %v3310
        %v3639 = vunpack.c.l.b16 %v3311
        %v3640 = vunpack.c.l.b16 %v3312
        %v3641 = vunpack.c.h.b16 %v3309
        %v3642 = vunpack.c.h.b16 %v3310
        %v3643 = vunpack.c.h.b16 %v3311
        %v3644 = vunpack.c.h.b16 %v3312
        %v3645 = vunpack.c.l.b16 %v3313
        %v3646 = vunpack.c.l.b16 %v3314
        %v3647 = vunpack.c.l.b16 %v3315
        %v3648 = vunpack.c.l.b16 %v3316
        %v3649 = vunpack.c.h.b16 %v3313
        %v3650 = vunpack.c.h.b16 %v3314
        %v3651 = vunpack.c.h.b16 %v3315
        %v3652 = vunpack.c.h.b16 %v3316
        %v3653 = vunpack.c.l.b16 %v3317
        %v3654 = vunpack.c.l.b16 %v3318
        %v3655 = vunpack.c.l.b16 %v3319
        %v3656 = vunpack.c.l.b16 %v3320
        %v3657 = vunpack.c.h.b16 %v3317
        %v3658 = vunpack.c.h.b16 %v3318
        %v3659 = vunpack.c.h.b16 %v3319
        %v3660 = vunpack.c.h.b16 %v3320
        %v3661 = vunpack.c.l.b16 %v3321
        %v3662 = vunpack.c.l.b16 %v3322
        %v3663 = vunpack.c.l.b16 %v3323
        %v3664 = vunpack.c.l.b16 %v3324
        %v3665 = vunpack.c.h.b16 %v3321
        %v3666 = vunpack.c.h.b16 %v3322
        %v3667 = vunpack.c.h.b16 %v3323
        %v3668 = vunpack.c.h.b16 %v3324
        %v3669 = vunpack.c.l.b16 %v3325
        %v3670 = vunpack.c.l.b16 %v3326
        %v3671 = vunpack.c.l.b16 %v3327
        %v3672 = vunpack.c.l.b16 %v3328
        %v3673 = vunpack.c.h.b16 %v3325
        %v3674 = vunpack.c.h.b16 %v3326
        %v3675 = vunpack.c.h.b16 %v3327
        %v3676 = vunpack.c.h.b16 %v3328
        %v3677 = vunpack.c.l.b16 %v3329
        %v3678 = vunpack.c.l.b16 %v3330
        %v3679 = vunpack.c.l.b16 %v3331
        %v3680 = vunpack.c.l.b16 %v3332
        %v3681 = vunpack.c.h.b16 %v3329
        %v3682 = vunpack.c.h.b16 %v3330
        %v3683 = vunpack.c.h.b16 %v3331
        %v3684 = vunpack.c.h.b16 %v3332
        %v3685 = vunpack.c.l.b16 %v3333
        %v3686 = vunpack.c.l.b16 %v3334
        %v3687 = vunpack.c.l.b16 %v3335
        %v3688 = vunpack.c.l.b16 %v3336
        %v3689 = vunpack.c.h.b16 %v3333
        %v3690 = vunpack.c.h.b16 %v3334
        %v3691 = vunpack.c.h.b16 %v3335
        %v3692 = vunpack.c.h.b16 %v3336
        %v3693 = vunpack.c.l.b16 %v3337
        %v3694 = vunpack.c.l.b16 %v3338
        %v3695 = vunpack.c.l.b16 %v3339
        %v3696 = vunpack.c.l.b16 %v3340
        %v3697 = vunpack.c.h.b16 %v3337
        %v3698 = vunpack.c.h.b16 %v3338
        %v3699 = vunpack.c.h.b16 %v3339
        %v3700 = vunpack.c.h.b16 %v3340
        %v3701 = vunpack.c.l.b16 %v3341
        %v3702 = vunpack.c.l.b16 %v3342
        %v3703 = vunpack.c.l.b16 %v3343
        %v3704 = vunpack.c.l.b16 %v3344
        %v3705 = vunpack.c.h.b16 %v3341
        %v3706 = vunpack.c.h.b16 %v3342
        %v3707 = vunpack.c.h.b16 %v3343
        %v3708 = vunpack.c.h.b16 %v3344
        %v3709 = vunpack.c.l.b16 %v3345
        %v3710 = vunpack.c.l.b16 %v3346
        %v3711 = vunpack.c.l.b16 %v3347
        %v3712 = vunpack.c.l.b16 %v3348
        %v3713 = vunpack.c.h.b16 %v3345
        %v3714 = vunpack.c.h.b16 %v3346
        %v3715 = vunpack.c.h.b16 %v3347
        %v3716 = vunpack.c.h.b16 %v3348
        %v3717 = vunpack.c.l.b16 %v3349
        %v3718 = vunpack.c.l.b16 %v3350
        %v3719 = vunpack.c.l.b16 %v3351
        %v3720 = vunpack.c.l.b16 %v3352
        %v3721 = vunpack.c.h.b16 %v3349
        %v3722 = vunpack.c.h.b16 %v3350
        %v3723 = vunpack.c.h.b16 %v3351
        %v3724 = vunpack.c.h.b16 %v3352
        %v3725 = vunpack.c.l.b16 %v3353
        %v3726 = vunpack.c.l.b16 %v3354
        %v3727 = vunpack.c.l.b16 %v3355
        %v3728 = vunpack.c.l.b16 %v3356
        %v3729 = vunpack.c.h.b16 %v3353
        %v3730 = vunpack.c.h.b16 %v3354
        %v3731 = vunpack.c.h.b16 %v3355
        %v3732 = vunpack.c.h.b16 %v3356
        %v3733 = vunpack.c.l.b16 %v3357
        %v3734 = vunpack.c.l.b16 %v3358
        %v3735 = vunpack.c.l.b16 %v3359
        %v3736 = vunpack.c.l.b16 %v3360
        %v3737 = vunpack.c.h.b16 %v3357
        %v3738 = vunpack.c.h.b16 %v3358
        %v3739 = vunpack.c.h.b16 %v3359
        %v3740 = vunpack.c.h.b16 %v3360
        %v3741 = vunpack.c.l.b16 %v3361
        %v3742 = vunpack.c.l.b16 %v3362
        %v3743 = vunpack.c.l.b16 %v3363
        %v3744 = vunpack.c.l.b16 %v3364
        %v3745 = vunpack.c.h.b16 %v3361
        %v3746 = vunpack.c.h.b16 %v3362
        %v3747 = vunpack.c.h.b16 %v3363
        %v3748 = vunpack.c.h.b16 %v3364
        %v3749 = vpack.c.b16 %v3494, %v3493
        %v3750 = vpack.c.b16 %v3496, %v3495
        %v3751 = vpack.c.b16 %v3498, %v3497
        %v3752 = vpack.c.b16 %v3500, %v3499
        %v3753 = vpack.c.b16 %v3502, %v3501
        %v3754 = vpack.c.b16 %v3504, %v3503
        %v3755 = vpack.c.b16 %v3506, %v3505
        %v3756 = vpack.c.b16 %v3508, %v3507
        %v3757 = vpack.c.b16 %v3510, %v3509
        %v3758 = vpack.c.b16 %v3512, %v3511
        %v3759 = vpack.c.b16 %v3514, %v3513
        %v3760 = vpack.c.b16 %v3516, %v3515
        %v3761 = vpack.c.b16 %v3518, %v3517
        %v3762 = vpack.c.b16 %v3520, %v3519
        %v3763 = vpack.c.b16 %v3522, %v3521
        %v3764 = vpack.c.b16 %v3524, %v3523
        %v3765 = vpack.c.b16 %v3526, %v3525
        %v3766 = vpack.c.b16 %v3528, %v3527
        %v3767 = vpack.c.b16 %v3530, %v3529
        %v3768 = vpack.c.b16 %v3532, %v3531
        %v3769 = vpack.c.b16 %v3534, %v3533
        %v3770 = vpack.c.b16 %v3536, %v3535
        %v3771 = vpack.c.b16 %v3538, %v3537
        %v3772 = vpack.c.b16 %v3540, %v3539
        %v3773 = vpack.c.b16 %v3542, %v3541
        %v3774 = vpack.c.b16 %v3544, %v3543
        %v3775 = vpack.c.b16 %v3546, %v3545
        %v3776 = vpack.c.b16 %v3548, %v3547
        %v3777 = vpack.c.b16 %v3550, %v3549
        %v3778 = vpack.c.b16 %v3552, %v3551
        %v3779 = vpack.c.b16 %v3554, %v3553
        %v3780 = vpack.c.b16 %v3556, %v3555
        %v3781 = vpack.c.b16 %v3558, %v3557
        %v3782 = vpack.c.b16 %v3560, %v3559
        %v3783 = vpack.c.b16 %v3562, %v3561
        %v3784 = vpack.c.b16 %v3564, %v3563
        %v3785 = vpack.c.b16 %v3566, %v3565
        %v3786 = vpack.c.b16 %v3568, %v3567
        %v3787 = vpack.c.b16 %v3570, %v3569
        %v3788 = vpack.c.b16 %v3572, %v3571
        %v3789 = vpack.c.b16 %v3574, %v3573
        %v3790 = vpack.c.b16 %v3576, %v3575
        %v3791 = vpack.c.b16 %v3578, %v3577
        %v3792 = vpack.c.b16 %v3580, %v3579
        %v3793 = vpack.c.b16 %v3582, %v3581
        %v3794 = vpack.c.b16 %v3584, %v3583
        %v3795 = vpack.c.b16 %v3586, %v3585
        %v3796 = vpack.c.b16 %v3588, %v3587
        %v3797 = vpack.c.b16 %v3590, %v3589
        %v3798 = vpack.c.b16 %v3592, %v3591
        %v3799 = vpack.c.b16 %v3594, %v3593
        %v3800 = vpack.c.b16 %v3596, %v3595
        %v3801 = vpack.c.b16 %v3598, %v3597
        %v3802 = vpack.c.b16 %v3600, %v3599
        %v3803 = vpack.c.b16 %v3602, %v3601
        %v3804 = vpack.c.b16 %v3604, %v3603
        %v3805 = vpack.c.b16 %v3606, %v3605
        %v3806 = vpack.c.b16 %v3608, %v3607
        %v3807 = vpack.c.b16 %v3610, %v3609
        %v3808 = vpack.c.b16 %v3612, %v3611
        %v3809 = vpack.c.b16 %v3614, %v3613
        %v3810 = vpack.c.b16 %v3616, %v3615
        %v3811 = vpack.c.b16 %v3618, %v3617
        %v3812 = vpack.c.b16 %v3620, %v3619
        %v3813 = vpack.c.b16 %v3622, %v3621
        %v3814 = vpack.c.b16 %v3624, %v3623
        %v3815 = vpack.c.b16 %v3626, %v3625
        %v3816 = vpack.c.b16 %v3628, %v3627
        %v3817 = vpack.c.b16 %v3630, %v3629
        %v3818 = vpack.c.b16 %v3632, %v3631
        %v3819 = vpack.c.b16 %v3634, %v3633
        %v3820 = vpack.c.b16 %v3636, %v3635
        %v3821 = vpack.c.b16 %v3638, %v3637
        %v3822 = vpack.c.b16 %v3640, %v3639
        %v3823 = vpack.c.b16 %v3642, %v3641
        %v3824 = vpack.c.b16 %v3644, %v3643
        %v3825 = vpack.c.b16 %v3646, %v3645
        %v3826 = vpack.c.b16 %v3648, %v3647
        %v3827 = vpack.c.b16 %v3650, %v3649
        %v3828 = vpack.c.b16 %v3652, %v3651
        %v3829 = vpack.c.b16 %v3654, %v3653
        %v3830 = vpack.c.b16 %v3656, %v3655
        %v3831 = vpack.c.b16 %v3658, %v3657
        %v3832 = vpack.c.b16 %v3660, %v3659
        %v3833 = vpack.c.b16 %v3662, %v3661
        %v3834 = vpack.c.b16 %v3664, %v3663
        %v3835 = vpack.c.b16 %v3666, %v3665
        %v3836 = vpack.c.b16 %v3668, %v3667
        %v3837 = vpack.c.b16 %v3670, %v3669
        %v3838 = vpack.c.b16 %v3672, %v3671
        %v3839 = vpack.c.b16 %v3674, %v3673
        %v3840 = vpack.c.b16 %v3676, %v3675
        %v3841 = vpack.c.b16 %v3678, %v3677
        %v3842 = vpack.c.b16 %v3680, %v3679
        %v3843 = vpack.c.b16 %v3682, %v3681
        %v3844 = vpack.c.b16 %v3684, %v3683
        %v3845 = vpack.c.b16 %v3686, %v3685
        %v3846 = vpack.c.b16 %v3688, %v3687
        %v3847 = vpack.c.b16 %v3690, %v3689
        %v3848 = vpack.c.b16 %v3692, %v3691
        %v3849 = vpack.c.b16 %v3694, %v3693
        %v3850 = vpack.c.b16 %v3696, %v3695
        %v3851 = vpack.c.b16 %v3698, %v3697
        %v3852 = vpack.c.b16 %v3700, %v3699
        %v3853 = vpack.c.b16 %v3702, %v3701
        %v3854 = vpack.c.b16 %v3704, %v3703
        %v3855 = vpack.c.b16 %v3706, %v3705
        %v3856 = vpack.c.b16 %v3708, %v3707
        %v3857 = vpack.c.b16 %v3710, %v3709
        %v3858 = vpack.c.b16 %v3712, %v3711
        %v3859 = vpack.c.b16 %v3714, %v3713
        %v3860 = vpack.c.b16 %v3716, %v3715
        %v3861 = vpack.c.b16 %v3718, %v3717
        %v3862 = vpack.c.b16 %v3720, %v3719
        %v3863 = vpack.c.b16 %v3722, %v3721
        %v3864 = vpack.c.b16 %v3724, %v3723
        %v3865 = vpack.c.b16 %v3726, %v3725
        %v3866 = vpack.c.b16 %v3728, %v3727
        %v3867 = vpack.c.b16 %v3730, %v3729
        %v3868 = vpack.c.b16 %v3732, %v3731
        %v3869 = vpack.c.b16 %v3734, %v3733
        %v3870 = vpack.c.b16 %v3736, %v3735
        %v3871 = vpack.c.b16 %v3738, %v3737
        %v3872 = vpack.c.b16 %v3740, %v3739
        %v3873 = vpack.c.b16 %v3742, %v3741
        %v3874 = vpack.c.b16 %v3744, %v3743
        %v3875 = vpack.c.b16 %v3746, %v3745
        %v3876 = vpack.c.b16 %v3748, %v3747
        %4005 = vst [vmem:[%s261] sm:$0xff] %v3749
        %4006 = vst [vmem:[%s261 + $0x8] sm:$0xff] %v3750
        %4007 = vst [vmem:[%s261 + $0x10] sm:$0xff] %v3751
        %4008 = vst [vmem:[%s261 + $0x18] sm:$0xff] %v3752
        %4009 = vst [vmem:[%s261 + $0x20] sm:$0xff] %v3753
        %4010 = vst [vmem:[%s261 + $0x28] sm:$0xff] %v3754
        %4011 = vst [vmem:[%s261 + $0x30] sm:$0xff] %v3755
        %4012 = vst [vmem:[%s261 + $0x38] sm:$0xff] %v3756
        %4013 = vst [vmem:[%s261 + $0x40] sm:$0xff] %v3757
        %4014 = vst [vmem:[%s261 + $0x48] sm:$0xff] %v3758
        %4015 = vst [vmem:[%s261 + $0x50] sm:$0xff] %v3759
        %4016 = vst [vmem:[%s261 + $0x58] sm:$0xff] %v3760
        %4017 = vst [vmem:[%s261 + $0x60] sm:$0xff] %v3761
        %4018 = vst [vmem:[%s261 + $0x68] sm:$0xff] %v3762
        %4019 = vst [vmem:[%s261 + $0x70] sm:$0xff] %v3763
        %4020 = vst [vmem:[%s261 + $0x78] sm:$0xff] %v3764
        %4021 = vst [vmem:[%s261 + $0x80] sm:$0xff] %v3765
        %4022 = vst [vmem:[%s261 + $0x88] sm:$0xff] %v3766
        %4023 = vst [vmem:[%s261 + $0x90] sm:$0xff] %v3767
        %4024 = vst [vmem:[%s261 + $0x98] sm:$0xff] %v3768
        %4025 = vst [vmem:[%s261 + $0xa0] sm:$0xff] %v3769
        %4026 = vst [vmem:[%s261 + $0xa8] sm:$0xff] %v3770
        %4027 = vst [vmem:[%s261 + $0xb0] sm:$0xff] %v3771
        %4028 = vst [vmem:[%s261 + $0xb8] sm:$0xff] %v3772
        %4029 = vst [vmem:[%s261 + $0xc0] sm:$0xff] %v3773
        %4030 = vst [vmem:[%s261 + $0xc8] sm:$0xff] %v3774
        %4031 = vst [vmem:[%s261 + $0xd0] sm:$0xff] %v3775
        %4032 = vst [vmem:[%s261 + $0xd8] sm:$0xff] %v3776
        %4033 = vst [vmem:[%s261 + $0xe0] sm:$0xff] %v3777
        %4034 = vst [vmem:[%s261 + $0xe8] sm:$0xff] %v3778
        %4035 = vst [vmem:[%s261 + $0xf0] sm:$0xff] %v3779
        %4036 = vst [vmem:[%s261 + $0xf8] sm:$0xff] %v3780
        %4037 = vst [vmem:[%s261 + $0x100] sm:$0xff] %v3781
        %4038 = vst [vmem:[%s261 + $0x108] sm:$0xff] %v3782
        %4039 = vst [vmem:[%s261 + $0x110] sm:$0xff] %v3783
        %4040 = vst [vmem:[%s261 + $0x118] sm:$0xff] %v3784
        %4041 = vst [vmem:[%s261 + $0x120] sm:$0xff] %v3785
        %4042 = vst [vmem:[%s261 + $0x128] sm:$0xff] %v3786
        %4043 = vst [vmem:[%s261 + $0x130] sm:$0xff] %v3787
        %4044 = vst [vmem:[%s261 + $0x138] sm:$0xff] %v3788
        %4045 = vst [vmem:[%s261 + $0x140] sm:$0xff] %v3789
        %4046 = vst [vmem:[%s261 + $0x148] sm:$0xff] %v3790
        %4047 = vst [vmem:[%s261 + $0x150] sm:$0xff] %v3791
        %4048 = vst [vmem:[%s261 + $0x158] sm:$0xff] %v3792
        %4049 = vst [vmem:[%s261 + $0x160] sm:$0xff] %v3793
        %4050 = vst [vmem:[%s261 + $0x168] sm:$0xff] %v3794
        %4051 = vst [vmem:[%s261 + $0x170] sm:$0xff] %v3795
        %4052 = vst [vmem:[%s261 + $0x178] sm:$0xff] %v3796
        %4053 = vst [vmem:[%s261 + $0x180] sm:$0xff] %v3797
        %4054 = vst [vmem:[%s261 + $0x188] sm:$0xff] %v3798
        %4055 = vst [vmem:[%s261 + $0x190] sm:$0xff] %v3799
        %4056 = vst [vmem:[%s261 + $0x198] sm:$0xff] %v3800
        %4057 = vst [vmem:[%s261 + $0x1a0] sm:$0xff] %v3801
        %4058 = vst [vmem:[%s261 + $0x1a8] sm:$0xff] %v3802
        %4059 = vst [vmem:[%s261 + $0x1b0] sm:$0xff] %v3803
        %4060 = vst [vmem:[%s261 + $0x1b8] sm:$0xff] %v3804
        %4061 = vst [vmem:[%s261 + $0x1c0] sm:$0xff] %v3805
        %4062 = vst [vmem:[%s261 + $0x1c8] sm:$0xff] %v3806
        %4063 = vst [vmem:[%s261 + $0x1d0] sm:$0xff] %v3807
        %4064 = vst [vmem:[%s261 + $0x1d8] sm:$0xff] %v3808
        %4065 = vst [vmem:[%s261 + $0x1e0] sm:$0xff] %v3809
        %4066 = vst [vmem:[%s261 + $0x1e8] sm:$0xff] %v3810
        %4067 = vst [vmem:[%s261 + $0x1f0] sm:$0xff] %v3811
        %4068 = vst [vmem:[%s261 + $0x1f8] sm:$0xff] %v3812
        %4069 = vst [vmem:[%s261 + $0x200] sm:$0xff] %v3813
        %4070 = vst [vmem:[%s261 + $0x208] sm:$0xff] %v3814
        %4071 = vst [vmem:[%s261 + $0x210] sm:$0xff] %v3815
        %4072 = vst [vmem:[%s261 + $0x218] sm:$0xff] %v3816
        %4073 = vst [vmem:[%s261 + $0x220] sm:$0xff] %v3817
        %4074 = vst [vmem:[%s261 + $0x228] sm:$0xff] %v3818
        %4075 = vst [vmem:[%s261 + $0x230] sm:$0xff] %v3819
        %4076 = vst [vmem:[%s261 + $0x238] sm:$0xff] %v3820
        %4077 = vst [vmem:[%s261 + $0x240] sm:$0xff] %v3821
        %4078 = vst [vmem:[%s261 + $0x248] sm:$0xff] %v3822
        %4079 = vst [vmem:[%s261 + $0x250] sm:$0xff] %v3823
        %4080 = vst [vmem:[%s261 + $0x258] sm:$0xff] %v3824
        %4081 = vst [vmem:[%s261 + $0x260] sm:$0xff] %v3825
        %4082 = vst [vmem:[%s261 + $0x268] sm:$0xff] %v3826
        %4083 = vst [vmem:[%s261 + $0x270] sm:$0xff] %v3827
        %4084 = vst [vmem:[%s261 + $0x278] sm:$0xff] %v3828
        %4085 = vst [vmem:[%s261 + $0x280] sm:$0xff] %v3829
        %4086 = vst [vmem:[%s261 + $0x288] sm:$0xff] %v3830
        %4087 = vst [vmem:[%s261 + $0x290] sm:$0xff] %v3831
        %4088 = vst [vmem:[%s261 + $0x298] sm:$0xff] %v3832
        %4089 = vst [vmem:[%s261 + $0x2a0] sm:$0xff] %v3833
        %4090 = vst [vmem:[%s261 + $0x2a8] sm:$0xff] %v3834
        %4091 = vst [vmem:[%s261 + $0x2b0] sm:$0xff] %v3835
        %4092 = vst [vmem:[%s261 + $0x2b8] sm:$0xff] %v3836
        %4093 = vst [vmem:[%s261 + $0x2c0] sm:$0xff] %v3837
        %4094 = vst [vmem:[%s261 + $0x2c8] sm:$0xff] %v3838
        %4095 = vst [vmem:[%s261 + $0x2d0] sm:$0xff] %v3839
        %4096 = vst [vmem:[%s261 + $0x2d8] sm:$0xff] %v3840
        %4097 = vst [vmem:[%s261 + $0x2e0] sm:$0xff] %v3841
        %4098 = vst [vmem:[%s261 + $0x2e8] sm:$0xff] %v3842
        %4099 = vst [vmem:[%s261 + $0x2f0] sm:$0xff] %v3843
        %4100 = vst [vmem:[%s261 + $0x2f8] sm:$0xff] %v3844
        %4101 = vst [vmem:[%s261 + $0x300] sm:$0xff] %v3845
        %4102 = vst [vmem:[%s261 + $0x308] sm:$0xff] %v3846
        %4103 = vst [vmem:[%s261 + $0x310] sm:$0xff] %v3847
        %4104 = vst [vmem:[%s261 + $0x318] sm:$0xff] %v3848
        %4105 = vst [vmem:[%s261 + $0x320] sm:$0xff] %v3849
        %4106 = vst [vmem:[%s261 + $0x328] sm:$0xff] %v3850
        %4107 = vst [vmem:[%s261 + $0x330] sm:$0xff] %v3851
        %4108 = vst [vmem:[%s261 + $0x338] sm:$0xff] %v3852
        %4109 = vst [vmem:[%s261 + $0x340] sm:$0xff] %v3853
        %4110 = vst [vmem:[%s261 + $0x348] sm:$0xff] %v3854
        %4111 = vst [vmem:[%s261 + $0x350] sm:$0xff] %v3855
        %4112 = vst [vmem:[%s261 + $0x358] sm:$0xff] %v3856
        %4113 = vst [vmem:[%s261 + $0x360] sm:$0xff] %v3857
        %4114 = vst [vmem:[%s261 + $0x368] sm:$0xff] %v3858
        %4115 = vst [vmem:[%s261 + $0x370] sm:$0xff] %v3859
        %4116 = vst [vmem:[%s261 + $0x378] sm:$0xff] %v3860
        %4117 = vst [vmem:[%s261 + $0x380] sm:$0xff] %v3861
        %4118 = vst [vmem:[%s261 + $0x388] sm:$0xff] %v3862
        %4119 = vst [vmem:[%s261 + $0x390] sm:$0xff] %v3863
        %4120 = vst [vmem:[%s261 + $0x398] sm:$0xff] %v3864
        %4121 = vst [vmem:[%s261 + $0x3a0] sm:$0xff] %v3865
        %4122 = vst [vmem:[%s261 + $0x3a8] sm:$0xff] %v3866
        %4123 = vst [vmem:[%s261 + $0x3b0] sm:$0xff] %v3867
        %4124 = vst [vmem:[%s261 + $0x3b8] sm:$0xff] %v3868
        %4125 = vst [vmem:[%s261 + $0x3c0] sm:$0xff] %v3869
        %4126 = vst [vmem:[%s261 + $0x3c8] sm:$0xff] %v3870
        %4127 = vst [vmem:[%s261 + $0x3d0] sm:$0xff] %v3871
        %4128 = vst [vmem:[%s261 + $0x3d8] sm:$0xff] %v3872
        %4129 = vst [vmem:[%s261 + $0x3e0] sm:$0xff] %v3873
        %4130 = vst [vmem:[%s261 + $0x3e8] sm:$0xff] %v3874
        %4131 = vst [vmem:[%s261 + $0x3f0] sm:$0xff] %v3875
        %4132 = vst [vmem:[%s261 + $0x3f8] sm:$0xff] %v3876
        %s4133 = sand.u32 %s121, 1
        %s4134 = scalar_lea.sflag [#allocation4], %s4133
        %s4135 = sand.u32 %s121, 1
        %s4136 = smul.addr %s4135, 1024
        %s4137 = scalar_lea.vmem [#allocation8], %s4136
        // Predicated region
        $region45: #{tpu_custom_call.1} parent=31 // pred_check
          %p4138 = pneg %p131
        $region46: #{tpu_custom_call.1} parent=31 // pred_check_branch
          %4140 = sbr.rel (%p4138) target = $region48
        $region47: #{tpu_custom_call.1} parent=31 // pred_region
          %s4141 = smul.u32 64, %s25
          %s4142 = smul.u32 4, %s26
          %s4144 = ssub.s32 16384, 16384
          %4145 = vsyncadd %s4134, %s4144
          %s4146 = smul.addr %s4141, 12
          %s4147 = sadd.s32 %s4142, %s4146
          %s4148 = smul.addr %s4147, 64
          %s4149 = scalar_lea.hbm %s3, %s4148
          %s4150 = sshll.u32 %s4137, 4
          %s4151 = int_to_ptr.vmem [resolvable:$true] %s4150
          %4156 = dma.vmem_to_hbm [thread:$0]  %s4151, 16384, %s4149, %s4134, 256, 768, 16
        $region48: #{tpu_custom_call.1} parent=31 // pred_fallthru
          _
      $region32: #{tpu_custom_call.1} parent=5 // pred_fallthru
        _
      %p4157 = scmp.le.s32.totalorder 2, %s16
      // Predicated region
      $region49: #{tpu_custom_call.1} parent=5 // pred_check
        %p4158 = pneg %p4157
      $region50: #{tpu_custom_call.1} parent=5 // pred_check_branch
        %4160 = sbr.rel (%p4158) target = $region52
      $region51: #{tpu_custom_call.1} parent=5 // pred_region
        %s4161 = ssub.s32 %s16, 2
        // Predicated region
        $region53: #{tpu_custom_call.1} parent=51 // pred_check
          %p4162 = pneg %p137
        $region54: #{tpu_custom_call.1} parent=51 // pred_check_branch
          %4164 = sbr.rel (%p4162) target = $region56
        $region55: #{tpu_custom_call.1} parent=51 // pred_region
          %s4165 = sand.u32 %s122, 1
          %s4166 = scalar_lea.sflag [#allocation4], %s4165
          %s4167 = sand.u32 %s122, 1
          %s4168 = smul.addr %s4167, 1024
          %s4169 = scalar_lea.vmem [#allocation8], %s4168
          %4170 = dma.done %s4166, 16384
        $region56: #{tpu_custom_call.1} parent=51 // pred_fallthru
          _
      $region52: #{tpu_custom_call.1} parent=5 // pred_fallthru
        _
    $region6: #{tpu_custom_call.1} parent=1 // loop_footer
      %s20 = sadd.s32 1, %s16
    $region7: #{tpu_custom_call.1} parent=1 // loop_footer_branch
      %15 = sbr.rel target = $region3
    $region8: #{tpu_custom_call.1} parent=1 // loop_exit
      _
    %4171 = vsyncpa [#allocation3], 1
    %s4172 = scalar_lea.sflag [#allocation3], 1
    %4173 = vsyncpa %s4172, 1
    %4174 = vsyncpa [#allocation6], 1
    %s4175 = scalar_lea.sflag [#allocation6], 1
    %4176 = vsyncpa %s4175, 1
    %4177 = vsyncpa [#allocation4], 1
    %s4178 = scalar_lea.sflag [#allocation4], 1
    %4179 = vsyncpa %s4178, 1

</llo_original>
